<compile_context>
chip_gen: v5e
topology: v5e:2x2
jax: 0.10.0
libtpu: 0.0.40
codegen_flags: <defaults>
</compile_context>

<pallas_src>
import math
from functools import partial

import jax
import jax.numpy as jnp
from jax import lax
from jax.experimental import pallas as pl
from jax.experimental.pallas import tpu as pltpu

LN_EPS = 1e-5
BN_EPS = 1e-5


# ----------------------------- in-kernel helpers -----------------------------

def _layernorm(x, g, b):
    mu = jnp.mean(x, axis=-1, keepdims=True)
    var = jnp.mean((x - mu) ** 2, axis=-1, keepdims=True)
    return (x - mu) * lax.rsqrt(var + LN_EPS) * g + b


def _softmax_rows(s):
    s = s - jnp.max(s, axis=-1, keepdims=True)
    p = jnp.exp(s)
    return p * pl.reciprocal(jnp.sum(p, axis=-1, keepdims=True), approx=True)


def _mha(x, wq, wk, wv, bq, bk, bv, wo, bo, scale):
    # single-head self attention on a (rows, embed) matrix resident in VMEM
    q = jnp.dot(x, wq, preferred_element_type=jnp.float32) + bq
    k = jnp.dot(x, wk, preferred_element_type=jnp.float32) + bk
    v = jnp.dot(x, wv, preferred_element_type=jnp.float32) + bv
    # q @ k^T without materializing a transposed copy of k
    s = lax.dot_general(q, k, (((1,), (1,)), ((), ())),
                        preferred_element_type=jnp.float32) * scale
    p = _softmax_rows(s)
    o = jnp.dot(p, v, preferred_element_type=jnp.float32)
    return jnp.dot(o, wo, preferred_element_type=jnp.float32) + bo


# ----------------------------- fused encoder kernel -----------------------------

def encoder_kernel(
        x_ref, pe_ref,
        ff_ln_g, ff_ln_b, ff_w1, ff_b1, ff_w2, ff_b2,
        a_ln1_g, a_ln1_b,
        t_wq, t_wk, t_wv, t_bq, t_bk, t_bv, t_wo, t_bo,
        a_ln2_g, a_ln2_b,
        e_wq, e_wk, e_wv, e_bq, e_bk, e_bv, e_wo, e_bo,
        c_ln_g, c_ln_b, c_w1a, c_b1a, c_w1b, c_b1b,
        c_dw, c_dwb, c_bns, c_bnb, c_w2, c_b2,
        f_ln_g, f_ln_b,
        o_ref, *, ksize, num_blocks):
    x = x_ref[0]                      # (L, D)  time on sublanes, channels on lanes
    pe = pe_ref[...]                  # (L, D)
    L, D = x.shape
    tok_scale = 1.0 / math.sqrt(D)
    emb_scale = 1.0 / math.sqrt(L)    # emb attention has embed_dim = input_length
    pad = (ksize - 1) // 2
    rows = lax.broadcasted_iota(jnp.int32, (L, D), 0)

    def feed_forward(x):
        # x + 0.5 * Linear2(SiLU(Linear1(LayerNorm(x))))       (Dropout = identity)
        xn = _layernorm(x, ff_ln_g[...], ff_ln_b[...])
        h = jnp.dot(xn, ff_w1[...], preferred_element_type=jnp.float32) + ff_b1[...]
        h = h * jax.nn.sigmoid(h)                               # SiLU
        y = jnp.dot(h, ff_w2[...], preferred_element_type=jnp.float32) + ff_b2[...]
        return x + 0.5 * y

    def attention_module(x):
        # token self-attention branch: x + MHA(PE(LN1(x)))
        xi = _layernorm(x, a_ln1_g[...], a_ln1_b[...]) + pe
        x = x + _mha(xi, t_wq[...], t_wk[...], t_wv[...],
                     t_bq[...], t_bk[...], t_bv[...], t_wo[...], t_bo[...],
                     tok_scale)
        # embedding self-attention branch: x + permute(MHA(permute(PE(LN2(x)))))
        # permutes are in-kernel transposes of the tiny (L, D) tile (stays in VMEM).
        xi = _layernorm(x, a_ln2_g[...], a_ln2_b[...]) + pe
        a = _mha(xi.T, e_wq[...], e_wk[...], e_wv[...],
                 e_bq[...], e_bk[...], e_bv[...], e_wo[...], e_bo[...],
                 emb_scale)
        return x + a.T

    def conv_module(x):
        xn = _layernorm(x, c_ln_g[...], c_ln_b[...])
        # pointwise Conv1d(D -> 2D, k=1) split into the two GLU halves (GLU over channels)
        a = jnp.dot(xn, c_w1a[...], preferred_element_type=jnp.float32) + c_b1a[...]
        gate = jnp.dot(xn, c_w1b[...], preferred_element_type=jnp.float32) + c_b1b[...]
        g = a * jax.nn.sigmoid(gate)                            # (L, D)
        # depthwise Conv1d(D, D, ksize, groups=D) along time:
        # XLU rolls + boundary masks (no unaligned sublane slices, no concatenate).
        dw = c_dw[...]                                          # (ksize, D)
        acc = jnp.zeros((L, D), jnp.float32)
        for k in range(ksize):                                  # static unrolled taps
            shift = pad - k
            if shift == 0:
                gk = g
            else:
                gk = pltpu.roll(g, shift % L, axis=0)
                valid = (rows >= shift) & (rows < L + shift)    # zero-padding boundary
                gk = jnp.where(valid, gk, 0.0)
            acc = acc + dw[k:k + 1, :] * gk
        acc = acc + c_dwb[...]
        # BatchNorm1d (eval, running stats folded into scale/shift), then SiLU
        acc = acc * c_bns[...] + c_bnb[...]
        acc = acc * jax.nn.sigmoid(acc)
        # pointwise Conv1d(D -> D, k=1)
        y = jnp.dot(acc, c_w2[...], preferred_element_type=jnp.float32) + c_b2[...]
        return x + y                                            # residual, scale 1.0

    # All blocks are deepcopies of the same initialized block -> identical weights;
    # loop the blocks inside the kernel so weights are DMA'd exactly once.
    for _ in range(num_blocks):
        x = feed_forward(x)
        x = attention_module(x)
        x = conv_module(x)
        x = feed_forward(x)          # same FF instance applied twice (as in __init__)
        x = _layernorm(x, f_ln_g[...], f_ln_b[...])

    o_ref[0] = x


# ----------------------------- wrapper -----------------------------

def _wspec(shape):
    # full-array block, constant index map -> fetched once, resident in VMEM
    return pl.BlockSpec(shape, lambda b: (0, 0))


def conformer_encoder(x, p, pe, ksize, num_blocks):
    B, L, D = x.shape
    pe_slice = pe[:L, :]

    weights = [
        p["ff"]["ln_g"], p["ff"]["ln_b"], p["ff"]["w1_t"], p["ff"]["b1"],
        p["ff"]["w2_t"], p["ff"]["b2"],
        p["attn"]["ln1_g"], p["attn"]["ln1_b"],
        p["attn"]["tok"]["wq_t"], p["attn"]["tok"]["wk_t"], p["attn"]["tok"]["wv_t"],
        p["attn"]["tok"]["bq"], p["attn"]["tok"]["bk"], p["attn"]["tok"]["bv"],
        p["attn"]["tok"]["wo_t"], p["attn"]["tok"]["bo"],
        p["attn"]["ln2_g"], p["attn"]["ln2_b"],
        p["attn"]["emb"]["wq_t"], p["attn"]["emb"]["wk_t"], p["attn"]["emb"]["wv_t"],
        p["attn"]["emb"]["bq"], p["attn"]["emb"]["bk"], p["attn"]["emb"]["bv"],
        p["attn"]["emb"]["wo_t"], p["attn"]["emb"]["bo"],
        p["conv"]["ln_g"], p["conv"]["ln_b"],
        p["conv"]["pw1a_w_t"], p["conv"]["pw1a_b"],
        p["conv"]["pw1b_w_t"], p["conv"]["pw1b_b"],
        p["conv"]["dw_w_t"], p["conv"]["dw_b"],
        p["conv"]["bn_scale"], p["conv"]["bn_shift"],
        p["conv"]["pw2_w_t"], p["conv"]["pw2_b"],
        p["final_ln_g"], p["final_ln_b"],
    ]

    in_specs = [pl.BlockSpec((1, L, D), lambda b: (b, 0, 0)),   # per-batch activation tile
                _wspec((L, D))]                                  # position-encoding slice
    in_specs += [_wspec(w.shape) for w in weights]

    kern = partial(encoder_kernel, ksize=ksize, num_blocks=num_blocks)
    # NOTE: D=32 keeps the output lane-sparse; padding D to 128 would change the module's
    # interface, so we keep the semantic shape (fusion removes the dominant overhead).
    return pl.pallas_call(
        kern,
        out_shape=jax.ShapeDtypeStruct((B, L, D), jnp.float32),
        grid=(B,),
        in_specs=in_specs,
        out_specs=pl.BlockSpec((1, L, D), lambda b: (b, 0, 0)),
        compiler_params=pltpu.CompilerParams(
            dimension_semantics=("parallel",)),   # v7x: one batch element per TensorCore
    )(x, pe_slice, *weights)


# ----------------------------- parameters / tables -----------------------------

def position_encoding_table(max_len, d):
    pos = jnp.arange(max_len, dtype=jnp.float32)[:, None]
    div = jnp.exp(jnp.arange(0, d, 2, dtype=jnp.float32) * (-math.log(10000.0) / d))
    pe = jnp.zeros((max_len, d), jnp.float32)
    pe = pe.at[:, 0::2].set(jnp.sin(pos * div))
    pe = pe.at[:, 1::2].set(jnp.cos(pos * div))
    return pe


def init_params(key, L, D, F, K):
    keys = iter(jax.random.split(key, 32))

    def nrm(shape, scale=0.05):
        return scale * jax.random.normal(next(keys), shape, jnp.float32)

    ff = dict(
        ln_g=jnp.ones((1, D)), ln_b=jnp.zeros((1, D)),
        w1_t=nrm((D, F)), b1=nrm((1, F)),
        w2_t=nrm((F, D)), b2=nrm((1, D)),
    )

    def mha_params(E):
        return dict(
            wq_t=nrm((E, E)), wk_t=nrm((E, E)), wv_t=nrm((E, E)),
            bq=nrm((1, E)), bk=nrm((1, E)), bv=nrm((1, E)),
            wo_t=nrm((E, E)), bo=nrm((1, E)),
        )

    attn = dict(
        ln1_g=jnp.ones((1, D)), ln1_b=jnp.zeros((1, D)),
        tok=mha_params(D),                      # token attention: embed_dim = input_dim
        ln2_g=jnp.ones((1, D)), ln2_b=jnp.zeros((1, D)),
        emb=mha_params(L),                      # embedding attention: embed_dim = input_length
    )

    # BatchNorm1d eval-mode with default running stats (mean=0, var=1) folded to scale/shift
    bn_gamma = jnp.ones((1, D))
    bn_beta = jnp.zeros((1, D))
    run_mean = jnp.zeros((1, D))
    run_var = jnp.ones((1, D))
    bn_scale = bn_gamma / jnp.sqrt(run_var + BN_EPS)
    bn_shift = bn_beta - run_mean * bn_scale

    conv = dict(
        ln_g=jnp.ones((1, D)), ln_b=jnp.zeros((1, D)),
        pw1a_w_t=nrm((D, D)), pw1a_b=nrm((1, D)),   # Conv1d(D,2D,k=1) rows [0:D]   (GLU "a")
        pw1b_w_t=nrm((D, D)), pw1b_b=nrm((1, D)),   # Conv1d(D,2D,k=1) rows [D:2D]  (GLU gate)
        dw_w_t=nrm((K, D)), dw_b=nrm((1, D)),       # depthwise Conv1d weight (D,1,K) -> (K,D)
        bn_scale=bn_scale, bn_shift=bn_shift,
        pw2_w_t=nrm((D, D)), pw2_b=nrm((1, D)),     # Conv1d(D,D,k=1)
    )

    return dict(ff=ff, attn=attn, conv=conv,
                final_ln_g=jnp.ones((1, D)), final_ln_b=jnp.zeros((1, D)))


# ----------------------------- main -----------------------------

if __name__ == "__main__":
    B = 2          # batch
    L = 8          # input_length (sequence)
    D = 32         # input_dim
    F = 4          # feed_forward_expansion (module uses it literally as the hidden width)
    K = 3          # depth_kernel_size (odd so the residual shapes match)
    NUM_BLOCKS = 2

    key = jax.random.PRNGKey(0)
    kx, kp = jax.random.split(key)
    src = jax.random.normal(kx, (B, L, D), jnp.float32)
    params = init_params(kp, L, D, F, K)
    pe = position_encoding_table(1000, D)

    out = conformer_encoder(src, params, pe, K, NUM_BLOCKS)
    out = jax.block_until_ready(out)
    assert out.shape == (B, L, D) and out.dtype == jnp.float32
    assert bool(jnp.all(jnp.isfinite(out)))
    print("KERNEL_OK")
</pallas_src>

<mosaic_0001>
module attributes {stable_mosaic.version = 11 : i64} {
  func.func @encoder_kernel(%arg0: i32, %arg1: memref<1x8x32xf32, #tpu.memory_space<vmem>>, %arg2: memref<8x32xf32, #tpu.memory_space<vmem>>, %arg3: memref<1x32xf32, #tpu.memory_space<vmem>>, %arg4: memref<1x32xf32, #tpu.memory_space<vmem>>, %arg5: memref<32x4xf32, #tpu.memory_space<vmem>>, %arg6: memref<1x4xf32, #tpu.memory_space<vmem>>, %arg7: memref<4x32xf32, #tpu.memory_space<vmem>>, %arg8: memref<1x32xf32, #tpu.memory_space<vmem>>, %arg9: memref<1x32xf32, #tpu.memory_space<vmem>>, %arg10: memref<1x32xf32, #tpu.memory_space<vmem>>, %arg11: memref<32x32xf32, #tpu.memory_space<vmem>>, %arg12: memref<32x32xf32, #tpu.memory_space<vmem>>, %arg13: memref<32x32xf32, #tpu.memory_space<vmem>>, %arg14: memref<1x32xf32, #tpu.memory_space<vmem>>, %arg15: memref<1x32xf32, #tpu.memory_space<vmem>>, %arg16: memref<1x32xf32, #tpu.memory_space<vmem>>, %arg17: memref<32x32xf32, #tpu.memory_space<vmem>>, %arg18: memref<1x32xf32, #tpu.memory_space<vmem>>, %arg19: memref<1x32xf32, #tpu.memory_space<vmem>>, %arg20: memref<1x32xf32, #tpu.memory_space<vmem>>, %arg21: memref<8x8xf32, #tpu.memory_space<vmem>>, %arg22: memref<8x8xf32, #tpu.memory_space<vmem>>, %arg23: memref<8x8xf32, #tpu.memory_space<vmem>>, %arg24: memref<1x8xf32, #tpu.memory_space<vmem>>, %arg25: memref<1x8xf32, #tpu.memory_space<vmem>>, %arg26: memref<1x8xf32, #tpu.memory_space<vmem>>, %arg27: memref<8x8xf32, #tpu.memory_space<vmem>>, %arg28: memref<1x8xf32, #tpu.memory_space<vmem>>, %arg29: memref<1x32xf32, #tpu.memory_space<vmem>>, %arg30: memref<1x32xf32, #tpu.memory_space<vmem>>, %arg31: memref<32x32xf32, #tpu.memory_space<vmem>>, %arg32: memref<1x32xf32, #tpu.memory_space<vmem>>, %arg33: memref<32x32xf32, #tpu.memory_space<vmem>>, %arg34: memref<1x32xf32, #tpu.memory_space<vmem>>, %arg35: memref<3x32xf32, #tpu.memory_space<vmem>>, %arg36: memref<1x32xf32, #tpu.memory_space<vmem>>, %arg37: memref<1x32xf32, #tpu.memory_space<vmem>>, %arg38: memref<1x32xf32, #tpu.memory_space<vmem>>, %arg39: memref<32x32xf32, #tpu.memory_space<vmem>>, %arg40: memref<1x32xf32, #tpu.memory_space<vmem>>, %arg41: memref<1x32xf32, #tpu.memory_space<vmem>>, %arg42: memref<1x32xf32, #tpu.memory_space<vmem>>, %arg43: memref<1x8x32xf32, #tpu.memory_space<vmem>>) attributes {dimension_semantics = [#tpu.dimension_semantics<parallel>], iteration_bounds = array<i64: 2>, scalar_prefetch = 0 : i64, scratch_operands = 0 : i64, tpu.core_type = #tpu.core_type<tc>, window_params = [{transform_indices = @transform_0, window_bounds = array<i64: 1, 8, 32>}, {pipeline_mode = #tpu.pipeline_mode<synchronous>, transform_indices = @transform_1, window_bounds = array<i64: 8, 32>}, {pipeline_mode = #tpu.pipeline_mode<synchronous>, transform_indices = @transform_2, window_bounds = array<i64: 1, 32>}, {pipeline_mode = #tpu.pipeline_mode<synchronous>, transform_indices = @transform_3, window_bounds = array<i64: 1, 32>}, {pipeline_mode = #tpu.pipeline_mode<synchronous>, transform_indices = @transform_4, window_bounds = array<i64: 32, 4>}, {pipeline_mode = #tpu.pipeline_mode<synchronous>, transform_indices = @transform_5, window_bounds = array<i64: 1, 4>}, {pipeline_mode = #tpu.pipeline_mode<synchronous>, transform_indices = @transform_6, window_bounds = array<i64: 4, 32>}, {pipeline_mode = #tpu.pipeline_mode<synchronous>, transform_indices = @transform_7, window_bounds = array<i64: 1, 32>}, {pipeline_mode = #tpu.pipeline_mode<synchronous>, transform_indices = @transform_8, window_bounds = array<i64: 1, 32>}, {pipeline_mode = #tpu.pipeline_mode<synchronous>, transform_indices = @transform_9, window_bounds = array<i64: 1, 32>}, {pipeline_mode = #tpu.pipeline_mode<synchronous>, transform_indices = @transform_10, window_bounds = array<i64: 32, 32>}, {pipeline_mode = #tpu.pipeline_mode<synchronous>, transform_indices = @transform_11, window_bounds = array<i64: 32, 32>}, {pipeline_mode = #tpu.pipeline_mode<synchronous>, transform_indices = @transform_12, window_bounds = array<i64: 32, 32>}, {pipeline_mode = #tpu.pipeline_mode<synchronous>, transform_indices = @transform_13, window_bounds = array<i64: 1, 32>}, {pipeline_mode = #tpu.pipeline_mode<synchronous>, transform_indices = @transform_14, window_bounds = array<i64: 1, 32>}, {pipeline_mode = #tpu.pipeline_mode<synchronous>, transform_indices = @transform_15, window_bounds = array<i64: 1, 32>}, {pipeline_mode = #tpu.pipeline_mode<synchronous>, transform_indices = @transform_16, window_bounds = array<i64: 32, 32>}, {pipeline_mode = #tpu.pipeline_mode<synchronous>, transform_indices = @transform_17, window_bounds = array<i64: 1, 32>}, {pipeline_mode = #tpu.pipeline_mode<synchronous>, transform_indices = @transform_18, window_bounds = array<i64: 1, 32>}, {pipeline_mode = #tpu.pipeline_mode<synchronous>, transform_indices = @transform_19, window_bounds = array<i64: 1, 32>}, {pipeline_mode = #tpu.pipeline_mode<synchronous>, transform_indices = @transform_20, window_bounds = array<i64: 8, 8>}, {pipeline_mode = #tpu.pipeline_mode<synchronous>, transform_indices = @transform_21, window_bounds = array<i64: 8, 8>}, {pipeline_mode = #tpu.pipeline_mode<synchronous>, transform_indices = @transform_22, window_bounds = array<i64: 8, 8>}, {pipeline_mode = #tpu.pipeline_mode<synchronous>, transform_indices = @transform_23, window_bounds = array<i64: 1, 8>}, {pipeline_mode = #tpu.pipeline_mode<synchronous>, transform_indices = @transform_24, window_bounds = array<i64: 1, 8>}, {pipeline_mode = #tpu.pipeline_mode<synchronous>, transform_indices = @transform_25, window_bounds = array<i64: 1, 8>}, {pipeline_mode = #tpu.pipeline_mode<synchronous>, transform_indices = @transform_26, window_bounds = array<i64: 8, 8>}, {pipeline_mode = #tpu.pipeline_mode<synchronous>, transform_indices = @transform_27, window_bounds = array<i64: 1, 8>}, {pipeline_mode = #tpu.pipeline_mode<synchronous>, transform_indices = @transform_28, window_bounds = array<i64: 1, 32>}, {pipeline_mode = #tpu.pipeline_mode<synchronous>, transform_indices = @transform_29, window_bounds = array<i64: 1, 32>}, {pipeline_mode = #tpu.pipeline_mode<synchronous>, transform_indices = @transform_30, window_bounds = array<i64: 32, 32>}, {pipeline_mode = #tpu.pipeline_mode<synchronous>, transform_indices = @transform_31, window_bounds = array<i64: 1, 32>}, {pipeline_mode = #tpu.pipeline_mode<synchronous>, transform_indices = @transform_32, window_bounds = array<i64: 32, 32>}, {pipeline_mode = #tpu.pipeline_mode<synchronous>, transform_indices = @transform_33, window_bounds = array<i64: 1, 32>}, {pipeline_mode = #tpu.pipeline_mode<synchronous>, transform_indices = @transform_34, window_bounds = array<i64: 3, 32>}, {pipeline_mode = #tpu.pipeline_mode<synchronous>, transform_indices = @transform_35, window_bounds = array<i64: 1, 32>}, {pipeline_mode = #tpu.pipeline_mode<synchronous>, transform_indices = @transform_36, window_bounds = array<i64: 1, 32>}, {pipeline_mode = #tpu.pipeline_mode<synchronous>, transform_indices = @transform_37, window_bounds = array<i64: 1, 32>}, {pipeline_mode = #tpu.pipeline_mode<synchronous>, transform_indices = @transform_38, window_bounds = array<i64: 32, 32>}, {pipeline_mode = #tpu.pipeline_mode<synchronous>, transform_indices = @transform_39, window_bounds = array<i64: 1, 32>}, {pipeline_mode = #tpu.pipeline_mode<synchronous>, transform_indices = @transform_40, window_bounds = array<i64: 1, 32>}, {pipeline_mode = #tpu.pipeline_mode<synchronous>, transform_indices = @transform_41, window_bounds = array<i64: 1, 32>}, {transform_indices = @transform_42, window_bounds = array<i64: 1, 8, 32>}]} {
    %c0 = arith.constant 0 : index
    %c0_0 = arith.constant 0 : index
    %c0_1 = arith.constant 0 : index
    %0 = vector.load %arg1[%c0, %c0_0, %c0_1] : memref<1x8x32xf32, #tpu.memory_space<vmem>>, vector<1x8x32xf32>
    %1 = vector.shape_cast %0 : vector<1x8x32xf32> to vector<8x32xf32>
    %c0_2 = arith.constant 0 : index
    %c0_3 = arith.constant 0 : index
    %2 = vector.load %arg2[%c0_2, %c0_3] : memref<8x32xf32, #tpu.memory_space<vmem>>, vector<8x32xf32>
    %3 = tpu.iota {dimensions = array<i32: 0>} : vector<8x32xi32>
    %c0_4 = arith.constant 0 : index
    %c0_5 = arith.constant 0 : index
    %4 = vector.load %arg3[%c0_4, %c0_5] : memref<1x32xf32, #tpu.memory_space<vmem>>, vector<1x32xf32>
    %c0_6 = arith.constant 0 : index
    %c0_7 = arith.constant 0 : index
    %5 = vector.load %arg4[%c0_6, %c0_7] : memref<1x32xf32, #tpu.memory_space<vmem>>, vector<1x32xf32>
    %cst = arith.constant dense<0.000000e+00> : vector<8xf32>
    %6 = vector.multi_reduction <add>, %1, %cst [1] : vector<8x32xf32> to vector<8xf32>
    %7 = vector.shape_cast %6 : vector<8xf32> to vector<8x1xf32>
    %cst_8 = arith.constant 3.200000e+01 : f32
    %8 = vector.broadcast %cst_8 : f32 to vector<8x1xf32>
    %9 = arith.divf %7, %8 : vector<8x1xf32>
    %10 = vector.broadcast %9 : vector<8x1xf32> to vector<8x32xf32>
    %11 = arith.subf %1, %10 : vector<8x32xf32>
    %12 = arith.mulf %11, %11 : vector<8x32xf32>
    %cst_9 = arith.constant dense<0.000000e+00> : vector<8xf32>
    %13 = vector.multi_reduction <add>, %12, %cst_9 [1] : vector<8x32xf32> to vector<8xf32>
    %14 = vector.shape_cast %13 : vector<8xf32> to vector<8x1xf32>
    %cst_10 = arith.constant 3.200000e+01 : f32
    %15 = vector.broadcast %cst_10 : f32 to vector<8x1xf32>
    %16 = arith.divf %14, %15 : vector<8x1xf32>
    %17 = vector.broadcast %9 : vector<8x1xf32> to vector<8x32xf32>
    %18 = arith.subf %1, %17 : vector<8x32xf32>
    %cst_11 = arith.constant 9.99999974E-6 : f32
    %19 = vector.broadcast %cst_11 : f32 to vector<8x1xf32>
    %20 = arith.addf %16, %19 : vector<8x1xf32>
    %21 = math.rsqrt %20 : vector<8x1xf32>
    %22 = vector.broadcast %21 : vector<8x1xf32> to vector<8x32xf32>
    %23 = arith.mulf %18, %22 : vector<8x32xf32>
    %24 = vector.broadcast %4 : vector<1x32xf32> to vector<8x32xf32>
    %25 = arith.mulf %23, %24 : vector<8x32xf32>
    %26 = vector.broadcast %5 : vector<1x32xf32> to vector<8x32xf32>
    %27 = arith.addf %25, %26 : vector<8x32xf32>
    %c0_12 = arith.constant 0 : index
    %c0_13 = arith.constant 0 : index
    %28 = vector.load %arg5[%c0_12, %c0_13] : memref<32x4xf32, #tpu.memory_space<vmem>>, vector<32x4xf32>
    %cst_14 = arith.constant dense<0.000000e+00> : vector<8x4xf32>
    %29 = tpu.matmul %27, %28, %cst_14 {dimension_numbers = #tpu.dot_dimension_numbers<[1], [0], [0], [1], [0, 0, 1, 1], [], []>} : vector<8x32xf32>, vector<32x4xf32>, vector<8x4xf32> -> vector<8x4xf32>
    %c0_15 = arith.constant 0 : index
    %c0_16 = arith.constant 0 : index
    %30 = vector.load %arg6[%c0_15, %c0_16] : memref<1x4xf32, #tpu.memory_space<vmem>>, vector<1x4xf32>
    %31 = vector.broadcast %30 : vector<1x4xf32> to vector<8x4xf32>
    %32 = arith.addf %29, %31 : vector<8x4xf32>
    %33 = arith.negf %32 : vector<8x4xf32>
    %34 = math.exp %33 : vector<8x4xf32>
    %cst_17 = arith.constant 1.000000e+00 : f32
    %35 = vector.broadcast %cst_17 : f32 to vector<8x4xf32>
    %36 = arith.addf %35, %34 : vector<8x4xf32>
    %37 = arith.divf %35, %36 : vector<8x4xf32>
    %38 = arith.mulf %32, %37 : vector<8x4xf32>
    %c0_18 = arith.constant 0 : index
    %c0_19 = arith.constant 0 : index
    %39 = vector.load %arg7[%c0_18, %c0_19] : memref<4x32xf32, #tpu.memory_space<vmem>>, vector<4x32xf32>
    %cst_20 = arith.constant dense<0.000000e+00> : vector<8x32xf32>
    %40 = tpu.matmul %38, %39, %cst_20 {dimension_numbers = #tpu.dot_dimension_numbers<[1], [0], [0], [1], [0, 0, 1, 1], [], []>} : vector<8x4xf32>, vector<4x32xf32>, vector<8x32xf32> -> vector<8x32xf32>
    %c0_21 = arith.constant 0 : index
    %c0_22 = arith.constant 0 : index
    %41 = vector.load %arg8[%c0_21, %c0_22] : memref<1x32xf32, #tpu.memory_space<vmem>>, vector<1x32xf32>
    %42 = vector.broadcast %41 : vector<1x32xf32> to vector<8x32xf32>
    %43 = arith.addf %40, %42 : vector<8x32xf32>
    %cst_23 = arith.constant 5.000000e-01 : f32
    %44 = vector.broadcast %cst_23 : f32 to vector<8x32xf32>
    %45 = arith.mulf %44, %43 : vector<8x32xf32>
    %46 = arith.addf %1, %45 : vector<8x32xf32>
    %c0_24 = arith.constant 0 : index
    %c0_25 = arith.constant 0 : index
    %47 = vector.load %arg9[%c0_24, %c0_25] : memref<1x32xf32, #tpu.memory_space<vmem>>, vector<1x32xf32>
    %c0_26 = arith.constant 0 : index
    %c0_27 = arith.constant 0 : index
    %48 = vector.load %arg10[%c0_26, %c0_27] : memref<1x32xf32, #tpu.memory_space<vmem>>, vector<1x32xf32>
    %cst_28 = arith.constant dense<0.000000e+00> : vector<8xf32>
    %49 = vector.multi_reduction <add>, %46, %cst_28 [1] : vector<8x32xf32> to vector<8xf32>
    %50 = vector.shape_cast %49 : vector<8xf32> to vector<8x1xf32>
    %cst_29 = arith.constant 3.200000e+01 : f32
    %51 = vector.broadcast %cst_29 : f32 to vector<8x1xf32>
    %52 = arith.divf %50, %51 : vector<8x1xf32>
    %53 = vector.broadcast %52 : vector<8x1xf32> to vector<8x32xf32>
    %54 = arith.subf %46, %53 : vector<8x32xf32>
    %55 = arith.mulf %54, %54 : vector<8x32xf32>
    %cst_30 = arith.constant dense<0.000000e+00> : vector<8xf32>
    %56 = vector.multi_reduction <add>, %55, %cst_30 [1] : vector<8x32xf32> to vector<8xf32>
    %57 = vector.shape_cast %56 : vector<8xf32> to vector<8x1xf32>
    %cst_31 = arith.constant 3.200000e+01 : f32
    %58 = vector.broadcast %cst_31 : f32 to vector<8x1xf32>
    %59 = arith.divf %57, %58 : vector<8x1xf32>
    %60 = vector.broadcast %52 : vector<8x1xf32> to vector<8x32xf32>
    %61 = arith.subf %46, %60 : vector<8x32xf32>
    %cst_32 = arith.constant 9.99999974E-6 : f32
    %62 = vector.broadcast %cst_32 : f32 to vector<8x1xf32>
    %63 = arith.addf %59, %62 : vector<8x1xf32>
    %64 = math.rsqrt %63 : vector<8x1xf32>
    %65 = vector.broadcast %64 : vector<8x1xf32> to vector<8x32xf32>
    %66 = arith.mulf %61, %65 : vector<8x32xf32>
    %67 = vector.broadcast %47 : vector<1x32xf32> to vector<8x32xf32>
    %68 = arith.mulf %66, %67 : vector<8x32xf32>
    %69 = vector.broadcast %48 : vector<1x32xf32> to vector<8x32xf32>
    %70 = arith.addf %68, %69 : vector<8x32xf32>
    %71 = arith.addf %70, %2 : vector<8x32xf32>
    %c0_33 = arith.constant 0 : index
    %c0_34 = arith.constant 0 : index
    %72 = vector.load %arg11[%c0_33, %c0_34] : memref<32x32xf32, #tpu.memory_space<vmem>>, vector<32x32xf32>
    %c0_35 = arith.constant 0 : index
    %c0_36 = arith.constant 0 : index
    %73 = vector.load %arg12[%c0_35, %c0_36] : memref<32x32xf32, #tpu.memory_space<vmem>>, vector<32x32xf32>
    %c0_37 = arith.constant 0 : index
    %c0_38 = arith.constant 0 : index
    %74 = vector.load %arg13[%c0_37, %c0_38] : memref<32x32xf32, #tpu.memory_space<vmem>>, vector<32x32xf32>
    %c0_39 = arith.constant 0 : index
    %c0_40 = arith.constant 0 : index
    %75 = vector.load %arg14[%c0_39, %c0_40] : memref<1x32xf32, #tpu.memory_space<vmem>>, vector<1x32xf32>
    %c0_41 = arith.constant 0 : index
    %c0_42 = arith.constant 0 : index
    %76 = vector.load %arg15[%c0_41, %c0_42] : memref<1x32xf32, #tpu.memory_space<vmem>>, vector<1x32xf32>
    %c0_43 = arith.constant 0 : index
    %c0_44 = arith.constant 0 : index
    %77 = vector.load %arg16[%c0_43, %c0_44] : memref<1x32xf32, #tpu.memory_space<vmem>>, vector<1x32xf32>
    %c0_45 = arith.constant 0 : index
    %c0_46 = arith.constant 0 : index
    %78 = vector.load %arg17[%c0_45, %c0_46] : memref<32x32xf32, #tpu.memory_space<vmem>>, vector<32x32xf32>
    %c0_47 = arith.constant 0 : index
    %c0_48 = arith.constant 0 : index
    %79 = vector.load %arg18[%c0_47, %c0_48] : memref<1x32xf32, #tpu.memory_space<vmem>>, vector<1x32xf32>
    %cst_49 = arith.constant dense<0.000000e+00> : vector<8x32xf32>
    %80 = tpu.matmul %71, %72, %cst_49 {dimension_numbers = #tpu.dot_dimension_numbers<[1], [0], [0], [1], [0, 0, 1, 1], [], []>} : vector<8x32xf32>, vector<32x32xf32>, vector<8x32xf32> -> vector<8x32xf32>
    %81 = vector.broadcast %75 : vector<1x32xf32> to vector<8x32xf32>
    %82 = arith.addf %80, %81 : vector<8x32xf32>
    %cst_50 = arith.constant dense<0.000000e+00> : vector<8x32xf32>
    %83 = tpu.matmul %71, %73, %cst_50 {dimension_numbers = #tpu.dot_dimension_numbers<[1], [0], [0], [1], [0, 0, 1, 1], [], []>} : vector<8x32xf32>, vector<32x32xf32>, vector<8x32xf32> -> vector<8x32xf32>
    %84 = vector.broadcast %76 : vector<1x32xf32> to vector<8x32xf32>
    %85 = arith.addf %83, %84 : vector<8x32xf32>
    %cst_51 = arith.constant dense<0.000000e+00> : vector<8x32xf32>
    %86 = tpu.matmul %71, %74, %cst_51 {dimension_numbers = #tpu.dot_dimension_numbers<[1], [0], [0], [1], [0, 0, 1, 1], [], []>} : vector<8x32xf32>, vector<32x32xf32>, vector<8x32xf32> -> vector<8x32xf32>
    %87 = vector.broadcast %77 : vector<1x32xf32> to vector<8x32xf32>
    %88 = arith.addf %86, %87 : vector<8x32xf32>
    %cst_52 = arith.constant dense<0.000000e+00> : vector<8x8xf32>
    %89 = tpu.matmul %82, %85, %cst_52 {dimension_numbers = #tpu.dot_dimension_numbers<[1], [1], [0], [0], [0, 0, 1, 0], [], []>} : vector<8x32xf32>, vector<8x32xf32>, vector<8x8xf32> -> vector<8x8xf32>
    %cst_53 = arith.constant 0.176776692 : f32
    %90 = vector.broadcast %cst_53 : f32 to vector<8x8xf32>
    %91 = arith.mulf %89, %90 : vector<8x8xf32>
    %cst_54 = arith.constant dense<0xFF800000> : vector<8xf32>
    %92 = vector.multi_reduction <maximumf>, %91, %cst_54 [1] : vector<8x8xf32> to vector<8xf32>
    %93 = vector.shape_cast %92 : vector<8xf32> to vector<8x1xf32>
    %94 = vector.broadcast %93 : vector<8x1xf32> to vector<8x8xf32>
    %95 = arith.subf %91, %94 : vector<8x8xf32>
    %96 = math.exp %95 : vector<8x8xf32>
    %cst_55 = arith.constant dense<0.000000e+00> : vector<8xf32>
    %97 = vector.multi_reduction <add>, %96, %cst_55 [1] : vector<8x8xf32> to vector<8xf32>
    %98 = vector.shape_cast %97 : vector<8xf32> to vector<8x1xf32>
    %99 = tpu.reciprocal %98 {approx = true} : vector<8x1xf32> -> vector<8x1xf32>
    %100 = vector.broadcast %99 : vector<8x1xf32> to vector<8x8xf32>
    %101 = arith.mulf %96, %100 : vector<8x8xf32>
    %cst_56 = arith.constant dense<0.000000e+00> : vector<8x32xf32>
    %102 = tpu.matmul %101, %88, %cst_56 {dimension_numbers = #tpu.dot_dimension_numbers<[1], [0], [0], [1], [0, 0, 1, 1], [], []>} : vector<8x8xf32>, vector<8x32xf32>, vector<8x32xf32> -> vector<8x32xf32>
    %cst_57 = arith.constant dense<0.000000e+00> : vector<8x32xf32>
    %103 = tpu.matmul %102, %78, %cst_57 {dimension_numbers = #tpu.dot_dimension_numbers<[1], [0], [0], [1], [0, 0, 1, 1], [], []>} : vector<8x32xf32>, vector<32x32xf32>, vector<8x32xf32> -> vector<8x32xf32>
    %104 = vector.broadcast %79 : vector<1x32xf32> to vector<8x32xf32>
    %105 = arith.addf %103, %104 : vector<8x32xf32>
    %106 = arith.addf %46, %105 : vector<8x32xf32>
    %c0_58 = arith.constant 0 : index
    %c0_59 = arith.constant 0 : index
    %107 = vector.load %arg19[%c0_58, %c0_59] : memref<1x32xf32, #tpu.memory_space<vmem>>, vector<1x32xf32>
    %c0_60 = arith.constant 0 : index
    %c0_61 = arith.constant 0 : index
    %108 = vector.load %arg20[%c0_60, %c0_61] : memref<1x32xf32, #tpu.memory_space<vmem>>, vector<1x32xf32>
    %cst_62 = arith.constant dense<0.000000e+00> : vector<8xf32>
    %109 = vector.multi_reduction <add>, %106, %cst_62 [1] : vector<8x32xf32> to vector<8xf32>
    %110 = vector.shape_cast %109 : vector<8xf32> to vector<8x1xf32>
    %cst_63 = arith.constant 3.200000e+01 : f32
    %111 = vector.broadcast %cst_63 : f32 to vector<8x1xf32>
    %112 = arith.divf %110, %111 : vector<8x1xf32>
    %113 = vector.broadcast %112 : vector<8x1xf32> to vector<8x32xf32>
    %114 = arith.subf %106, %113 : vector<8x32xf32>
    %115 = arith.mulf %114, %114 : vector<8x32xf32>
    %cst_64 = arith.constant dense<0.000000e+00> : vector<8xf32>
    %116 = vector.multi_reduction <add>, %115, %cst_64 [1] : vector<8x32xf32> to vector<8xf32>
    %117 = vector.shape_cast %116 : vector<8xf32> to vector<8x1xf32>
    %cst_65 = arith.constant 3.200000e+01 : f32
    %118 = vector.broadcast %cst_65 : f32 to vector<8x1xf32>
    %119 = arith.divf %117, %118 : vector<8x1xf32>
    %120 = vector.broadcast %112 : vector<8x1xf32> to vector<8x32xf32>
    %121 = arith.subf %106, %120 : vector<8x32xf32>
    %cst_66 = arith.constant 9.99999974E-6 : f32
    %122 = vector.broadcast %cst_66 : f32 to vector<8x1xf32>
    %123 = arith.addf %119, %122 : vector<8x1xf32>
    %124 = math.rsqrt %123 : vector<8x1xf32>
    %125 = vector.broadcast %124 : vector<8x1xf32> to vector<8x32xf32>
    %126 = arith.mulf %121, %125 : vector<8x32xf32>
    %127 = vector.broadcast %107 : vector<1x32xf32> to vector<8x32xf32>
    %128 = arith.mulf %126, %127 : vector<8x32xf32>
    %129 = vector.broadcast %108 : vector<1x32xf32> to vector<8x32xf32>
    %130 = arith.addf %128, %129 : vector<8x32xf32>
    %131 = arith.addf %130, %2 : vector<8x32xf32>
    %132 = tpu.transpose %131, [1, 0] : vector<8x32xf32> -> vector<32x8xf32>
    %c0_67 = arith.constant 0 : index
    %c0_68 = arith.constant 0 : index
    %133 = vector.load %arg21[%c0_67, %c0_68] : memref<8x8xf32, #tpu.memory_space<vmem>>, vector<8x8xf32>
    %c0_69 = arith.constant 0 : index
    %c0_70 = arith.constant 0 : index
    %134 = vector.load %arg22[%c0_69, %c0_70] : memref<8x8xf32, #tpu.memory_space<vmem>>, vector<8x8xf32>
    %c0_71 = arith.constant 0 : index
    %c0_72 = arith.constant 0 : index
    %135 = vector.load %arg23[%c0_71, %c0_72] : memref<8x8xf32, #tpu.memory_space<vmem>>, vector<8x8xf32>
    %c0_73 = arith.constant 0 : index
    %c0_74 = arith.constant 0 : index
    %136 = vector.load %arg24[%c0_73, %c0_74] : memref<1x8xf32, #tpu.memory_space<vmem>>, vector<1x8xf32>
    %c0_75 = arith.constant 0 : index
    %c0_76 = arith.constant 0 : index
    %137 = vector.load %arg25[%c0_75, %c0_76] : memref<1x8xf32, #tpu.memory_space<vmem>>, vector<1x8xf32>
    %c0_77 = arith.constant 0 : index
    %c0_78 = arith.constant 0 : index
    %138 = vector.load %arg26[%c0_77, %c0_78] : memref<1x8xf32, #tpu.memory_space<vmem>>, vector<1x8xf32>
    %c0_79 = arith.constant 0 : index
    %c0_80 = arith.constant 0 : index
    %139 = vector.load %arg27[%c0_79, %c0_80] : memref<8x8xf32, #tpu.memory_space<vmem>>, vector<8x8xf32>
    %c0_81 = arith.constant 0 : index
    %c0_82 = arith.constant 0 : index
    %140 = vector.load %arg28[%c0_81, %c0_82] : memref<1x8xf32, #tpu.memory_space<vmem>>, vector<1x8xf32>
    %cst_83 = arith.constant dense<0.000000e+00> : vector<32x8xf32>
    %141 = tpu.matmul %132, %133, %cst_83 {dimension_numbers = #tpu.dot_dimension_numbers<[1], [0], [0], [1], [0, 0, 1, 1], [], []>} : vector<32x8xf32>, vector<8x8xf32>, vector<32x8xf32> -> vector<32x8xf32>
    %142 = vector.broadcast %136 : vector<1x8xf32> to vector<32x8xf32>
    %143 = arith.addf %141, %142 : vector<32x8xf32>
    %cst_84 = arith.constant dense<0.000000e+00> : vector<32x8xf32>
    %144 = tpu.matmul %132, %134, %cst_84 {dimension_numbers = #tpu.dot_dimension_numbers<[1], [0], [0], [1], [0, 0, 1, 1], [], []>} : vector<32x8xf32>, vector<8x8xf32>, vector<32x8xf32> -> vector<32x8xf32>
    %145 = vector.broadcast %137 : vector<1x8xf32> to vector<32x8xf32>
    %146 = arith.addf %144, %145 : vector<32x8xf32>
    %cst_85 = arith.constant dense<0.000000e+00> : vector<32x8xf32>
    %147 = tpu.matmul %132, %135, %cst_85 {dimension_numbers = #tpu.dot_dimension_numbers<[1], [0], [0], [1], [0, 0, 1, 1], [], []>} : vector<32x8xf32>, vector<8x8xf32>, vector<32x8xf32> -> vector<32x8xf32>
    %148 = vector.broadcast %138 : vector<1x8xf32> to vector<32x8xf32>
    %149 = arith.addf %147, %148 : vector<32x8xf32>
    %cst_86 = arith.constant dense<0.000000e+00> : vector<32x32xf32>
    %150 = tpu.matmul %143, %146, %cst_86 {dimension_numbers = #tpu.dot_dimension_numbers<[1], [1], [0], [0], [0, 0, 1, 0], [], []>} : vector<32x8xf32>, vector<32x8xf32>, vector<32x32xf32> -> vector<32x32xf32>
    %cst_87 = arith.constant 0.353553385 : f32
    %151 = vector.broadcast %cst_87 : f32 to vector<32x32xf32>
    %152 = arith.mulf %150, %151 : vector<32x32xf32>
    %cst_88 = arith.constant dense<0xFF800000> : vector<32xf32>
    %153 = vector.multi_reduction <maximumf>, %152, %cst_88 [1] : vector<32x32xf32> to vector<32xf32>
    %154 = vector.shape_cast %153 : vector<32xf32> to vector<32x1xf32>
    %155 = vector.broadcast %154 : vector<32x1xf32> to vector<32x32xf32>
    %156 = arith.subf %152, %155 : vector<32x32xf32>
    %157 = math.exp %156 : vector<32x32xf32>
    %cst_89 = arith.constant dense<0.000000e+00> : vector<32xf32>
    %158 = vector.multi_reduction <add>, %157, %cst_89 [1] : vector<32x32xf32> to vector<32xf32>
    %159 = vector.shape_cast %158 : vector<32xf32> to vector<32x1xf32>
    %160 = tpu.reciprocal %159 {approx = true} : vector<32x1xf32> -> vector<32x1xf32>
    %161 = vector.broadcast %160 : vector<32x1xf32> to vector<32x32xf32>
    %162 = arith.mulf %157, %161 : vector<32x32xf32>
    %cst_90 = arith.constant dense<0.000000e+00> : vector<32x8xf32>
    %163 = tpu.matmul %162, %149, %cst_90 {dimension_numbers = #tpu.dot_dimension_numbers<[1], [0], [0], [1], [0, 0, 1, 1], [], []>} : vector<32x32xf32>, vector<32x8xf32>, vector<32x8xf32> -> vector<32x8xf32>
    %cst_91 = arith.constant dense<0.000000e+00> : vector<32x8xf32>
    %164 = tpu.matmul %163, %139, %cst_91 {dimension_numbers = #tpu.dot_dimension_numbers<[1], [0], [0], [1], [0, 0, 1, 1], [], []>} : vector<32x8xf32>, vector<8x8xf32>, vector<32x8xf32> -> vector<32x8xf32>
    %165 = vector.broadcast %140 : vector<1x8xf32> to vector<32x8xf32>
    %166 = arith.addf %164, %165 : vector<32x8xf32>
    %167 = tpu.transpose %166, [1, 0] : vector<32x8xf32> -> vector<8x32xf32>
    %168 = arith.addf %106, %167 : vector<8x32xf32>
    %c0_92 = arith.constant 0 : index
    %c0_93 = arith.constant 0 : index
    %169 = vector.load %arg29[%c0_92, %c0_93] : memref<1x32xf32, #tpu.memory_space<vmem>>, vector<1x32xf32>
    %c0_94 = arith.constant 0 : index
    %c0_95 = arith.constant 0 : index
    %170 = vector.load %arg30[%c0_94, %c0_95] : memref<1x32xf32, #tpu.memory_space<vmem>>, vector<1x32xf32>
    %cst_96 = arith.constant dense<0.000000e+00> : vector<8xf32>
    %171 = vector.multi_reduction <add>, %168, %cst_96 [1] : vector<8x32xf32> to vector<8xf32>
    %172 = vector.shape_cast %171 : vector<8xf32> to vector<8x1xf32>
    %cst_97 = arith.constant 3.200000e+01 : f32
    %173 = vector.broadcast %cst_97 : f32 to vector<8x1xf32>
    %174 = arith.divf %172, %173 : vector<8x1xf32>
    %175 = vector.broadcast %174 : vector<8x1xf32> to vector<8x32xf32>
    %176 = arith.subf %168, %175 : vector<8x32xf32>
    %177 = arith.mulf %176, %176 : vector<8x32xf32>
    %cst_98 = arith.constant dense<0.000000e+00> : vector<8xf32>
    %178 = vector.multi_reduction <add>, %177, %cst_98 [1] : vector<8x32xf32> to vector<8xf32>
    %179 = vector.shape_cast %178 : vector<8xf32> to vector<8x1xf32>
    %cst_99 = arith.constant 3.200000e+01 : f32
    %180 = vector.broadcast %cst_99 : f32 to vector<8x1xf32>
    %181 = arith.divf %179, %180 : vector<8x1xf32>
    %182 = vector.broadcast %174 : vector<8x1xf32> to vector<8x32xf32>
    %183 = arith.subf %168, %182 : vector<8x32xf32>
    %cst_100 = arith.constant 9.99999974E-6 : f32
    %184 = vector.broadcast %cst_100 : f32 to vector<8x1xf32>
    %185 = arith.addf %181, %184 : vector<8x1xf32>
    %186 = math.rsqrt %185 : vector<8x1xf32>
    %187 = vector.broadcast %186 : vector<8x1xf32> to vector<8x32xf32>
    %188 = arith.mulf %183, %187 : vector<8x32xf32>
    %189 = vector.broadcast %169 : vector<1x32xf32> to vector<8x32xf32>
    %190 = arith.mulf %188, %189 : vector<8x32xf32>
    %191 = vector.broadcast %170 : vector<1x32xf32> to vector<8x32xf32>
    %192 = arith.addf %190, %191 : vector<8x32xf32>
    %c0_101 = arith.constant 0 : index
    %c0_102 = arith.constant 0 : index
    %193 = vector.load %arg31[%c0_101, %c0_102] : memref<32x32xf32, #tpu.memory_space<vmem>>, vector<32x32xf32>
    %cst_103 = arith.constant dense<0.000000e+00> : vector<8x32xf32>
    %194 = tpu.matmul %192, %193, %cst_103 {dimension_numbers = #tpu.dot_dimension_numbers<[1], [0], [0], [1], [0, 0, 1, 1], [], []>} : vector<8x32xf32>, vector<32x32xf32>, vector<8x32xf32> -> vector<8x32xf32>
    %c0_104 = arith.constant 0 : index
    %c0_105 = arith.constant 0 : index
    %195 = vector.load %arg32[%c0_104, %c0_105] : memref<1x32xf32, #tpu.memory_space<vmem>>, vector<1x32xf32>
    %196 = vector.broadcast %195 : vector<1x32xf32> to vector<8x32xf32>
    %197 = arith.addf %194, %196 : vector<8x32xf32>
    %c0_106 = arith.constant 0 : index
    %c0_107 = arith.constant 0 : index
    %198 = vector.load %arg33[%c0_106, %c0_107] : memref<32x32xf32, #tpu.memory_space<vmem>>, vector<32x32xf32>
    %cst_108 = arith.constant dense<0.000000e+00> : vector<8x32xf32>
    %199 = tpu.matmul %192, %198, %cst_108 {dimension_numbers = #tpu.dot_dimension_numbers<[1], [0], [0], [1], [0, 0, 1, 1], [], []>} : vector<8x32xf32>, vector<32x32xf32>, vector<8x32xf32> -> vector<8x32xf32>
    %c0_109 = arith.constant 0 : index
    %c0_110 = arith.constant 0 : index
    %200 = vector.load %arg34[%c0_109, %c0_110] : memref<1x32xf32, #tpu.memory_space<vmem>>, vector<1x32xf32>
    %201 = vector.broadcast %200 : vector<1x32xf32> to vector<8x32xf32>
    %202 = arith.addf %199, %201 : vector<8x32xf32>
    %203 = arith.negf %202 : vector<8x32xf32>
    %204 = math.exp %203 : vector<8x32xf32>
    %cst_111 = arith.constant 1.000000e+00 : f32
    %205 = vector.broadcast %cst_111 : f32 to vector<8x32xf32>
    %206 = arith.addf %205, %204 : vector<8x32xf32>
    %207 = arith.divf %205, %206 : vector<8x32xf32>
    %208 = arith.mulf %197, %207 : vector<8x32xf32>
    %c0_112 = arith.constant 0 : index
    %c0_113 = arith.constant 0 : index
    %209 = vector.load %arg35[%c0_112, %c0_113] : memref<3x32xf32, #tpu.memory_space<vmem>>, vector<3x32xf32>
    %cst_114 = arith.constant 0.000000e+00 : f32
    %210 = vector.broadcast %cst_114 : f32 to vector<8x32xf32>
    %c1_i32 = arith.constant 1 : i32
    %211 = tpu.dynamic_rotate %208 by %c1_i32 dim 0 : vector<8x32xf32>, i32 -> vector<8x32xf32>
    %c1_i32_115 = arith.constant 1 : i32
    %212 = vector.broadcast %c1_i32_115 : i32 to vector<8x32xi32>
    %213 = arith.cmpi sge, %3, %212 : vector<8x32xi32>
    %c9_i32 = arith.constant 9 : i32
    %214 = vector.broadcast %c9_i32 : i32 to vector<8x32xi32>
    %215 = arith.cmpi slt, %3, %214 : vector<8x32xi32>
    %216 = arith.andi %213, %215 : vector<8x32xi1>
    %cst_116 = arith.constant 0.000000e+00 : f32
    %217 = vector.broadcast %cst_116 : f32 to vector<8x32xf32>
    %218 = arith.select %216, %211, %217 : vector<8x32xi1>, vector<8x32xf32>
    %219 = vector.extract_strided_slice %209 {offsets = [0, 0], sizes = [1, 32], strides = [1, 1]} : vector<3x32xf32> to vector<1x32xf32>
    %220 = vector.broadcast %219 : vector<1x32xf32> to vector<8x32xf32>
    %221 = arith.mulf %220, %218 : vector<8x32xf32>
    %222 = arith.addf %210, %221 : vector<8x32xf32>
    %223 = vector.extract_strided_slice %209 {offsets = [1, 0], sizes = [1, 32], strides = [1, 1]} : vector<3x32xf32> to vector<1x32xf32>
    %224 = vector.broadcast %223 : vector<1x32xf32> to vector<8x32xf32>
    %225 = arith.mulf %224, %208 : vector<8x32xf32>
    %226 = arith.addf %222, %225 : vector<8x32xf32>
    %c7_i32 = arith.constant 7 : i32
    %227 = tpu.dynamic_rotate %208 by %c7_i32 dim 0 : vector<8x32xf32>, i32 -> vector<8x32xf32>
    %c-1_i32 = arith.constant -1 : i32
    %228 = vector.broadcast %c-1_i32 : i32 to vector<8x32xi32>
    %229 = arith.cmpi sge, %3, %228 : vector<8x32xi32>
    %c7_i32_117 = arith.constant 7 : i32
    %230 = vector.broadcast %c7_i32_117 : i32 to vector<8x32xi32>
    %231 = arith.cmpi slt, %3, %230 : vector<8x32xi32>
    %232 = arith.andi %229, %231 : vector<8x32xi1>
    %cst_118 = arith.constant 0.000000e+00 : f32
    %233 = vector.broadcast %cst_118 : f32 to vector<8x32xf32>
    %234 = arith.select %232, %227, %233 : vector<8x32xi1>, vector<8x32xf32>
    %235 = vector.extract_strided_slice %209 {offsets = [2, 0], sizes = [1, 32], strides = [1, 1]} : vector<3x32xf32> to vector<1x32xf32>
    %236 = vector.broadcast %235 : vector<1x32xf32> to vector<8x32xf32>
    %237 = arith.mulf %236, %234 : vector<8x32xf32>
    %238 = arith.addf %226, %237 : vector<8x32xf32>
    %c0_119 = arith.constant 0 : index
    %c0_120 = arith.constant 0 : index
    %239 = vector.load %arg36[%c0_119, %c0_120] : memref<1x32xf32, #tpu.memory_space<vmem>>, vector<1x32xf32>
    %240 = vector.broadcast %239 : vector<1x32xf32> to vector<8x32xf32>
    %241 = arith.addf %238, %240 : vector<8x32xf32>
    %c0_121 = arith.constant 0 : index
    %c0_122 = arith.constant 0 : index
    %242 = vector.load %arg37[%c0_121, %c0_122] : memref<1x32xf32, #tpu.memory_space<vmem>>, vector<1x32xf32>
    %243 = vector.broadcast %242 : vector<1x32xf32> to vector<8x32xf32>
    %244 = arith.mulf %241, %243 : vector<8x32xf32>
    %c0_123 = arith.constant 0 : index
    %c0_124 = arith.constant 0 : index
    %245 = vector.load %arg38[%c0_123, %c0_124] : memref<1x32xf32, #tpu.memory_space<vmem>>, vector<1x32xf32>
    %246 = vector.broadcast %245 : vector<1x32xf32> to vector<8x32xf32>
    %247 = arith.addf %244, %246 : vector<8x32xf32>
    %248 = arith.negf %247 : vector<8x32xf32>
    %249 = math.exp %248 : vector<8x32xf32>
    %cst_125 = arith.constant 1.000000e+00 : f32
    %250 = vector.broadcast %cst_125 : f32 to vector<8x32xf32>
    %251 = arith.addf %250, %249 : vector<8x32xf32>
    %252 = arith.divf %250, %251 : vector<8x32xf32>
    %253 = arith.mulf %247, %252 : vector<8x32xf32>
    %c0_126 = arith.constant 0 : index
    %c0_127 = arith.constant 0 : index
    %254 = vector.load %arg39[%c0_126, %c0_127] : memref<32x32xf32, #tpu.memory_space<vmem>>, vector<32x32xf32>
    %cst_128 = arith.constant dense<0.000000e+00> : vector<8x32xf32>
    %255 = tpu.matmul %253, %254, %cst_128 {dimension_numbers = #tpu.dot_dimension_numbers<[1], [0], [0], [1], [0, 0, 1, 1], [], []>} : vector<8x32xf32>, vector<32x32xf32>, vector<8x32xf32> -> vector<8x32xf32>
    %c0_129 = arith.constant 0 : index
    %c0_130 = arith.constant 0 : index
    %256 = vector.load %arg40[%c0_129, %c0_130] : memref<1x32xf32, #tpu.memory_space<vmem>>, vector<1x32xf32>
    %257 = vector.broadcast %256 : vector<1x32xf32> to vector<8x32xf32>
    %258 = arith.addf %255, %257 : vector<8x32xf32>
    %259 = arith.addf %168, %258 : vector<8x32xf32>
    %c0_131 = arith.constant 0 : index
    %c0_132 = arith.constant 0 : index
    %260 = vector.load %arg3[%c0_131, %c0_132] : memref<1x32xf32, #tpu.memory_space<vmem>>, vector<1x32xf32>
    %c0_133 = arith.constant 0 : index
    %c0_134 = arith.constant 0 : index
    %261 = vector.load %arg4[%c0_133, %c0_134] : memref<1x32xf32, #tpu.memory_space<vmem>>, vector<1x32xf32>
    %cst_135 = arith.constant dense<0.000000e+00> : vector<8xf32>
    %262 = vector.multi_reduction <add>, %259, %cst_135 [1] : vector<8x32xf32> to vector<8xf32>
    %263 = vector.shape_cast %262 : vector<8xf32> to vector<8x1xf32>
    %cst_136 = arith.constant 3.200000e+01 : f32
    %264 = vector.broadcast %cst_136 : f32 to vector<8x1xf32>
    %265 = arith.divf %263, %264 : vector<8x1xf32>
    %266 = vector.broadcast %265 : vector<8x1xf32> to vector<8x32xf32>
    %267 = arith.subf %259, %266 : vector<8x32xf32>
    %268 = arith.mulf %267, %267 : vector<8x32xf32>
    %cst_137 = arith.constant dense<0.000000e+00> : vector<8xf32>
    %269 = vector.multi_reduction <add>, %268, %cst_137 [1] : vector<8x32xf32> to vector<8xf32>
    %270 = vector.shape_cast %269 : vector<8xf32> to vector<8x1xf32>
    %cst_138 = arith.constant 3.200000e+01 : f32
    %271 = vector.broadcast %cst_138 : f32 to vector<8x1xf32>
    %272 = arith.divf %270, %271 : vector<8x1xf32>
    %273 = vector.broadcast %265 : vector<8x1xf32> to vector<8x32xf32>
    %274 = arith.subf %259, %273 : vector<8x32xf32>
    %cst_139 = arith.constant 9.99999974E-6 : f32
    %275 = vector.broadcast %cst_139 : f32 to vector<8x1xf32>
    %276 = arith.addf %272, %275 : vector<8x1xf32>
    %277 = math.rsqrt %276 : vector<8x1xf32>
    %278 = vector.broadcast %277 : vector<8x1xf32> to vector<8x32xf32>
    %279 = arith.mulf %274, %278 : vector<8x32xf32>
    %280 = vector.broadcast %260 : vector<1x32xf32> to vector<8x32xf32>
    %281 = arith.mulf %279, %280 : vector<8x32xf32>
    %282 = vector.broadcast %261 : vector<1x32xf32> to vector<8x32xf32>
    %283 = arith.addf %281, %282 : vector<8x32xf32>
    %c0_140 = arith.constant 0 : index
    %c0_141 = arith.constant 0 : index
    %284 = vector.load %arg5[%c0_140, %c0_141] : memref<32x4xf32, #tpu.memory_space<vmem>>, vector<32x4xf32>
    %cst_142 = arith.constant dense<0.000000e+00> : vector<8x4xf32>
    %285 = tpu.matmul %283, %284, %cst_142 {dimension_numbers = #tpu.dot_dimension_numbers<[1], [0], [0], [1], [0, 0, 1, 1], [], []>} : vector<8x32xf32>, vector<32x4xf32>, vector<8x4xf32> -> vector<8x4xf32>
    %c0_143 = arith.constant 0 : index
    %c0_144 = arith.constant 0 : index
    %286 = vector.load %arg6[%c0_143, %c0_144] : memref<1x4xf32, #tpu.memory_space<vmem>>, vector<1x4xf32>
    %287 = vector.broadcast %286 : vector<1x4xf32> to vector<8x4xf32>
    %288 = arith.addf %285, %287 : vector<8x4xf32>
    %289 = arith.negf %288 : vector<8x4xf32>
    %290 = math.exp %289 : vector<8x4xf32>
    %cst_145 = arith.constant 1.000000e+00 : f32
    %291 = vector.broadcast %cst_145 : f32 to vector<8x4xf32>
    %292 = arith.addf %291, %290 : vector<8x4xf32>
    %293 = arith.divf %291, %292 : vector<8x4xf32>
    %294 = arith.mulf %288, %293 : vector<8x4xf32>
    %c0_146 = arith.constant 0 : index
    %c0_147 = arith.constant 0 : index
    %295 = vector.load %arg7[%c0_146, %c0_147] : memref<4x32xf32, #tpu.memory_space<vmem>>, vector<4x32xf32>
    %cst_148 = arith.constant dense<0.000000e+00> : vector<8x32xf32>
    %296 = tpu.matmul %294, %295, %cst_148 {dimension_numbers = #tpu.dot_dimension_numbers<[1], [0], [0], [1], [0, 0, 1, 1], [], []>} : vector<8x4xf32>, vector<4x32xf32>, vector<8x32xf32> -> vector<8x32xf32>
    %c0_149 = arith.constant 0 : index
    %c0_150 = arith.constant 0 : index
    %297 = vector.load %arg8[%c0_149, %c0_150] : memref<1x32xf32, #tpu.memory_space<vmem>>, vector<1x32xf32>
    %298 = vector.broadcast %297 : vector<1x32xf32> to vector<8x32xf32>
    %299 = arith.addf %296, %298 : vector<8x32xf32>
    %cst_151 = arith.constant 5.000000e-01 : f32
    %300 = vector.broadcast %cst_151 : f32 to vector<8x32xf32>
    %301 = arith.mulf %300, %299 : vector<8x32xf32>
    %302 = arith.addf %259, %301 : vector<8x32xf32>
    %c0_152 = arith.constant 0 : index
    %c0_153 = arith.constant 0 : index
    %303 = vector.load %arg41[%c0_152, %c0_153] : memref<1x32xf32, #tpu.memory_space<vmem>>, vector<1x32xf32>
    %c0_154 = arith.constant 0 : index
    %c0_155 = arith.constant 0 : index
    %304 = vector.load %arg42[%c0_154, %c0_155] : memref<1x32xf32, #tpu.memory_space<vmem>>, vector<1x32xf32>
    %cst_156 = arith.constant dense<0.000000e+00> : vector<8xf32>
    %305 = vector.multi_reduction <add>, %302, %cst_156 [1] : vector<8x32xf32> to vector<8xf32>
    %306 = vector.shape_cast %305 : vector<8xf32> to vector<8x1xf32>
    %cst_157 = arith.constant 3.200000e+01 : f32
    %307 = vector.broadcast %cst_157 : f32 to vector<8x1xf32>
    %308 = arith.divf %306, %307 : vector<8x1xf32>
    %309 = vector.broadcast %308 : vector<8x1xf32> to vector<8x32xf32>
    %310 = arith.subf %302, %309 : vector<8x32xf32>
    %311 = arith.mulf %310, %310 : vector<8x32xf32>
    %cst_158 = arith.constant dense<0.000000e+00> : vector<8xf32>
    %312 = vector.multi_reduction <add>, %311, %cst_158 [1] : vector<8x32xf32> to vector<8xf32>
    %313 = vector.shape_cast %312 : vector<8xf32> to vector<8x1xf32>
    %cst_159 = arith.constant 3.200000e+01 : f32
    %314 = vector.broadcast %cst_159 : f32 to vector<8x1xf32>
    %315 = arith.divf %313, %314 : vector<8x1xf32>
    %316 = vector.broadcast %308 : vector<8x1xf32> to vector<8x32xf32>
    %317 = arith.subf %302, %316 : vector<8x32xf32>
    %cst_160 = arith.constant 9.99999974E-6 : f32
    %318 = vector.broadcast %cst_160 : f32 to vector<8x1xf32>
    %319 = arith.addf %315, %318 : vector<8x1xf32>
    %320 = math.rsqrt %319 : vector<8x1xf32>
    %321 = vector.broadcast %320 : vector<8x1xf32> to vector<8x32xf32>
    %322 = arith.mulf %317, %321 : vector<8x32xf32>
    %323 = vector.broadcast %303 : vector<1x32xf32> to vector<8x32xf32>
    %324 = arith.mulf %322, %323 : vector<8x32xf32>
    %325 = vector.broadcast %304 : vector<1x32xf32> to vector<8x32xf32>
    %326 = arith.addf %324, %325 : vector<8x32xf32>
    %c0_161 = arith.constant 0 : index
    %c0_162 = arith.constant 0 : index
    %327 = vector.load %arg3[%c0_161, %c0_162] : memref<1x32xf32, #tpu.memory_space<vmem>>, vector<1x32xf32>
    %c0_163 = arith.constant 0 : index
    %c0_164 = arith.constant 0 : index
    %328 = vector.load %arg4[%c0_163, %c0_164] : memref<1x32xf32, #tpu.memory_space<vmem>>, vector<1x32xf32>
    %cst_165 = arith.constant dense<0.000000e+00> : vector<8xf32>
    %329 = vector.multi_reduction <add>, %326, %cst_165 [1] : vector<8x32xf32> to vector<8xf32>
    %330 = vector.shape_cast %329 : vector<8xf32> to vector<8x1xf32>
    %cst_166 = arith.constant 3.200000e+01 : f32
    %331 = vector.broadcast %cst_166 : f32 to vector<8x1xf32>
    %332 = arith.divf %330, %331 : vector<8x1xf32>
    %333 = vector.broadcast %332 : vector<8x1xf32> to vector<8x32xf32>
    %334 = arith.subf %326, %333 : vector<8x32xf32>
    %335 = arith.mulf %334, %334 : vector<8x32xf32>
    %cst_167 = arith.constant dense<0.000000e+00> : vector<8xf32>
    %336 = vector.multi_reduction <add>, %335, %cst_167 [1] : vector<8x32xf32> to vector<8xf32>
    %337 = vector.shape_cast %336 : vector<8xf32> to vector<8x1xf32>
    %cst_168 = arith.constant 3.200000e+01 : f32
    %338 = vector.broadcast %cst_168 : f32 to vector<8x1xf32>
    %339 = arith.divf %337, %338 : vector<8x1xf32>
    %340 = vector.broadcast %332 : vector<8x1xf32> to vector<8x32xf32>
    %341 = arith.subf %326, %340 : vector<8x32xf32>
    %cst_169 = arith.constant 9.99999974E-6 : f32
    %342 = vector.broadcast %cst_169 : f32 to vector<8x1xf32>
    %343 = arith.addf %339, %342 : vector<8x1xf32>
    %344 = math.rsqrt %343 : vector<8x1xf32>
    %345 = vector.broadcast %344 : vector<8x1xf32> to vector<8x32xf32>
    %346 = arith.mulf %341, %345 : vector<8x32xf32>
    %347 = vector.broadcast %327 : vector<1x32xf32> to vector<8x32xf32>
    %348 = arith.mulf %346, %347 : vector<8x32xf32>
    %349 = vector.broadcast %328 : vector<1x32xf32> to vector<8x32xf32>
    %350 = arith.addf %348, %349 : vector<8x32xf32>
    %c0_170 = arith.constant 0 : index
    %c0_171 = arith.constant 0 : index
    %351 = vector.load %arg5[%c0_170, %c0_171] : memref<32x4xf32, #tpu.memory_space<vmem>>, vector<32x4xf32>
    %cst_172 = arith.constant dense<0.000000e+00> : vector<8x4xf32>
    %352 = tpu.matmul %350, %351, %cst_172 {dimension_numbers = #tpu.dot_dimension_numbers<[1], [0], [0], [1], [0, 0, 1, 1], [], []>} : vector<8x32xf32>, vector<32x4xf32>, vector<8x4xf32> -> vector<8x4xf32>
    %c0_173 = arith.constant 0 : index
    %c0_174 = arith.constant 0 : index
    %353 = vector.load %arg6[%c0_173, %c0_174] : memref<1x4xf32, #tpu.memory_space<vmem>>, vector<1x4xf32>
    %354 = vector.broadcast %353 : vector<1x4xf32> to vector<8x4xf32>
    %355 = arith.addf %352, %354 : vector<8x4xf32>
    %356 = arith.negf %355 : vector<8x4xf32>
    %357 = math.exp %356 : vector<8x4xf32>
    %cst_175 = arith.constant 1.000000e+00 : f32
    %358 = vector.broadcast %cst_175 : f32 to vector<8x4xf32>
    %359 = arith.addf %358, %357 : vector<8x4xf32>
    %360 = arith.divf %358, %359 : vector<8x4xf32>
    %361 = arith.mulf %355, %360 : vector<8x4xf32>
    %c0_176 = arith.constant 0 : index
    %c0_177 = arith.constant 0 : index
    %362 = vector.load %arg7[%c0_176, %c0_177] : memref<4x32xf32, #tpu.memory_space<vmem>>, vector<4x32xf32>
    %cst_178 = arith.constant dense<0.000000e+00> : vector<8x32xf32>
    %363 = tpu.matmul %361, %362, %cst_178 {dimension_numbers = #tpu.dot_dimension_numbers<[1], [0], [0], [1], [0, 0, 1, 1], [], []>} : vector<8x4xf32>, vector<4x32xf32>, vector<8x32xf32> -> vector<8x32xf32>
    %c0_179 = arith.constant 0 : index
    %c0_180 = arith.constant 0 : index
    %364 = vector.load %arg8[%c0_179, %c0_180] : memref<1x32xf32, #tpu.memory_space<vmem>>, vector<1x32xf32>
    %365 = vector.broadcast %364 : vector<1x32xf32> to vector<8x32xf32>
    %366 = arith.addf %363, %365 : vector<8x32xf32>
    %cst_181 = arith.constant 5.000000e-01 : f32
    %367 = vector.broadcast %cst_181 : f32 to vector<8x32xf32>
    %368 = arith.mulf %367, %366 : vector<8x32xf32>
    %369 = arith.addf %326, %368 : vector<8x32xf32>
    %c0_182 = arith.constant 0 : index
    %c0_183 = arith.constant 0 : index
    %370 = vector.load %arg9[%c0_182, %c0_183] : memref<1x32xf32, #tpu.memory_space<vmem>>, vector<1x32xf32>
    %c0_184 = arith.constant 0 : index
    %c0_185 = arith.constant 0 : index
    %371 = vector.load %arg10[%c0_184, %c0_185] : memref<1x32xf32, #tpu.memory_space<vmem>>, vector<1x32xf32>
    %cst_186 = arith.constant dense<0.000000e+00> : vector<8xf32>
    %372 = vector.multi_reduction <add>, %369, %cst_186 [1] : vector<8x32xf32> to vector<8xf32>
    %373 = vector.shape_cast %372 : vector<8xf32> to vector<8x1xf32>
    %cst_187 = arith.constant 3.200000e+01 : f32
    %374 = vector.broadcast %cst_187 : f32 to vector<8x1xf32>
    %375 = arith.divf %373, %374 : vector<8x1xf32>
    %376 = vector.broadcast %375 : vector<8x1xf32> to vector<8x32xf32>
    %377 = arith.subf %369, %376 : vector<8x32xf32>
    %378 = arith.mulf %377, %377 : vector<8x32xf32>
    %cst_188 = arith.constant dense<0.000000e+00> : vector<8xf32>
    %379 = vector.multi_reduction <add>, %378, %cst_188 [1] : vector<8x32xf32> to vector<8xf32>
    %380 = vector.shape_cast %379 : vector<8xf32> to vector<8x1xf32>
    %cst_189 = arith.constant 3.200000e+01 : f32
    %381 = vector.broadcast %cst_189 : f32 to vector<8x1xf32>
    %382 = arith.divf %380, %381 : vector<8x1xf32>
    %383 = vector.broadcast %375 : vector<8x1xf32> to vector<8x32xf32>
    %384 = arith.subf %369, %383 : vector<8x32xf32>
    %cst_190 = arith.constant 9.99999974E-6 : f32
    %385 = vector.broadcast %cst_190 : f32 to vector<8x1xf32>
    %386 = arith.addf %382, %385 : vector<8x1xf32>
    %387 = math.rsqrt %386 : vector<8x1xf32>
    %388 = vector.broadcast %387 : vector<8x1xf32> to vector<8x32xf32>
    %389 = arith.mulf %384, %388 : vector<8x32xf32>
    %390 = vector.broadcast %370 : vector<1x32xf32> to vector<8x32xf32>
    %391 = arith.mulf %389, %390 : vector<8x32xf32>
    %392 = vector.broadcast %371 : vector<1x32xf32> to vector<8x32xf32>
    %393 = arith.addf %391, %392 : vector<8x32xf32>
    %394 = arith.addf %393, %2 : vector<8x32xf32>
    %c0_191 = arith.constant 0 : index
    %c0_192 = arith.constant 0 : index
    %395 = vector.load %arg11[%c0_191, %c0_192] : memref<32x32xf32, #tpu.memory_space<vmem>>, vector<32x32xf32>
    %c0_193 = arith.constant 0 : index
    %c0_194 = arith.constant 0 : index
    %396 = vector.load %arg12[%c0_193, %c0_194] : memref<32x32xf32, #tpu.memory_space<vmem>>, vector<32x32xf32>
    %c0_195 = arith.constant 0 : index
    %c0_196 = arith.constant 0 : index
    %397 = vector.load %arg13[%c0_195, %c0_196] : memref<32x32xf32, #tpu.memory_space<vmem>>, vector<32x32xf32>
    %c0_197 = arith.constant 0 : index
    %c0_198 = arith.constant 0 : index
    %398 = vector.load %arg14[%c0_197, %c0_198] : memref<1x32xf32, #tpu.memory_space<vmem>>, vector<1x32xf32>
    %c0_199 = arith.constant 0 : index
    %c0_200 = arith.constant 0 : index
    %399 = vector.load %arg15[%c0_199, %c0_200] : memref<1x32xf32, #tpu.memory_space<vmem>>, vector<1x32xf32>
    %c0_201 = arith.constant 0 : index
    %c0_202 = arith.constant 0 : index
    %400 = vector.load %arg16[%c0_201, %c0_202] : memref<1x32xf32, #tpu.memory_space<vmem>>, vector<1x32xf32>
    %c0_203 = arith.constant 0 : index
    %c0_204 = arith.constant 0 : index
    %401 = vector.load %arg17[%c0_203, %c0_204] : memref<32x32xf32, #tpu.memory_space<vmem>>, vector<32x32xf32>
    %c0_205 = arith.constant 0 : index
    %c0_206 = arith.constant 0 : index
    %402 = vector.load %arg18[%c0_205, %c0_206] : memref<1x32xf32, #tpu.memory_space<vmem>>, vector<1x32xf32>
    %cst_207 = arith.constant dense<0.000000e+00> : vector<8x32xf32>
    %403 = tpu.matmul %394, %395, %cst_207 {dimension_numbers = #tpu.dot_dimension_numbers<[1], [0], [0], [1], [0, 0, 1, 1], [], []>} : vector<8x32xf32>, vector<32x32xf32>, vector<8x32xf32> -> vector<8x32xf32>
    %404 = vector.broadcast %398 : vector<1x32xf32> to vector<8x32xf32>
    %405 = arith.addf %403, %404 : vector<8x32xf32>
    %cst_208 = arith.constant dense<0.000000e+00> : vector<8x32xf32>
    %406 = tpu.matmul %394, %396, %cst_208 {dimension_numbers = #tpu.dot_dimension_numbers<[1], [0], [0], [1], [0, 0, 1, 1], [], []>} : vector<8x32xf32>, vector<32x32xf32>, vector<8x32xf32> -> vector<8x32xf32>
    %407 = vector.broadcast %399 : vector<1x32xf32> to vector<8x32xf32>
    %408 = arith.addf %406, %407 : vector<8x32xf32>
    %cst_209 = arith.constant dense<0.000000e+00> : vector<8x32xf32>
    %409 = tpu.matmul %394, %397, %cst_209 {dimension_numbers = #tpu.dot_dimension_numbers<[1], [0], [0], [1], [0, 0, 1, 1], [], []>} : vector<8x32xf32>, vector<32x32xf32>, vector<8x32xf32> -> vector<8x32xf32>
    %410 = vector.broadcast %400 : vector<1x32xf32> to vector<8x32xf32>
    %411 = arith.addf %409, %410 : vector<8x32xf32>
    %cst_210 = arith.constant dense<0.000000e+00> : vector<8x8xf32>
    %412 = tpu.matmul %405, %408, %cst_210 {dimension_numbers = #tpu.dot_dimension_numbers<[1], [1], [0], [0], [0, 0, 1, 0], [], []>} : vector<8x32xf32>, vector<8x32xf32>, vector<8x8xf32> -> vector<8x8xf32>
    %cst_211 = arith.constant 0.176776692 : f32
    %413 = vector.broadcast %cst_211 : f32 to vector<8x8xf32>
    %414 = arith.mulf %412, %413 : vector<8x8xf32>
    %cst_212 = arith.constant dense<0xFF800000> : vector<8xf32>
    %415 = vector.multi_reduction <maximumf>, %414, %cst_212 [1] : vector<8x8xf32> to vector<8xf32>
    %416 = vector.shape_cast %415 : vector<8xf32> to vector<8x1xf32>
    %417 = vector.broadcast %416 : vector<8x1xf32> to vector<8x8xf32>
    %418 = arith.subf %414, %417 : vector<8x8xf32>
    %419 = math.exp %418 : vector<8x8xf32>
    %cst_213 = arith.constant dense<0.000000e+00> : vector<8xf32>
    %420 = vector.multi_reduction <add>, %419, %cst_213 [1] : vector<8x8xf32> to vector<8xf32>
    %421 = vector.shape_cast %420 : vector<8xf32> to vector<8x1xf32>
    %422 = tpu.reciprocal %421 {approx = true} : vector<8x1xf32> -> vector<8x1xf32>
    %423 = vector.broadcast %422 : vector<8x1xf32> to vector<8x8xf32>
    %424 = arith.mulf %419, %423 : vector<8x8xf32>
    %cst_214 = arith.constant dense<0.000000e+00> : vector<8x32xf32>
    %425 = tpu.matmul %424, %411, %cst_214 {dimension_numbers = #tpu.dot_dimension_numbers<[1], [0], [0], [1], [0, 0, 1, 1], [], []>} : vector<8x8xf32>, vector<8x32xf32>, vector<8x32xf32> -> vector<8x32xf32>
    %cst_215 = arith.constant dense<0.000000e+00> : vector<8x32xf32>
    %426 = tpu.matmul %425, %401, %cst_215 {dimension_numbers = #tpu.dot_dimension_numbers<[1], [0], [0], [1], [0, 0, 1, 1], [], []>} : vector<8x32xf32>, vector<32x32xf32>, vector<8x32xf32> -> vector<8x32xf32>
    %427 = vector.broadcast %402 : vector<1x32xf32> to vector<8x32xf32>
    %428 = arith.addf %426, %427 : vector<8x32xf32>
    %429 = arith.addf %369, %428 : vector<8x32xf32>
    %c0_216 = arith.constant 0 : index
    %c0_217 = arith.constant 0 : index
    %430 = vector.load %arg19[%c0_216, %c0_217] : memref<1x32xf32, #tpu.memory_space<vmem>>, vector<1x32xf32>
    %c0_218 = arith.constant 0 : index
    %c0_219 = arith.constant 0 : index
    %431 = vector.load %arg20[%c0_218, %c0_219] : memref<1x32xf32, #tpu.memory_space<vmem>>, vector<1x32xf32>
    %cst_220 = arith.constant dense<0.000000e+00> : vector<8xf32>
    %432 = vector.multi_reduction <add>, %429, %cst_220 [1] : vector<8x32xf32> to vector<8xf32>
    %433 = vector.shape_cast %432 : vector<8xf32> to vector<8x1xf32>
    %cst_221 = arith.constant 3.200000e+01 : f32
    %434 = vector.broadcast %cst_221 : f32 to vector<8x1xf32>
    %435 = arith.divf %433, %434 : vector<8x1xf32>
    %436 = vector.broadcast %435 : vector<8x1xf32> to vector<8x32xf32>
    %437 = arith.subf %429, %436 : vector<8x32xf32>
    %438 = arith.mulf %437, %437 : vector<8x32xf32>
    %cst_222 = arith.constant dense<0.000000e+00> : vector<8xf32>
    %439 = vector.multi_reduction <add>, %438, %cst_222 [1] : vector<8x32xf32> to vector<8xf32>
    %440 = vector.shape_cast %439 : vector<8xf32> to vector<8x1xf32>
    %cst_223 = arith.constant 3.200000e+01 : f32
    %441 = vector.broadcast %cst_223 : f32 to vector<8x1xf32>
    %442 = arith.divf %440, %441 : vector<8x1xf32>
    %443 = vector.broadcast %435 : vector<8x1xf32> to vector<8x32xf32>
    %444 = arith.subf %429, %443 : vector<8x32xf32>
    %cst_224 = arith.constant 9.99999974E-6 : f32
    %445 = vector.broadcast %cst_224 : f32 to vector<8x1xf32>
    %446 = arith.addf %442, %445 : vector<8x1xf32>
    %447 = math.rsqrt %446 : vector<8x1xf32>
    %448 = vector.broadcast %447 : vector<8x1xf32> to vector<8x32xf32>
    %449 = arith.mulf %444, %448 : vector<8x32xf32>
    %450 = vector.broadcast %430 : vector<1x32xf32> to vector<8x32xf32>
    %451 = arith.mulf %449, %450 : vector<8x32xf32>
    %452 = vector.broadcast %431 : vector<1x32xf32> to vector<8x32xf32>
    %453 = arith.addf %451, %452 : vector<8x32xf32>
    %454 = arith.addf %453, %2 : vector<8x32xf32>
    %455 = tpu.transpose %454, [1, 0] : vector<8x32xf32> -> vector<32x8xf32>
    %c0_225 = arith.constant 0 : index
    %c0_226 = arith.constant 0 : index
    %456 = vector.load %arg21[%c0_225, %c0_226] : memref<8x8xf32, #tpu.memory_space<vmem>>, vector<8x8xf32>
    %c0_227 = arith.constant 0 : index
    %c0_228 = arith.constant 0 : index
    %457 = vector.load %arg22[%c0_227, %c0_228] : memref<8x8xf32, #tpu.memory_space<vmem>>, vector<8x8xf32>
    %c0_229 = arith.constant 0 : index
    %c0_230 = arith.constant 0 : index
    %458 = vector.load %arg23[%c0_229, %c0_230] : memref<8x8xf32, #tpu.memory_space<vmem>>, vector<8x8xf32>
    %c0_231 = arith.constant 0 : index
    %c0_232 = arith.constant 0 : index
    %459 = vector.load %arg24[%c0_231, %c0_232] : memref<1x8xf32, #tpu.memory_space<vmem>>, vector<1x8xf32>
    %c0_233 = arith.constant 0 : index
    %c0_234 = arith.constant 0 : index
    %460 = vector.load %arg25[%c0_233, %c0_234] : memref<1x8xf32, #tpu.memory_space<vmem>>, vector<1x8xf32>
    %c0_235 = arith.constant 0 : index
    %c0_236 = arith.constant 0 : index
    %461 = vector.load %arg26[%c0_235, %c0_236] : memref<1x8xf32, #tpu.memory_space<vmem>>, vector<1x8xf32>
    %c0_237 = arith.constant 0 : index
    %c0_238 = arith.constant 0 : index
    %462 = vector.load %arg27[%c0_237, %c0_238] : memref<8x8xf32, #tpu.memory_space<vmem>>, vector<8x8xf32>
    %c0_239 = arith.constant 0 : index
    %c0_240 = arith.constant 0 : index
    %463 = vector.load %arg28[%c0_239, %c0_240] : memref<1x8xf32, #tpu.memory_space<vmem>>, vector<1x8xf32>
    %cst_241 = arith.constant dense<0.000000e+00> : vector<32x8xf32>
    %464 = tpu.matmul %455, %456, %cst_241 {dimension_numbers = #tpu.dot_dimension_numbers<[1], [0], [0], [1], [0, 0, 1, 1], [], []>} : vector<32x8xf32>, vector<8x8xf32>, vector<32x8xf32> -> vector<32x8xf32>
    %465 = vector.broadcast %459 : vector<1x8xf32> to vector<32x8xf32>
    %466 = arith.addf %464, %465 : vector<32x8xf32>
    %cst_242 = arith.constant dense<0.000000e+00> : vector<32x8xf32>
    %467 = tpu.matmul %455, %457, %cst_242 {dimension_numbers = #tpu.dot_dimension_numbers<[1], [0], [0], [1], [0, 0, 1, 1], [], []>} : vector<32x8xf32>, vector<8x8xf32>, vector<32x8xf32> -> vector<32x8xf32>
    %468 = vector.broadcast %460 : vector<1x8xf32> to vector<32x8xf32>
    %469 = arith.addf %467, %468 : vector<32x8xf32>
    %cst_243 = arith.constant dense<0.000000e+00> : vector<32x8xf32>
    %470 = tpu.matmul %455, %458, %cst_243 {dimension_numbers = #tpu.dot_dimension_numbers<[1], [0], [0], [1], [0, 0, 1, 1], [], []>} : vector<32x8xf32>, vector<8x8xf32>, vector<32x8xf32> -> vector<32x8xf32>
    %471 = vector.broadcast %461 : vector<1x8xf32> to vector<32x8xf32>
    %472 = arith.addf %470, %471 : vector<32x8xf32>
    %cst_244 = arith.constant dense<0.000000e+00> : vector<32x32xf32>
    %473 = tpu.matmul %466, %469, %cst_244 {dimension_numbers = #tpu.dot_dimension_numbers<[1], [1], [0], [0], [0, 0, 1, 0], [], []>} : vector<32x8xf32>, vector<32x8xf32>, vector<32x32xf32> -> vector<32x32xf32>
    %cst_245 = arith.constant 0.353553385 : f32
    %474 = vector.broadcast %cst_245 : f32 to vector<32x32xf32>
    %475 = arith.mulf %473, %474 : vector<32x32xf32>
    %cst_246 = arith.constant dense<0xFF800000> : vector<32xf32>
    %476 = vector.multi_reduction <maximumf>, %475, %cst_246 [1] : vector<32x32xf32> to vector<32xf32>
    %477 = vector.shape_cast %476 : vector<32xf32> to vector<32x1xf32>
    %478 = vector.broadcast %477 : vector<32x1xf32> to vector<32x32xf32>
    %479 = arith.subf %475, %478 : vector<32x32xf32>
    %480 = math.exp %479 : vector<32x32xf32>
    %cst_247 = arith.constant dense<0.000000e+00> : vector<32xf32>
    %481 = vector.multi_reduction <add>, %480, %cst_247 [1] : vector<32x32xf32> to vector<32xf32>
    %482 = vector.shape_cast %481 : vector<32xf32> to vector<32x1xf32>
    %483 = tpu.reciprocal %482 {approx = true} : vector<32x1xf32> -> vector<32x1xf32>
    %484 = vector.broadcast %483 : vector<32x1xf32> to vector<32x32xf32>
    %485 = arith.mulf %480, %484 : vector<32x32xf32>
    %cst_248 = arith.constant dense<0.000000e+00> : vector<32x8xf32>
    %486 = tpu.matmul %485, %472, %cst_248 {dimension_numbers = #tpu.dot_dimension_numbers<[1], [0], [0], [1], [0, 0, 1, 1], [], []>} : vector<32x32xf32>, vector<32x8xf32>, vector<32x8xf32> -> vector<32x8xf32>
    %cst_249 = arith.constant dense<0.000000e+00> : vector<32x8xf32>
    %487 = tpu.matmul %486, %462, %cst_249 {dimension_numbers = #tpu.dot_dimension_numbers<[1], [0], [0], [1], [0, 0, 1, 1], [], []>} : vector<32x8xf32>, vector<8x8xf32>, vector<32x8xf32> -> vector<32x8xf32>
    %488 = vector.broadcast %463 : vector<1x8xf32> to vector<32x8xf32>
    %489 = arith.addf %487, %488 : vector<32x8xf32>
    %490 = tpu.transpose %489, [1, 0] : vector<32x8xf32> -> vector<8x32xf32>
    %491 = arith.addf %429, %490 : vector<8x32xf32>
    %c0_250 = arith.constant 0 : index
    %c0_251 = arith.constant 0 : index
    %492 = vector.load %arg29[%c0_250, %c0_251] : memref<1x32xf32, #tpu.memory_space<vmem>>, vector<1x32xf32>
    %c0_252 = arith.constant 0 : index
    %c0_253 = arith.constant 0 : index
    %493 = vector.load %arg30[%c0_252, %c0_253] : memref<1x32xf32, #tpu.memory_space<vmem>>, vector<1x32xf32>
    %cst_254 = arith.constant dense<0.000000e+00> : vector<8xf32>
    %494 = vector.multi_reduction <add>, %491, %cst_254 [1] : vector<8x32xf32> to vector<8xf32>
    %495 = vector.shape_cast %494 : vector<8xf32> to vector<8x1xf32>
    %cst_255 = arith.constant 3.200000e+01 : f32
    %496 = vector.broadcast %cst_255 : f32 to vector<8x1xf32>
    %497 = arith.divf %495, %496 : vector<8x1xf32>
    %498 = vector.broadcast %497 : vector<8x1xf32> to vector<8x32xf32>
    %499 = arith.subf %491, %498 : vector<8x32xf32>
    %500 = arith.mulf %499, %499 : vector<8x32xf32>
    %cst_256 = arith.constant dense<0.000000e+00> : vector<8xf32>
    %501 = vector.multi_reduction <add>, %500, %cst_256 [1] : vector<8x32xf32> to vector<8xf32>
    %502 = vector.shape_cast %501 : vector<8xf32> to vector<8x1xf32>
    %cst_257 = arith.constant 3.200000e+01 : f32
    %503 = vector.broadcast %cst_257 : f32 to vector<8x1xf32>
    %504 = arith.divf %502, %503 : vector<8x1xf32>
    %505 = vector.broadcast %497 : vector<8x1xf32> to vector<8x32xf32>
    %506 = arith.subf %491, %505 : vector<8x32xf32>
    %cst_258 = arith.constant 9.99999974E-6 : f32
    %507 = vector.broadcast %cst_258 : f32 to vector<8x1xf32>
    %508 = arith.addf %504, %507 : vector<8x1xf32>
    %509 = math.rsqrt %508 : vector<8x1xf32>
    %510 = vector.broadcast %509 : vector<8x1xf32> to vector<8x32xf32>
    %511 = arith.mulf %506, %510 : vector<8x32xf32>
    %512 = vector.broadcast %492 : vector<1x32xf32> to vector<8x32xf32>
    %513 = arith.mulf %511, %512 : vector<8x32xf32>
    %514 = vector.broadcast %493 : vector<1x32xf32> to vector<8x32xf32>
    %515 = arith.addf %513, %514 : vector<8x32xf32>
    %c0_259 = arith.constant 0 : index
    %c0_260 = arith.constant 0 : index
    %516 = vector.load %arg31[%c0_259, %c0_260] : memref<32x32xf32, #tpu.memory_space<vmem>>, vector<32x32xf32>
    %cst_261 = arith.constant dense<0.000000e+00> : vector<8x32xf32>
    %517 = tpu.matmul %515, %516, %cst_261 {dimension_numbers = #tpu.dot_dimension_numbers<[1], [0], [0], [1], [0, 0, 1, 1], [], []>} : vector<8x32xf32>, vector<32x32xf32>, vector<8x32xf32> -> vector<8x32xf32>
    %c0_262 = arith.constant 0 : index
    %c0_263 = arith.constant 0 : index
    %518 = vector.load %arg32[%c0_262, %c0_263] : memref<1x32xf32, #tpu.memory_space<vmem>>, vector<1x32xf32>
    %519 = vector.broadcast %518 : vector<1x32xf32> to vector<8x32xf32>
    %520 = arith.addf %517, %519 : vector<8x32xf32>
    %c0_264 = arith.constant 0 : index
    %c0_265 = arith.constant 0 : index
    %521 = vector.load %arg33[%c0_264, %c0_265] : memref<32x32xf32, #tpu.memory_space<vmem>>, vector<32x32xf32>
    %cst_266 = arith.constant dense<0.000000e+00> : vector<8x32xf32>
    %522 = tpu.matmul %515, %521, %cst_266 {dimension_numbers = #tpu.dot_dimension_numbers<[1], [0], [0], [1], [0, 0, 1, 1], [], []>} : vector<8x32xf32>, vector<32x32xf32>, vector<8x32xf32> -> vector<8x32xf32>
    %c0_267 = arith.constant 0 : index
    %c0_268 = arith.constant 0 : index
    %523 = vector.load %arg34[%c0_267, %c0_268] : memref<1x32xf32, #tpu.memory_space<vmem>>, vector<1x32xf32>
    %524 = vector.broadcast %523 : vector<1x32xf32> to vector<8x32xf32>
    %525 = arith.addf %522, %524 : vector<8x32xf32>
    %526 = arith.negf %525 : vector<8x32xf32>
    %527 = math.exp %526 : vector<8x32xf32>
    %cst_269 = arith.constant 1.000000e+00 : f32
    %528 = vector.broadcast %cst_269 : f32 to vector<8x32xf32>
    %529 = arith.addf %528, %527 : vector<8x32xf32>
    %530 = arith.divf %528, %529 : vector<8x32xf32>
    %531 = arith.mulf %520, %530 : vector<8x32xf32>
    %c0_270 = arith.constant 0 : index
    %c0_271 = arith.constant 0 : index
    %532 = vector.load %arg35[%c0_270, %c0_271] : memref<3x32xf32, #tpu.memory_space<vmem>>, vector<3x32xf32>
    %cst_272 = arith.constant 0.000000e+00 : f32
    %533 = vector.broadcast %cst_272 : f32 to vector<8x32xf32>
    %c1_i32_273 = arith.constant 1 : i32
    %534 = tpu.dynamic_rotate %531 by %c1_i32_273 dim 0 : vector<8x32xf32>, i32 -> vector<8x32xf32>
    %c1_i32_274 = arith.constant 1 : i32
    %535 = vector.broadcast %c1_i32_274 : i32 to vector<8x32xi32>
    %536 = arith.cmpi sge, %3, %535 : vector<8x32xi32>
    %c9_i32_275 = arith.constant 9 : i32
    %537 = vector.broadcast %c9_i32_275 : i32 to vector<8x32xi32>
    %538 = arith.cmpi slt, %3, %537 : vector<8x32xi32>
    %539 = arith.andi %536, %538 : vector<8x32xi1>
    %cst_276 = arith.constant 0.000000e+00 : f32
    %540 = vector.broadcast %cst_276 : f32 to vector<8x32xf32>
    %541 = arith.select %539, %534, %540 : vector<8x32xi1>, vector<8x32xf32>
    %542 = vector.extract_strided_slice %532 {offsets = [0, 0], sizes = [1, 32], strides = [1, 1]} : vector<3x32xf32> to vector<1x32xf32>
    %543 = vector.broadcast %542 : vector<1x32xf32> to vector<8x32xf32>
    %544 = arith.mulf %543, %541 : vector<8x32xf32>
    %545 = arith.addf %533, %544 : vector<8x32xf32>
    %546 = vector.extract_strided_slice %532 {offsets = [1, 0], sizes = [1, 32], strides = [1, 1]} : vector<3x32xf32> to vector<1x32xf32>
    %547 = vector.broadcast %546 : vector<1x32xf32> to vector<8x32xf32>
    %548 = arith.mulf %547, %531 : vector<8x32xf32>
    %549 = arith.addf %545, %548 : vector<8x32xf32>
    %c7_i32_277 = arith.constant 7 : i32
    %550 = tpu.dynamic_rotate %531 by %c7_i32_277 dim 0 : vector<8x32xf32>, i32 -> vector<8x32xf32>
    %c-1_i32_278 = arith.constant -1 : i32
    %551 = vector.broadcast %c-1_i32_278 : i32 to vector<8x32xi32>
    %552 = arith.cmpi sge, %3, %551 : vector<8x32xi32>
    %c7_i32_279 = arith.constant 7 : i32
    %553 = vector.broadcast %c7_i32_279 : i32 to vector<8x32xi32>
    %554 = arith.cmpi slt, %3, %553 : vector<8x32xi32>
    %555 = arith.andi %552, %554 : vector<8x32xi1>
    %cst_280 = arith.constant 0.000000e+00 : f32
    %556 = vector.broadcast %cst_280 : f32 to vector<8x32xf32>
    %557 = arith.select %555, %550, %556 : vector<8x32xi1>, vector<8x32xf32>
    %558 = vector.extract_strided_slice %532 {offsets = [2, 0], sizes = [1, 32], strides = [1, 1]} : vector<3x32xf32> to vector<1x32xf32>
    %559 = vector.broadcast %558 : vector<1x32xf32> to vector<8x32xf32>
    %560 = arith.mulf %559, %557 : vector<8x32xf32>
    %561 = arith.addf %549, %560 : vector<8x32xf32>
    %c0_281 = arith.constant 0 : index
    %c0_282 = arith.constant 0 : index
    %562 = vector.load %arg36[%c0_281, %c0_282] : memref<1x32xf32, #tpu.memory_space<vmem>>, vector<1x32xf32>
    %563 = vector.broadcast %562 : vector<1x32xf32> to vector<8x32xf32>
    %564 = arith.addf %561, %563 : vector<8x32xf32>
    %c0_283 = arith.constant 0 : index
    %c0_284 = arith.constant 0 : index
    %565 = vector.load %arg37[%c0_283, %c0_284] : memref<1x32xf32, #tpu.memory_space<vmem>>, vector<1x32xf32>
    %566 = vector.broadcast %565 : vector<1x32xf32> to vector<8x32xf32>
    %567 = arith.mulf %564, %566 : vector<8x32xf32>
    %c0_285 = arith.constant 0 : index
    %c0_286 = arith.constant 0 : index
    %568 = vector.load %arg38[%c0_285, %c0_286] : memref<1x32xf32, #tpu.memory_space<vmem>>, vector<1x32xf32>
    %569 = vector.broadcast %568 : vector<1x32xf32> to vector<8x32xf32>
    %570 = arith.addf %567, %569 : vector<8x32xf32>
    %571 = arith.negf %570 : vector<8x32xf32>
    %572 = math.exp %571 : vector<8x32xf32>
    %cst_287 = arith.constant 1.000000e+00 : f32
    %573 = vector.broadcast %cst_287 : f32 to vector<8x32xf32>
    %574 = arith.addf %573, %572 : vector<8x32xf32>
    %575 = arith.divf %573, %574 : vector<8x32xf32>
    %576 = arith.mulf %570, %575 : vector<8x32xf32>
    %c0_288 = arith.constant 0 : index
    %c0_289 = arith.constant 0 : index
    %577 = vector.load %arg39[%c0_288, %c0_289] : memref<32x32xf32, #tpu.memory_space<vmem>>, vector<32x32xf32>
    %cst_290 = arith.constant dense<0.000000e+00> : vector<8x32xf32>
    %578 = tpu.matmul %576, %577, %cst_290 {dimension_numbers = #tpu.dot_dimension_numbers<[1], [0], [0], [1], [0, 0, 1, 1], [], []>} : vector<8x32xf32>, vector<32x32xf32>, vector<8x32xf32> -> vector<8x32xf32>
    %c0_291 = arith.constant 0 : index
    %c0_292 = arith.constant 0 : index
    %579 = vector.load %arg40[%c0_291, %c0_292] : memref<1x32xf32, #tpu.memory_space<vmem>>, vector<1x32xf32>
    %580 = vector.broadcast %579 : vector<1x32xf32> to vector<8x32xf32>
    %581 = arith.addf %578, %580 : vector<8x32xf32>
    %582 = arith.addf %491, %581 : vector<8x32xf32>
    %c0_293 = arith.constant 0 : index
    %c0_294 = arith.constant 0 : index
    %583 = vector.load %arg3[%c0_293, %c0_294] : memref<1x32xf32, #tpu.memory_space<vmem>>, vector<1x32xf32>
    %c0_295 = arith.constant 0 : index
    %c0_296 = arith.constant 0 : index
    %584 = vector.load %arg4[%c0_295, %c0_296] : memref<1x32xf32, #tpu.memory_space<vmem>>, vector<1x32xf32>
    %cst_297 = arith.constant dense<0.000000e+00> : vector<8xf32>
    %585 = vector.multi_reduction <add>, %582, %cst_297 [1] : vector<8x32xf32> to vector<8xf32>
    %586 = vector.shape_cast %585 : vector<8xf32> to vector<8x1xf32>
    %cst_298 = arith.constant 3.200000e+01 : f32
    %587 = vector.broadcast %cst_298 : f32 to vector<8x1xf32>
    %588 = arith.divf %586, %587 : vector<8x1xf32>
    %589 = vector.broadcast %588 : vector<8x1xf32> to vector<8x32xf32>
    %590 = arith.subf %582, %589 : vector<8x32xf32>
    %591 = arith.mulf %590, %590 : vector<8x32xf32>
    %cst_299 = arith.constant dense<0.000000e+00> : vector<8xf32>
    %592 = vector.multi_reduction <add>, %591, %cst_299 [1] : vector<8x32xf32> to vector<8xf32>
    %593 = vector.shape_cast %592 : vector<8xf32> to vector<8x1xf32>
    %cst_300 = arith.constant 3.200000e+01 : f32
    %594 = vector.broadcast %cst_300 : f32 to vector<8x1xf32>
    %595 = arith.divf %593, %594 : vector<8x1xf32>
    %596 = vector.broadcast %588 : vector<8x1xf32> to vector<8x32xf32>
    %597 = arith.subf %582, %596 : vector<8x32xf32>
    %cst_301 = arith.constant 9.99999974E-6 : f32
    %598 = vector.broadcast %cst_301 : f32 to vector<8x1xf32>
    %599 = arith.addf %595, %598 : vector<8x1xf32>
    %600 = math.rsqrt %599 : vector<8x1xf32>
    %601 = vector.broadcast %600 : vector<8x1xf32> to vector<8x32xf32>
    %602 = arith.mulf %597, %601 : vector<8x32xf32>
    %603 = vector.broadcast %583 : vector<1x32xf32> to vector<8x32xf32>
    %604 = arith.mulf %602, %603 : vector<8x32xf32>
    %605 = vector.broadcast %584 : vector<1x32xf32> to vector<8x32xf32>
    %606 = arith.addf %604, %605 : vector<8x32xf32>
    %c0_302 = arith.constant 0 : index
    %c0_303 = arith.constant 0 : index
    %607 = vector.load %arg5[%c0_302, %c0_303] : memref<32x4xf32, #tpu.memory_space<vmem>>, vector<32x4xf32>
    %cst_304 = arith.constant dense<0.000000e+00> : vector<8x4xf32>
    %608 = tpu.matmul %606, %607, %cst_304 {dimension_numbers = #tpu.dot_dimension_numbers<[1], [0], [0], [1], [0, 0, 1, 1], [], []>} : vector<8x32xf32>, vector<32x4xf32>, vector<8x4xf32> -> vector<8x4xf32>
    %c0_305 = arith.constant 0 : index
    %c0_306 = arith.constant 0 : index
    %609 = vector.load %arg6[%c0_305, %c0_306] : memref<1x4xf32, #tpu.memory_space<vmem>>, vector<1x4xf32>
    %610 = vector.broadcast %609 : vector<1x4xf32> to vector<8x4xf32>
    %611 = arith.addf %608, %610 : vector<8x4xf32>
    %612 = arith.negf %611 : vector<8x4xf32>
    %613 = math.exp %612 : vector<8x4xf32>
    %cst_307 = arith.constant 1.000000e+00 : f32
    %614 = vector.broadcast %cst_307 : f32 to vector<8x4xf32>
    %615 = arith.addf %614, %613 : vector<8x4xf32>
    %616 = arith.divf %614, %615 : vector<8x4xf32>
    %617 = arith.mulf %611, %616 : vector<8x4xf32>
    %c0_308 = arith.constant 0 : index
    %c0_309 = arith.constant 0 : index
    %618 = vector.load %arg7[%c0_308, %c0_309] : memref<4x32xf32, #tpu.memory_space<vmem>>, vector<4x32xf32>
    %cst_310 = arith.constant dense<0.000000e+00> : vector<8x32xf32>
    %619 = tpu.matmul %617, %618, %cst_310 {dimension_numbers = #tpu.dot_dimension_numbers<[1], [0], [0], [1], [0, 0, 1, 1], [], []>} : vector<8x4xf32>, vector<4x32xf32>, vector<8x32xf32> -> vector<8x32xf32>
    %c0_311 = arith.constant 0 : index
    %c0_312 = arith.constant 0 : index
    %620 = vector.load %arg8[%c0_311, %c0_312] : memref<1x32xf32, #tpu.memory_space<vmem>>, vector<1x32xf32>
    %621 = vector.broadcast %620 : vector<1x32xf32> to vector<8x32xf32>
    %622 = arith.addf %619, %621 : vector<8x32xf32>
    %cst_313 = arith.constant 5.000000e-01 : f32
    %623 = vector.broadcast %cst_313 : f32 to vector<8x32xf32>
    %624 = arith.mulf %623, %622 : vector<8x32xf32>
    %625 = arith.addf %582, %624 : vector<8x32xf32>
    %c0_314 = arith.constant 0 : index
    %c0_315 = arith.constant 0 : index
    %626 = vector.load %arg41[%c0_314, %c0_315] : memref<1x32xf32, #tpu.memory_space<vmem>>, vector<1x32xf32>
    %c0_316 = arith.constant 0 : index
    %c0_317 = arith.constant 0 : index
    %627 = vector.load %arg42[%c0_316, %c0_317] : memref<1x32xf32, #tpu.memory_space<vmem>>, vector<1x32xf32>
    %cst_318 = arith.constant dense<0.000000e+00> : vector<8xf32>
    %628 = vector.multi_reduction <add>, %625, %cst_318 [1] : vector<8x32xf32> to vector<8xf32>
    %629 = vector.shape_cast %628 : vector<8xf32> to vector<8x1xf32>
    %cst_319 = arith.constant 3.200000e+01 : f32
    %630 = vector.broadcast %cst_319 : f32 to vector<8x1xf32>
    %631 = arith.divf %629, %630 : vector<8x1xf32>
    %632 = vector.broadcast %631 : vector<8x1xf32> to vector<8x32xf32>
    %633 = arith.subf %625, %632 : vector<8x32xf32>
    %634 = arith.mulf %633, %633 : vector<8x32xf32>
    %cst_320 = arith.constant dense<0.000000e+00> : vector<8xf32>
    %635 = vector.multi_reduction <add>, %634, %cst_320 [1] : vector<8x32xf32> to vector<8xf32>
    %636 = vector.shape_cast %635 : vector<8xf32> to vector<8x1xf32>
    %cst_321 = arith.constant 3.200000e+01 : f32
    %637 = vector.broadcast %cst_321 : f32 to vector<8x1xf32>
    %638 = arith.divf %636, %637 : vector<8x1xf32>
    %639 = vector.broadcast %631 : vector<8x1xf32> to vector<8x32xf32>
    %640 = arith.subf %625, %639 : vector<8x32xf32>
    %cst_322 = arith.constant 9.99999974E-6 : f32
    %641 = vector.broadcast %cst_322 : f32 to vector<8x1xf32>
    %642 = arith.addf %638, %641 : vector<8x1xf32>
    %643 = math.rsqrt %642 : vector<8x1xf32>
    %644 = vector.broadcast %643 : vector<8x1xf32> to vector<8x32xf32>
    %645 = arith.mulf %640, %644 : vector<8x32xf32>
    %646 = vector.broadcast %626 : vector<1x32xf32> to vector<8x32xf32>
    %647 = arith.mulf %645, %646 : vector<8x32xf32>
    %648 = vector.broadcast %627 : vector<1x32xf32> to vector<8x32xf32>
    %649 = arith.addf %647, %648 : vector<8x32xf32>
    %c0_323 = arith.constant 0 : index
    %c0_324 = arith.constant 0 : index
    %c0_325 = arith.constant 0 : index
    %650 = vector.load %arg43[%c0_323, %c0_324, %c0_325] : memref<1x8x32xf32, #tpu.memory_space<vmem>>, vector<1x8x32xf32>
    %651 = vector.shape_cast %650 : vector<1x8x32xf32> to vector<8x32xf32>
    %652 = vector.shape_cast %649 : vector<8x32xf32> to vector<1x8x32xf32>
    tpu.vector_store %arg43[%c0_323, %c0_324, %c0_325], %652 {strides = array<i32>} : memref<1x8x32xf32, #tpu.memory_space<vmem>>, vector<1x8x32xf32>,
    return
  }
  func.func @transform_0(%arg0: i32) -> (i32, i32, i32) {
    %c0_i32 = arith.constant 0 : i32
    %c0_i32_0 = arith.constant 0 : i32
    %c0_i32_1 = arith.constant 0 : i32
    return %arg0, %c0_i32, %c0_i32_0 : i32, i32, i32
  }
  func.func @transform_1(%arg0: i32) -> (i32, i32) {
    %c0_i32 = arith.constant 0 : i32
    %c0_i32_0 = arith.constant 0 : i32
    %c0_i32_1 = arith.constant 0 : i32
    return %c0_i32, %c0_i32_0 : i32, i32
  }
  func.func @transform_2(%arg0: i32) -> (i32, i32) {
    %c0_i32 = arith.constant 0 : i32
    %c0_i32_0 = arith.constant 0 : i32
    %c0_i32_1 = arith.constant 0 : i32
    return %c0_i32, %c0_i32_0 : i32, i32
  }
  func.func @transform_3(%arg0: i32) -> (i32, i32) {
    %c0_i32 = arith.constant 0 : i32
    %c0_i32_0 = arith.constant 0 : i32
    %c0_i32_1 = arith.constant 0 : i32
    return %c0_i32, %c0_i32_0 : i32, i32
  }
  func.func @transform_4(%arg0: i32) -> (i32, i32) {
    %c0_i32 = arith.constant 0 : i32
    %c0_i32_0 = arith.constant 0 : i32
    %c0_i32_1 = arith.constant 0 : i32
    return %c0_i32, %c0_i32_0 : i32, i32
  }
  func.func @transform_5(%arg0: i32) -> (i32, i32) {
    %c0_i32 = arith.constant 0 : i32
    %c0_i32_0 = arith.constant 0 : i32
    %c0_i32_1 = arith.constant 0 : i32
    return %c0_i32, %c0_i32_0 : i32, i32
  }
  func.func @transform_6(%arg0: i32) -> (i32, i32) {
    %c0_i32 = arith.constant 0 : i32
    %c0_i32_0 = arith.constant 0 : i32
    %c0_i32_1 = arith.constant 0 : i32
    return %c0_i32, %c0_i32_0 : i32, i32
  }
  func.func @transform_7(%arg0: i32) -> (i32, i32) {
    %c0_i32 = arith.constant 0 : i32
    %c0_i32_0 = arith.constant 0 : i32
    %c0_i32_1 = arith.constant 0 : i32
    return %c0_i32, %c0_i32_0 : i32, i32
  }
  func.func @transform_8(%arg0: i32) -> (i32, i32) {
    %c0_i32 = arith.constant 0 : i32
    %c0_i32_0 = arith.constant 0 : i32
    %c0_i32_1 = arith.constant 0 : i32
    return %c0_i32, %c0_i32_0 : i32, i32
  }
  func.func @transform_9(%arg0: i32) -> (i32, i32) {
    %c0_i32 = arith.constant 0 : i32
    %c0_i32_0 = arith.constant 0 : i32
    %c0_i32_1 = arith.constant 0 : i32
    return %c0_i32, %c0_i32_0 : i32, i32
  }
  func.func @transform_10(%arg0: i32) -> (i32, i32) {
    %c0_i32 = arith.constant 0 : i32
    %c0_i32_0 = arith.constant 0 : i32
    %c0_i32_1 = arith.constant 0 : i32
    return %c0_i32, %c0_i32_0 : i32, i32
  }
  func.func @transform_11(%arg0: i32) -> (i32, i32) {
    %c0_i32 = arith.constant 0 : i32
    %c0_i32_0 = arith.constant 0 : i32
    %c0_i32_1 = arith.constant 0 : i32
    return %c0_i32, %c0_i32_0 : i32, i32
  }
  func.func @transform_12(%arg0: i32) -> (i32, i32) {
    %c0_i32 = arith.constant 0 : i32
    %c0_i32_0 = arith.constant 0 : i32
    %c0_i32_1 = arith.constant 0 : i32
    return %c0_i32, %c0_i32_0 : i32, i32
  }
  func.func @transform_13(%arg0: i32) -> (i32, i32) {
    %c0_i32 = arith.constant 0 : i32
    %c0_i32_0 = arith.constant 0 : i32
    %c0_i32_1 = arith.constant 0 : i32
    return %c0_i32, %c0_i32_0 : i32, i32
  }
  func.func @transform_14(%arg0: i32) -> (i32, i32) {
    %c0_i32 = arith.constant 0 : i32
    %c0_i32_0 = arith.constant 0 : i32
    %c0_i32_1 = arith.constant 0 : i32
    return %c0_i32, %c0_i32_0 : i32, i32
  }
  func.func @transform_15(%arg0: i32) -> (i32, i32) {
    %c0_i32 = arith.constant 0 : i32
    %c0_i32_0 = arith.constant 0 : i32
    %c0_i32_1 = arith.constant 0 : i32
    return %c0_i32, %c0_i32_0 : i32, i32
  }
  func.func @transform_16(%arg0: i32) -> (i32, i32) {
    %c0_i32 = arith.constant 0 : i32
    %c0_i32_0 = arith.constant 0 : i32
    %c0_i32_1 = arith.constant 0 : i32
    return %c0_i32, %c0_i32_0 : i32, i32
  }
  func.func @transform_17(%arg0: i32) -> (i32, i32) {
    %c0_i32 = arith.constant 0 : i32
    %c0_i32_0 = arith.constant 0 : i32
    %c0_i32_1 = arith.constant 0 : i32
    return %c0_i32, %c0_i32_0 : i32, i32
  }
  func.func @transform_18(%arg0: i32) -> (i32, i32) {
    %c0_i32 = arith.constant 0 : i32
    %c0_i32_0 = arith.constant 0 : i32
    %c0_i32_1 = arith.constant 0 : i32
    return %c0_i32, %c0_i32_0 : i32, i32
  }
  func.func @transform_19(%arg0: i32) -> (i32, i32) {
    %c0_i32 = arith.constant 0 : i32
    %c0_i32_0 = arith.constant 0 : i32
    %c0_i32_1 = arith.constant 0 : i32
    return %c0_i32, %c0_i32_0 : i32, i32
  }
  func.func @transform_20(%arg0: i32) -> (i32, i32) {
    %c0_i32 = arith.constant 0 : i32
    %c0_i32_0 = arith.constant 0 : i32
    %c0_i32_1 = arith.constant 0 : i32
    return %c0_i32, %c0_i32_0 : i32, i32
  }
  func.func @transform_21(%arg0: i32) -> (i32, i32) {
    %c0_i32 = arith.constant 0 : i32
    %c0_i32_0 = arith.constant 0 : i32
    %c0_i32_1 = arith.constant 0 : i32
    return %c0_i32, %c0_i32_0 : i32, i32
  }
  func.func @transform_22(%arg0: i32) -> (i32, i32) {
    %c0_i32 = arith.constant 0 : i32
    %c0_i32_0 = arith.constant 0 : i32
    %c0_i32_1 = arith.constant 0 : i32
    return %c0_i32, %c0_i32_0 : i32, i32
  }
  func.func @transform_23(%arg0: i32) -> (i32, i32) {
    %c0_i32 = arith.constant 0 : i32
    %c0_i32_0 = arith.constant 0 : i32
    %c0_i32_1 = arith.constant 0 : i32
    return %c0_i32, %c0_i32_0 : i32, i32
  }
  func.func @transform_24(%arg0: i32) -> (i32, i32) {
    %c0_i32 = arith.constant 0 : i32
    %c0_i32_0 = arith.constant 0 : i32
    %c0_i32_1 = arith.constant 0 : i32
    return %c0_i32, %c0_i32_0 : i32, i32
  }
  func.func @transform_25(%arg0: i32) -> (i32, i32) {
    %c0_i32 = arith.constant 0 : i32
    %c0_i32_0 = arith.constant 0 : i32
    %c0_i32_1 = arith.constant 0 : i32
    return %c0_i32, %c0_i32_0 : i32, i32
  }
  func.func @transform_26(%arg0: i32) -> (i32, i32) {
    %c0_i32 = arith.constant 0 : i32
    %c0_i32_0 = arith.constant 0 : i32
    %c0_i32_1 = arith.constant 0 : i32
    return %c0_i32, %c0_i32_0 : i32, i32
  }
  func.func @transform_27(%arg0: i32) -> (i32, i32) {
    %c0_i32 = arith.constant 0 : i32
    %c0_i32_0 = arith.constant 0 : i32
    %c0_i32_1 = arith.constant 0 : i32
    return %c0_i32, %c0_i32_0 : i32, i32
  }
  func.func @transform_28(%arg0: i32) -> (i32, i32) {
    %c0_i32 = arith.constant 0 : i32
    %c0_i32_0 = arith.constant 0 : i32
    %c0_i32_1 = arith.constant 0 : i32
    return %c0_i32, %c0_i32_0 : i32, i32
  }
  func.func @transform_29(%arg0: i32) -> (i32, i32) {
    %c0_i32 = arith.constant 0 : i32
    %c0_i32_0 = arith.constant 0 : i32
    %c0_i32_1 = arith.constant 0 : i32
    return %c0_i32, %c0_i32_0 : i32, i32
  }
  func.func @transform_30(%arg0: i32) -> (i32, i32) {
    %c0_i32 = arith.constant 0 : i32
    %c0_i32_0 = arith.constant 0 : i32
    %c0_i32_1 = arith.constant 0 : i32
    return %c0_i32, %c0_i32_0 : i32, i32
  }
  func.func @transform_31(%arg0: i32) -> (i32, i32) {
    %c0_i32 = arith.constant 0 : i32
    %c0_i32_0 = arith.constant 0 : i32
    %c0_i32_1 = arith.constant 0 : i32
    return %c0_i32, %c0_i32_0 : i32, i32
  }
  func.func @transform_32(%arg0: i32) -> (i32, i32) {
    %c0_i32 = arith.constant 0 : i32
    %c0_i32_0 = arith.constant 0 : i32
    %c0_i32_1 = arith.constant 0 : i32
    return %c0_i32, %c0_i32_0 : i32, i32
  }
  func.func @transform_33(%arg0: i32) -> (i32, i32) {
    %c0_i32 = arith.constant 0 : i32
    %c0_i32_0 = arith.constant 0 : i32
    %c0_i32_1 = arith.constant 0 : i32
    return %c0_i32, %c0_i32_0 : i32, i32
  }
  func.func @transform_34(%arg0: i32) -> (i32, i32) {
    %c0_i32 = arith.constant 0 : i32
    %c0_i32_0 = arith.constant 0 : i32
    %c0_i32_1 = arith.constant 0 : i32
    return %c0_i32, %c0_i32_0 : i32, i32
  }
  func.func @transform_35(%arg0: i32) -> (i32, i32) {
    %c0_i32 = arith.constant 0 : i32
    %c0_i32_0 = arith.constant 0 : i32
    %c0_i32_1 = arith.constant 0 : i32
    return %c0_i32, %c0_i32_0 : i32, i32
  }
  func.func @transform_36(%arg0: i32) -> (i32, i32) {
    %c0_i32 = arith.constant 0 : i32
    %c0_i32_0 = arith.constant 0 : i32
    %c0_i32_1 = arith.constant 0 : i32
    return %c0_i32, %c0_i32_0 : i32, i32
  }
  func.func @transform_37(%arg0: i32) -> (i32, i32) {
    %c0_i32 = arith.constant 0 : i32
    %c0_i32_0 = arith.constant 0 : i32
    %c0_i32_1 = arith.constant 0 : i32
    return %c0_i32, %c0_i32_0 : i32, i32
  }
  func.func @transform_38(%arg0: i32) -> (i32, i32) {
    %c0_i32 = arith.constant 0 : i32
    %c0_i32_0 = arith.constant 0 : i32
    %c0_i32_1 = arith.constant 0 : i32
    return %c0_i32, %c0_i32_0 : i32, i32
  }
  func.func @transform_39(%arg0: i32) -> (i32, i32) {
    %c0_i32 = arith.constant 0 : i32
    %c0_i32_0 = arith.constant 0 : i32
    %c0_i32_1 = arith.constant 0 : i32
    return %c0_i32, %c0_i32_0 : i32, i32
  }
  func.func @transform_40(%arg0: i32) -> (i32, i32) {
    %c0_i32 = arith.constant 0 : i32
    %c0_i32_0 = arith.constant 0 : i32
    %c0_i32_1 = arith.constant 0 : i32
    return %c0_i32, %c0_i32_0 : i32, i32
  }
  func.func @transform_41(%arg0: i32) -> (i32, i32) {
    %c0_i32 = arith.constant 0 : i32
    %c0_i32_0 = arith.constant 0 : i32
    %c0_i32_1 = arith.constant 0 : i32
    return %c0_i32, %c0_i32_0 : i32, i32
  }
  func.func @transform_42(%arg0: i32) -> (i32, i32, i32) {
    %c0_i32 = arith.constant 0 : i32
    %c0_i32_0 = arith.constant 0 : i32
    %c0_i32_1 = arith.constant 0 : i32
    return %arg0, %c0_i32, %c0_i32_0 : i32, i32, i32
  }
}

</mosaic_0001>

<llo_original>
// kernel: tpu_custom_call.1
$region0: #{tpu_custom_call.1}
  #allocation0 [shape = 'u32[]', space=smem, size = 0x4, offset = 0x4, fixed_abs, tag = 'smem constant byte address 0x4 - core index']
  #allocation1 [shape = 'u32[72,128]{1,0:T(1,128)}', space=vmem, size = 0x9000, scoped, tag = 'internal scratch']
  %s0 = inlined_call_operand.smem [shape: u32[43], index: -1, kind: input, shape index: {}]
  %s1 = sld [smem:[%s0]]
  %s2 = scalar_lea.smem %s0, 1
  %s3 = sld [smem:[%s2]]
  %s4 = scalar_lea.smem %s0, 2
  %s5 = sld [smem:[%s4]]
  %s6 = scalar_lea.smem %s0, 3
  %s7 = sld [smem:[%s6]]
  %s8 = scalar_lea.smem %s0, 4
  %s9 = sld [smem:[%s8]]
  %s10 = scalar_lea.smem %s0, 5
  %s11 = sld [smem:[%s10]]
  %s12 = scalar_lea.smem %s0, 6
  %s13 = sld [smem:[%s12]]
  %s14 = scalar_lea.smem %s0, 7
  %s15 = sld [smem:[%s14]]
  %s16 = scalar_lea.smem %s0, 8
  %s17 = sld [smem:[%s16]]
  %s18 = scalar_lea.smem %s0, 9
  %s19 = sld [smem:[%s18]]
  %s20 = scalar_lea.smem %s0, 10
  %s21 = sld [smem:[%s20]]
  %s22 = scalar_lea.smem %s0, 11
  %s23 = sld [smem:[%s22]]
  %s24 = scalar_lea.smem %s0, 12
  %s25 = sld [smem:[%s24]]
  %s26 = scalar_lea.smem %s0, 13
  %s27 = sld [smem:[%s26]]
  %s28 = scalar_lea.smem %s0, 14
  %s29 = sld [smem:[%s28]]
  %s30 = scalar_lea.smem %s0, 15
  %s31 = sld [smem:[%s30]]
  %s32 = scalar_lea.smem %s0, 16
  %s33 = sld [smem:[%s32]]
  %s34 = scalar_lea.smem %s0, 17
  %s35 = sld [smem:[%s34]]
  %s36 = scalar_lea.smem %s0, 18
  %s37 = sld [smem:[%s36]]
  %s38 = scalar_lea.smem %s0, 19
  %s39 = sld [smem:[%s38]]
  %s40 = scalar_lea.smem %s0, 20
  %s41 = sld [smem:[%s40]]
  %s42 = scalar_lea.smem %s0, 21
  %s43 = sld [smem:[%s42]]
  %s44 = scalar_lea.smem %s0, 22
  %s45 = sld [smem:[%s44]]
  %s46 = scalar_lea.smem %s0, 23
  %s47 = sld [smem:[%s46]]
  %s48 = scalar_lea.smem %s0, 24
  %s49 = sld [smem:[%s48]]
  %s50 = scalar_lea.smem %s0, 25
  %s51 = sld [smem:[%s50]]
  %s52 = scalar_lea.smem %s0, 26
  %s53 = sld [smem:[%s52]]
  %s54 = scalar_lea.smem %s0, 27
  %s55 = sld [smem:[%s54]]
  %s56 = scalar_lea.smem %s0, 28
  %s57 = sld [smem:[%s56]]
  %s58 = scalar_lea.smem %s0, 29
  %s59 = sld [smem:[%s58]]
  %s60 = scalar_lea.smem %s0, 30
  %s61 = sld [smem:[%s60]]
  %s62 = scalar_lea.smem %s0, 31
  %s63 = sld [smem:[%s62]]
  %s64 = scalar_lea.smem %s0, 32
  %s65 = sld [smem:[%s64]]
  %s66 = scalar_lea.smem %s0, 33
  %s67 = sld [smem:[%s66]]
  %s68 = scalar_lea.smem %s0, 34
  %s69 = sld [smem:[%s68]]
  %s70 = scalar_lea.smem %s0, 35
  %s71 = sld [smem:[%s70]]
  %s72 = scalar_lea.smem %s0, 36
  %s73 = sld [smem:[%s72]]
  %s74 = scalar_lea.smem %s0, 37
  %s75 = sld [smem:[%s74]]
  %s76 = scalar_lea.smem %s0, 38
  %s77 = sld [smem:[%s76]]
  %s78 = scalar_lea.smem %s0, 39
  %s79 = sld [smem:[%s78]]
  %s80 = scalar_lea.smem %s0, 40
  %s81 = sld [smem:[%s80]]
  %s82 = scalar_lea.smem %s0, 41
  %s83 = sld [smem:[%s82]]
  %s84 = scalar_lea.smem %s0, 42
  %s85 = sld [smem:[%s84]]
  %s86 = sld [smem:[#allocation0]]
  $region329: #{tpu_custom_call.1} parent=0
    _
  %s88 = ssub.s32 1, %s86
  %s89 = scalar_select 0, %s88, %s86
  $region1: #{tpu_custom_call.1} parent=0
    #allocation2 [shape = 'u8[8192]{0}', space=vmem, size = 0x2000, scoped, tag = 'input window, operand 0']
    #allocation3 [shape = 's32[2]{0}', space=sflag, size = 0x8, scoped, tag = 'scoped memory for tpu_custom_call.1']
    #allocation4 [shape = 's32[2]{0}', space=sflag, size = 0x8, scoped, tag = 'scoped memory for tpu_custom_call.1']
    #allocation5 [shape = 'u8[4096]{0}', space=vmem, size = 0x1000, scoped, tag = 'input window, operand 1, single buffered']
    #allocation6 [shape = 's32[1]{0}', space=sflag, size = 0x4, scoped, tag = 'scoped memory for tpu_custom_call.1']
    #allocation7 [shape = 'u8[512]{0}', space=vmem, size = 0x400, scoped, tag = 'input window, operand 2, single buffered']
    #allocation8 [shape = 'u8[512]{0}', space=vmem, size = 0x400, scoped, tag = 'input window, operand 3, single buffered']
    #allocation9 [shape = 's32[1]{0}', space=sflag, size = 0x4, scoped, tag = 'scoped memory for tpu_custom_call.1']
    #allocation10 [shape = 'u8[512]{0}', space=vmem, size = 0x400, scoped, tag = 'input window, operand 5, single buffered']
    #allocation11 [shape = 'u8[2048]{0}', space=vmem, size = 0x800, scoped, tag = 'input window, operand 6, single buffered']
    #allocation12 [shape = 's32[1]{0}', space=sflag, size = 0x4, scoped, tag = 'scoped memory for tpu_custom_call.1']
    #allocation13 [shape = 'u8[512]{0}', space=vmem, size = 0x400, scoped, tag = 'input window, operand 7, single buffered']
    #allocation14 [shape = 'u8[512]{0}', space=vmem, size = 0x400, scoped, tag = 'input window, operand 8, single buffered']
    #allocation15 [shape = 's32[1]{0}', space=sflag, size = 0x4, scoped, tag = 'scoped memory for tpu_custom_call.1']
    #allocation16 [shape = 'u8[512]{0}', space=vmem, size = 0x400, scoped, tag = 'input window, operand 9, single buffered']
    #allocation17 [shape = 'u8[16384]{0}', space=vmem, size = 0x4000, scoped, tag = 'input window, operand 11, single buffered']
    #allocation18 [shape = 's32[1]{0}', space=sflag, size = 0x4, scoped, tag = 'scoped memory for tpu_custom_call.1']
    #allocation19 [shape = 'u8[16384]{0}', space=vmem, size = 0x4000, scoped, tag = 'input window, operand 12, single buffered']
    #allocation20 [shape = 'u8[512]{0}', space=vmem, size = 0x400, scoped, tag = 'input window, operand 13, single buffered']
    #allocation21 [shape = 's32[1]{0}', space=sflag, size = 0x4, scoped, tag = 'scoped memory for tpu_custom_call.1']
    #allocation22 [shape = 'u8[512]{0}', space=vmem, size = 0x400, scoped, tag = 'input window, operand 14, single buffered']
    #allocation23 [shape = 'u8[512]{0}', space=vmem, size = 0x400, scoped, tag = 'input window, operand 15, single buffered']
    #allocation24 [shape = 's32[1]{0}', space=sflag, size = 0x4, scoped, tag = 'scoped memory for tpu_custom_call.1']
    #allocation25 [shape = 'u8[16384]{0}', space=vmem, size = 0x4000, scoped, tag = 'input window, operand 16, single buffered']
    #allocation26 [shape = 'u8[512]{0}', space=vmem, size = 0x400, scoped, tag = 'input window, operand 17, single buffered']
    #allocation27 [shape = 's32[1]{0}', space=sflag, size = 0x4, scoped, tag = 'scoped memory for tpu_custom_call.1']
    #allocation28 [shape = 'u8[512]{0}', space=vmem, size = 0x400, scoped, tag = 'input window, operand 18, single buffered']
    #allocation29 [shape = 'u8[512]{0}', space=vmem, size = 0x400, scoped, tag = 'input window, operand 19, single buffered']
    #allocation30 [shape = 's32[1]{0}', space=sflag, size = 0x4, scoped, tag = 'scoped memory for tpu_custom_call.1']
    #allocation31 [shape = 'u8[4096]{0}', space=vmem, size = 0x1000, scoped, tag = 'input window, operand 20, single buffered']
    #allocation32 [shape = 'u8[4096]{0}', space=vmem, size = 0x1000, scoped, tag = 'input window, operand 21, single buffered']
    #allocation33 [shape = 's32[1]{0}', space=sflag, size = 0x4, scoped, tag = 'scoped memory for tpu_custom_call.1']
    #allocation34 [shape = 'u8[4096]{0}', space=vmem, size = 0x1000, scoped, tag = 'input window, operand 22, single buffered']
    #allocation35 [shape = 'u8[512]{0}', space=vmem, size = 0x400, scoped, tag = 'input window, operand 23, single buffered']
    #allocation36 [shape = 's32[1]{0}', space=sflag, size = 0x4, scoped, tag = 'scoped memory for tpu_custom_call.1']
    #allocation37 [shape = 'u8[512]{0}', space=vmem, size = 0x400, scoped, tag = 'input window, operand 24, single buffered']
    #allocation38 [shape = 'u8[512]{0}', space=vmem, size = 0x400, scoped, tag = 'input window, operand 25, single buffered']
    #allocation39 [shape = 's32[1]{0}', space=sflag, size = 0x4, scoped, tag = 'scoped memory for tpu_custom_call.1']
    #allocation40 [shape = 'u8[4096]{0}', space=vmem, size = 0x1000, scoped, tag = 'input window, operand 26, single buffered']
    #allocation41 [shape = 'u8[512]{0}', space=vmem, size = 0x400, scoped, tag = 'input window, operand 27, single buffered']
    #allocation42 [shape = 's32[1]{0}', space=sflag, size = 0x4, scoped, tag = 'scoped memory for tpu_custom_call.1']
    #allocation43 [shape = 'u8[512]{0}', space=vmem, size = 0x400, scoped, tag = 'input window, operand 28, single buffered']
    #allocation44 [shape = 'u8[512]{0}', space=vmem, size = 0x400, scoped, tag = 'input window, operand 29, single buffered']
    #allocation45 [shape = 's32[1]{0}', space=sflag, size = 0x4, scoped, tag = 'scoped memory for tpu_custom_call.1']
    #allocation46 [shape = 'u8[512]{0}', space=vmem, size = 0x400, scoped, tag = 'input window, operand 31, single buffered']
    #allocation47 [shape = 'u8[16384]{0}', space=vmem, size = 0x4000, scoped, tag = 'input window, operand 32, single buffered']
    #allocation48 [shape = 's32[1]{0}', space=sflag, size = 0x4, scoped, tag = 'scoped memory for tpu_custom_call.1']
    #allocation49 [shape = 'u8[512]{0}', space=vmem, size = 0x400, scoped, tag = 'input window, operand 33, single buffered']
    #allocation50 [shape = 'u8[16384]{0}', space=vmem, size = 0x4000, scoped, tag = 'input window, operand 38, single buffered']
    #allocation51 [shape = 's32[1]{0}', space=sflag, size = 0x4, scoped, tag = 'scoped memory for tpu_custom_call.1']
    #allocation52 [shape = 'u8[8192]{0}', space=vmem, size = 0x2000, scoped, tag = 'output window, operand 0']
    %90 = vsyncpa [#allocation3], 0
    %s91 = scalar_lea.sflag [#allocation3], 1
    %92 = vsyncpa %s91, 0
    %93 = vsyncpa [#allocation6], 0
    %94 = vsyncpa [#allocation9], 0
    %95 = vsyncpa [#allocation12], 0
    %96 = vsyncpa [#allocation15], 0
    %97 = vsyncpa [#allocation18], 0
    %98 = vsyncpa [#allocation21], 0
    %99 = vsyncpa [#allocation24], 0
    %100 = vsyncpa [#allocation27], 0
    %101 = vsyncpa [#allocation30], 0
    %102 = vsyncpa [#allocation33], 0
    %103 = vsyncpa [#allocation36], 0
    %104 = vsyncpa [#allocation39], 0
    %105 = vsyncpa [#allocation42], 0
    %106 = vsyncpa [#allocation45], 0
    %107 = vsyncpa [#allocation48], 0
    %108 = vsyncpa [#allocation51], 0
    %109 = vsyncpa [#allocation4], 0
    %s110 = scalar_lea.sflag [#allocation4], 1
    %111 = vsyncpa %s110, 0
    loop: start=0, step=1, limit=4
    $region2: #{tpu_custom_call.1} parent=1 // loop_pre_header
      _
    $region3: #{tpu_custom_call.1} parent=1 // loop_header
      %s113 = sphi 0, %s117
      %p114 = scmp.ge.s32.totalorder %s113, 4
      %s123 = sphi 0, %s125
      %s126 = sphi 0, %s123
      %s127 = sphi 0, %s126
      %s143 = sphi 0, %s127
      %s147 = sphi 0, %s147
      %s149 = sphi 0, %s147
      %s150 = sphi 0, %s149
      %s164 = sphi 0, %s150
      %s168 = sphi 0, %s168
      %s170 = sphi 0, %s168
      %s171 = sphi 0, %s170
      %s185 = sphi 0, %s171
      %s189 = sphi 0, %s189
      %s191 = sphi 0, %s189
      %s192 = sphi 0, %s191
      %s206 = sphi 0, %s192
      %s210 = sphi 0, %s210
      %s212 = sphi 0, %s210
      %s213 = sphi 0, %s212
      %s227 = sphi 0, %s213
      %s231 = sphi 0, %s231
      %s233 = sphi 0, %s231
      %s234 = sphi 0, %s233
      %s248 = sphi 0, %s234
      %s252 = sphi 0, %s252
      %s254 = sphi 0, %s252
      %s255 = sphi 0, %s254
      %s269 = sphi 0, %s255
      %s273 = sphi 0, %s273
      %s275 = sphi 0, %s273
      %s276 = sphi 0, %s275
      %s290 = sphi 0, %s276
      %s294 = sphi 0, %s294
      %s296 = sphi 0, %s294
      %s297 = sphi 0, %s296
      %s311 = sphi 0, %s297
      %s315 = sphi 0, %s315
      %s317 = sphi 0, %s315
      %s318 = sphi 0, %s317
      %s332 = sphi 0, %s318
      %s336 = sphi 0, %s336
      %s338 = sphi 0, %s336
      %s339 = sphi 0, %s338
      %s353 = sphi 0, %s339
      %s357 = sphi 0, %s357
      %s359 = sphi 0, %s357
      %s360 = sphi 0, %s359
      %s374 = sphi 0, %s360
      %s378 = sphi 0, %s378
      %s380 = sphi 0, %s378
      %s381 = sphi 0, %s380
      %s395 = sphi 0, %s381
      %s399 = sphi 0, %s399
      %s401 = sphi 0, %s399
      %s402 = sphi 0, %s401
      %s416 = sphi 0, %s402
      %s420 = sphi 0, %s420
      %s422 = sphi 0, %s420
      %s423 = sphi 0, %s422
      %s437 = sphi 0, %s423
      %s441 = sphi 0, %s441
      %s443 = sphi 0, %s441
      %s444 = sphi 0, %s443
      %s458 = sphi 0, %s444
      %s462 = sphi 0, %s462
      %s464 = sphi 0, %s462
      %s465 = sphi 0, %s464
      %s479 = sphi 0, %s465
      %s483 = sphi 0, %s483
      %s485 = sphi 0, %s483
      %s486 = sphi 0, %s485
      %s500 = sphi 0, %s486
      %s504 = sphi 0, %s504
      %s506 = sphi 0, %s504
      %s507 = sphi 0, %s506
      %s521 = sphi 0, %s507
      %s525 = sphi 0, %s525
      %s527 = sphi 0, %s525
      %s528 = sphi 0, %s527
      %s542 = sphi 0, %s528
      %s546 = sphi 0, %s546
      %s548 = sphi 0, %s546
      %s549 = sphi 0, %s548
      %s563 = sphi 0, %s549
      %s567 = sphi 0, %s567
      %s569 = sphi 0, %s567
      %s570 = sphi 0, %s569
      %s584 = sphi 0, %s570
      %s588 = sphi 0, %s588
      %s590 = sphi 0, %s588
      %s591 = sphi 0, %s590
      %s605 = sphi 0, %s591
      %s609 = sphi 0, %s609
      %s611 = sphi 0, %s609
      %s612 = sphi 0, %s611
      %s626 = sphi 0, %s612
      %s630 = sphi 0, %s630
      %s632 = sphi 0, %s630
      %s633 = sphi 0, %s632
      %s647 = sphi 0, %s633
      %s651 = sphi 0, %s651
      %s653 = sphi 0, %s651
      %s654 = sphi 0, %s653
      %s668 = sphi 0, %s654
      %s672 = sphi 0, %s672
      %s674 = sphi 0, %s672
      %s675 = sphi 0, %s674
      %s689 = sphi 0, %s675
      %s693 = sphi 0, %s693
      %s695 = sphi 0, %s693
      %s696 = sphi 0, %s695
      %s710 = sphi 0, %s696
      %s714 = sphi 0, %s714
      %s716 = sphi 0, %s714
      %s717 = sphi 0, %s716
      %s731 = sphi 0, %s717
      %s735 = sphi 0, %s735
      %s737 = sphi 0, %s735
      %s738 = sphi 0, %s737
      %s752 = sphi 0, %s738
      %s756 = sphi 0, %s756
      %s758 = sphi 0, %s756
      %s759 = sphi 0, %s758
      %s773 = sphi 0, %s759
      %s777 = sphi 0, %s777
      %s779 = sphi 0, %s777
      %s780 = sphi 0, %s779
      %s794 = sphi 0, %s780
      %s798 = sphi 0, %s798
      %s800 = sphi 0, %s798
      %s801 = sphi 0, %s800
      %s815 = sphi 0, %s801
      %s819 = sphi 0, %s819
      %s821 = sphi 0, %s819
      %s822 = sphi 0, %s821
      %s836 = sphi 0, %s822
      %s840 = sphi 0, %s840
      %s842 = sphi 0, %s840
      %s843 = sphi 0, %s842
      %s857 = sphi 0, %s843
      %s861 = sphi 0, %s861
      %s863 = sphi 0, %s861
      %s864 = sphi 0, %s863
      %s878 = sphi 0, %s864
      %s882 = sphi 0, %s882
      %s884 = sphi 0, %s882
      %s885 = sphi 0, %s884
      %s899 = sphi 0, %s885
      %s903 = sphi 0, %s903
      %s905 = sphi 0, %s903
      %s906 = sphi 0, %s905
      %s920 = sphi 0, %s906
      %s924 = sphi 0, %s924
      %s926 = sphi 0, %s924
      %s927 = sphi 0, %s926
      %s941 = sphi 0, %s927
      %s945 = sphi 0, %s945
      %s947 = sphi 0, %s945
      %s948 = sphi 0, %s947
      %s962 = sphi 0, %s948
      %s966 = sphi 0, %s966
      %s968 = sphi 0, %s966
      %s969 = sphi 0, %s968
      %s983 = sphi 0, %s969
      %s987 = sphi 0, %s987
      %s989 = sphi 0, %s987
      %s990 = sphi 0, %s989
      %s1004 = sphi 0, %s990
      %s1010 = sphi 0, %s1012
      %s1013 = sphi 0, %s1010
      %s1014 = sphi 0, %s1013
      %s1030 = sphi 0, %s1014
    $region4: #{tpu_custom_call.1} parent=1 // loop_header_branch
      %116 = sbr.rel (%p114) target = $region8
    $region5: #{tpu_custom_call.1} parent=1 // loop_body
      %s118 = ssub.s32 %s113, 1
      %s119 = ssub.s32 %s113, 2
      %s120 = sadd.s32 %s113, 1
      %s121 = ssub.s32 %s113, %s120
      %p122 = scmp.eq.s32.totalorder %s121, 0
      %s124 = sadd.s32 %s123, 1
      %s125 = scalar_select %p122, %s123, %s124
      %p128 = pneg %p122
      %p129 = scmp.eq.s32.totalorder %s113, 1
      %p130 = por %p128, %p129
      %p131 = scmp.ne.s32.totalorder %s123, %s126
      %p132 = scmp.eq.s32.totalorder %s113, 0
      %p133 = por %p131, %p132
      %p134 = scmp.ne.s32.totalorder %s123, %s126
      %p135 = scmp.eq.s32.totalorder %s118, 1
      %p136 = por %p134, %p135
      %p137 = scmp.ne.s32.totalorder %s126, %s127
      %p138 = scmp.eq.s32.totalorder %s118, 0
      %p139 = por %p137, %p138
      %p140 = scmp.ne.s32.totalorder %s126, %s127
      %p141 = scmp.eq.s32.totalorder %s119, 1
      %p142 = por %p140, %p141
      %p144 = scmp.ne.s32.totalorder %s127, %s143
      %p145 = scmp.eq.s32.totalorder %s119, 0
      %p146 = por %p144, %p145
      %s148 = sadd.s32 %s147, 1
      %p151 = scmp.eq.s32.totalorder %s113, 1
      %p152 = scmp.ne.s32.totalorder %s147, %s149
      %p153 = scmp.eq.s32.totalorder %s113, 0
      %p154 = por %p152, %p153
      %p155 = scmp.ne.s32.totalorder %s147, %s149
      %p156 = scmp.eq.s32.totalorder %s118, 1
      %p157 = por %p155, %p156
      %p158 = scmp.ne.s32.totalorder %s149, %s150
      %p159 = scmp.eq.s32.totalorder %s118, 0
      %p160 = por %p158, %p159
      %p161 = scmp.ne.s32.totalorder %s149, %s150
      %p162 = scmp.eq.s32.totalorder %s119, 1
      %p163 = por %p161, %p162
      %p165 = scmp.ne.s32.totalorder %s150, %s164
      %p166 = scmp.eq.s32.totalorder %s119, 0
      %p167 = por %p165, %p166
      %s169 = sadd.s32 %s168, 1
      %p172 = scmp.eq.s32.totalorder %s113, 1
      %p173 = scmp.ne.s32.totalorder %s168, %s170
      %p174 = scmp.eq.s32.totalorder %s113, 0
      %p175 = por %p173, %p174
      %p176 = scmp.ne.s32.totalorder %s168, %s170
      %p177 = scmp.eq.s32.totalorder %s118, 1
      %p178 = por %p176, %p177
      %p179 = scmp.ne.s32.totalorder %s170, %s171
      %p180 = scmp.eq.s32.totalorder %s118, 0
      %p181 = por %p179, %p180
      %p182 = scmp.ne.s32.totalorder %s170, %s171
      %p183 = scmp.eq.s32.totalorder %s119, 1
      %p184 = por %p182, %p183
      %p186 = scmp.ne.s32.totalorder %s171, %s185
      %p187 = scmp.eq.s32.totalorder %s119, 0
      %p188 = por %p186, %p187
      %s190 = sadd.s32 %s189, 1
      %p193 = scmp.eq.s32.totalorder %s113, 1
      %p194 = scmp.ne.s32.totalorder %s189, %s191
      %p195 = scmp.eq.s32.totalorder %s113, 0
      %p196 = por %p194, %p195
      %p197 = scmp.ne.s32.totalorder %s189, %s191
      %p198 = scmp.eq.s32.totalorder %s118, 1
      %p199 = por %p197, %p198
      %p200 = scmp.ne.s32.totalorder %s191, %s192
      %p201 = scmp.eq.s32.totalorder %s118, 0
      %p202 = por %p200, %p201
      %p203 = scmp.ne.s32.totalorder %s191, %s192
      %p204 = scmp.eq.s32.totalorder %s119, 1
      %p205 = por %p203, %p204
      %p207 = scmp.ne.s32.totalorder %s192, %s206
      %p208 = scmp.eq.s32.totalorder %s119, 0
      %p209 = por %p207, %p208
      %s211 = sadd.s32 %s210, 1
      %p214 = scmp.eq.s32.totalorder %s113, 1
      %p215 = scmp.ne.s32.totalorder %s210, %s212
      %p216 = scmp.eq.s32.totalorder %s113, 0
      %p217 = por %p215, %p216
      %p218 = scmp.ne.s32.totalorder %s210, %s212
      %p219 = scmp.eq.s32.totalorder %s118, 1
      %p220 = por %p218, %p219
      %p221 = scmp.ne.s32.totalorder %s212, %s213
      %p222 = scmp.eq.s32.totalorder %s118, 0
      %p223 = por %p221, %p222
      %p224 = scmp.ne.s32.totalorder %s212, %s213
      %p225 = scmp.eq.s32.totalorder %s119, 1
      %p226 = por %p224, %p225
      %p228 = scmp.ne.s32.totalorder %s213, %s227
      %p229 = scmp.eq.s32.totalorder %s119, 0
      %p230 = por %p228, %p229
      %s232 = sadd.s32 %s231, 1
      %p235 = scmp.eq.s32.totalorder %s113, 1
      %p236 = scmp.ne.s32.totalorder %s231, %s233
      %p237 = scmp.eq.s32.totalorder %s113, 0
      %p238 = por %p236, %p237
      %p239 = scmp.ne.s32.totalorder %s231, %s233
      %p240 = scmp.eq.s32.totalorder %s118, 1
      %p241 = por %p239, %p240
      %p242 = scmp.ne.s32.totalorder %s233, %s234
      %p243 = scmp.eq.s32.totalorder %s118, 0
      %p244 = por %p242, %p243
      %p245 = scmp.ne.s32.totalorder %s233, %s234
      %p246 = scmp.eq.s32.totalorder %s119, 1
      %p247 = por %p245, %p246
      %p249 = scmp.ne.s32.totalorder %s234, %s248
      %p250 = scmp.eq.s32.totalorder %s119, 0
      %p251 = por %p249, %p250
      %s253 = sadd.s32 %s252, 1
      %p256 = scmp.eq.s32.totalorder %s113, 1
      %p257 = scmp.ne.s32.totalorder %s252, %s254
      %p258 = scmp.eq.s32.totalorder %s113, 0
      %p259 = por %p257, %p258
      %p260 = scmp.ne.s32.totalorder %s252, %s254
      %p261 = scmp.eq.s32.totalorder %s118, 1
      %p262 = por %p260, %p261
      %p263 = scmp.ne.s32.totalorder %s254, %s255
      %p264 = scmp.eq.s32.totalorder %s118, 0
      %p265 = por %p263, %p264
      %p266 = scmp.ne.s32.totalorder %s254, %s255
      %p267 = scmp.eq.s32.totalorder %s119, 1
      %p268 = por %p266, %p267
      %p270 = scmp.ne.s32.totalorder %s255, %s269
      %p271 = scmp.eq.s32.totalorder %s119, 0
      %p272 = por %p270, %p271
      %s274 = sadd.s32 %s273, 1
      %p277 = scmp.eq.s32.totalorder %s113, 1
      %p278 = scmp.ne.s32.totalorder %s273, %s275
      %p279 = scmp.eq.s32.totalorder %s113, 0
      %p280 = por %p278, %p279
      %p281 = scmp.ne.s32.totalorder %s273, %s275
      %p282 = scmp.eq.s32.totalorder %s118, 1
      %p283 = por %p281, %p282
      %p284 = scmp.ne.s32.totalorder %s275, %s276
      %p285 = scmp.eq.s32.totalorder %s118, 0
      %p286 = por %p284, %p285
      %p287 = scmp.ne.s32.totalorder %s275, %s276
      %p288 = scmp.eq.s32.totalorder %s119, 1
      %p289 = por %p287, %p288
      %p291 = scmp.ne.s32.totalorder %s276, %s290
      %p292 = scmp.eq.s32.totalorder %s119, 0
      %p293 = por %p291, %p292
      %s295 = sadd.s32 %s294, 1
      %p298 = scmp.eq.s32.totalorder %s113, 1
      %p299 = scmp.ne.s32.totalorder %s294, %s296
      %p300 = scmp.eq.s32.totalorder %s113, 0
      %p301 = por %p299, %p300
      %p302 = scmp.ne.s32.totalorder %s294, %s296
      %p303 = scmp.eq.s32.totalorder %s118, 1
      %p304 = por %p302, %p303
      %p305 = scmp.ne.s32.totalorder %s296, %s297
      %p306 = scmp.eq.s32.totalorder %s118, 0
      %p307 = por %p305, %p306
      %p308 = scmp.ne.s32.totalorder %s296, %s297
      %p309 = scmp.eq.s32.totalorder %s119, 1
      %p310 = por %p308, %p309
      %p312 = scmp.ne.s32.totalorder %s297, %s311
      %p313 = scmp.eq.s32.totalorder %s119, 0
      %p314 = por %p312, %p313
      %s316 = sadd.s32 %s315, 1
      %p319 = scmp.eq.s32.totalorder %s113, 1
      %p320 = scmp.ne.s32.totalorder %s315, %s317
      %p321 = scmp.eq.s32.totalorder %s113, 0
      %p322 = por %p320, %p321
      %p323 = scmp.ne.s32.totalorder %s315, %s317
      %p324 = scmp.eq.s32.totalorder %s118, 1
      %p325 = por %p323, %p324
      %p326 = scmp.ne.s32.totalorder %s317, %s318
      %p327 = scmp.eq.s32.totalorder %s118, 0
      %p328 = por %p326, %p327
      %p329 = scmp.ne.s32.totalorder %s317, %s318
      %p330 = scmp.eq.s32.totalorder %s119, 1
      %p331 = por %p329, %p330
      %p333 = scmp.ne.s32.totalorder %s318, %s332
      %p334 = scmp.eq.s32.totalorder %s119, 0
      %p335 = por %p333, %p334
      %s337 = sadd.s32 %s336, 1
      %p340 = scmp.eq.s32.totalorder %s113, 1
      %p341 = scmp.ne.s32.totalorder %s336, %s338
      %p342 = scmp.eq.s32.totalorder %s113, 0
      %p343 = por %p341, %p342
      %p344 = scmp.ne.s32.totalorder %s336, %s338
      %p345 = scmp.eq.s32.totalorder %s118, 1
      %p346 = por %p344, %p345
      %p347 = scmp.ne.s32.totalorder %s338, %s339
      %p348 = scmp.eq.s32.totalorder %s118, 0
      %p349 = por %p347, %p348
      %p350 = scmp.ne.s32.totalorder %s338, %s339
      %p351 = scmp.eq.s32.totalorder %s119, 1
      %p352 = por %p350, %p351
      %p354 = scmp.ne.s32.totalorder %s339, %s353
      %p355 = scmp.eq.s32.totalorder %s119, 0
      %p356 = por %p354, %p355
      %s358 = sadd.s32 %s357, 1
      %p361 = scmp.eq.s32.totalorder %s113, 1
      %p362 = scmp.ne.s32.totalorder %s357, %s359
      %p363 = scmp.eq.s32.totalorder %s113, 0
      %p364 = por %p362, %p363
      %p365 = scmp.ne.s32.totalorder %s357, %s359
      %p366 = scmp.eq.s32.totalorder %s118, 1
      %p367 = por %p365, %p366
      %p368 = scmp.ne.s32.totalorder %s359, %s360
      %p369 = scmp.eq.s32.totalorder %s118, 0
      %p370 = por %p368, %p369
      %p371 = scmp.ne.s32.totalorder %s359, %s360
      %p372 = scmp.eq.s32.totalorder %s119, 1
      %p373 = por %p371, %p372
      %p375 = scmp.ne.s32.totalorder %s360, %s374
      %p376 = scmp.eq.s32.totalorder %s119, 0
      %p377 = por %p375, %p376
      %s379 = sadd.s32 %s378, 1
      %p382 = scmp.eq.s32.totalorder %s113, 1
      %p383 = scmp.ne.s32.totalorder %s378, %s380
      %p384 = scmp.eq.s32.totalorder %s113, 0
      %p385 = por %p383, %p384
      %p386 = scmp.ne.s32.totalorder %s378, %s380
      %p387 = scmp.eq.s32.totalorder %s118, 1
      %p388 = por %p386, %p387
      %p389 = scmp.ne.s32.totalorder %s380, %s381
      %p390 = scmp.eq.s32.totalorder %s118, 0
      %p391 = por %p389, %p390
      %p392 = scmp.ne.s32.totalorder %s380, %s381
      %p393 = scmp.eq.s32.totalorder %s119, 1
      %p394 = por %p392, %p393
      %p396 = scmp.ne.s32.totalorder %s381, %s395
      %p397 = scmp.eq.s32.totalorder %s119, 0
      %p398 = por %p396, %p397
      %s400 = sadd.s32 %s399, 1
      %p403 = scmp.eq.s32.totalorder %s113, 1
      %p404 = scmp.ne.s32.totalorder %s399, %s401
      %p405 = scmp.eq.s32.totalorder %s113, 0
      %p406 = por %p404, %p405
      %p407 = scmp.ne.s32.totalorder %s399, %s401
      %p408 = scmp.eq.s32.totalorder %s118, 1
      %p409 = por %p407, %p408
      %p410 = scmp.ne.s32.totalorder %s401, %s402
      %p411 = scmp.eq.s32.totalorder %s118, 0
      %p412 = por %p410, %p411
      %p413 = scmp.ne.s32.totalorder %s401, %s402
      %p414 = scmp.eq.s32.totalorder %s119, 1
      %p415 = por %p413, %p414
      %p417 = scmp.ne.s32.totalorder %s402, %s416
      %p418 = scmp.eq.s32.totalorder %s119, 0
      %p419 = por %p417, %p418
      %s421 = sadd.s32 %s420, 1
      %p424 = scmp.eq.s32.totalorder %s113, 1
      %p425 = scmp.ne.s32.totalorder %s420, %s422
      %p426 = scmp.eq.s32.totalorder %s113, 0
      %p427 = por %p425, %p426
      %p428 = scmp.ne.s32.totalorder %s420, %s422
      %p429 = scmp.eq.s32.totalorder %s118, 1
      %p430 = por %p428, %p429
      %p431 = scmp.ne.s32.totalorder %s422, %s423
      %p432 = scmp.eq.s32.totalorder %s118, 0
      %p433 = por %p431, %p432
      %p434 = scmp.ne.s32.totalorder %s422, %s423
      %p435 = scmp.eq.s32.totalorder %s119, 1
      %p436 = por %p434, %p435
      %p438 = scmp.ne.s32.totalorder %s423, %s437
      %p439 = scmp.eq.s32.totalorder %s119, 0
      %p440 = por %p438, %p439
      %s442 = sadd.s32 %s441, 1
      %p445 = scmp.eq.s32.totalorder %s113, 1
      %p446 = scmp.ne.s32.totalorder %s441, %s443
      %p447 = scmp.eq.s32.totalorder %s113, 0
      %p448 = por %p446, %p447
      %p449 = scmp.ne.s32.totalorder %s441, %s443
      %p450 = scmp.eq.s32.totalorder %s118, 1
      %p451 = por %p449, %p450
      %p452 = scmp.ne.s32.totalorder %s443, %s444
      %p453 = scmp.eq.s32.totalorder %s118, 0
      %p454 = por %p452, %p453
      %p455 = scmp.ne.s32.totalorder %s443, %s444
      %p456 = scmp.eq.s32.totalorder %s119, 1
      %p457 = por %p455, %p456
      %p459 = scmp.ne.s32.totalorder %s444, %s458
      %p460 = scmp.eq.s32.totalorder %s119, 0
      %p461 = por %p459, %p460
      %s463 = sadd.s32 %s462, 1
      %p466 = scmp.eq.s32.totalorder %s113, 1
      %p467 = scmp.ne.s32.totalorder %s462, %s464
      %p468 = scmp.eq.s32.totalorder %s113, 0
      %p469 = por %p467, %p468
      %p470 = scmp.ne.s32.totalorder %s462, %s464
      %p471 = scmp.eq.s32.totalorder %s118, 1
      %p472 = por %p470, %p471
      %p473 = scmp.ne.s32.totalorder %s464, %s465
      %p474 = scmp.eq.s32.totalorder %s118, 0
      %p475 = por %p473, %p474
      %p476 = scmp.ne.s32.totalorder %s464, %s465
      %p477 = scmp.eq.s32.totalorder %s119, 1
      %p478 = por %p476, %p477
      %p480 = scmp.ne.s32.totalorder %s465, %s479
      %p481 = scmp.eq.s32.totalorder %s119, 0
      %p482 = por %p480, %p481
      %s484 = sadd.s32 %s483, 1
      %p487 = scmp.eq.s32.totalorder %s113, 1
      %p488 = scmp.ne.s32.totalorder %s483, %s485
      %p489 = scmp.eq.s32.totalorder %s113, 0
      %p490 = por %p488, %p489
      %p491 = scmp.ne.s32.totalorder %s483, %s485
      %p492 = scmp.eq.s32.totalorder %s118, 1
      %p493 = por %p491, %p492
      %p494 = scmp.ne.s32.totalorder %s485, %s486
      %p495 = scmp.eq.s32.totalorder %s118, 0
      %p496 = por %p494, %p495
      %p497 = scmp.ne.s32.totalorder %s485, %s486
      %p498 = scmp.eq.s32.totalorder %s119, 1
      %p499 = por %p497, %p498
      %p501 = scmp.ne.s32.totalorder %s486, %s500
      %p502 = scmp.eq.s32.totalorder %s119, 0
      %p503 = por %p501, %p502
      %s505 = sadd.s32 %s504, 1
      %p508 = scmp.eq.s32.totalorder %s113, 1
      %p509 = scmp.ne.s32.totalorder %s504, %s506
      %p510 = scmp.eq.s32.totalorder %s113, 0
      %p511 = por %p509, %p510
      %p512 = scmp.ne.s32.totalorder %s504, %s506
      %p513 = scmp.eq.s32.totalorder %s118, 1
      %p514 = por %p512, %p513
      %p515 = scmp.ne.s32.totalorder %s506, %s507
      %p516 = scmp.eq.s32.totalorder %s118, 0
      %p517 = por %p515, %p516
      %p518 = scmp.ne.s32.totalorder %s506, %s507
      %p519 = scmp.eq.s32.totalorder %s119, 1
      %p520 = por %p518, %p519
      %p522 = scmp.ne.s32.totalorder %s507, %s521
      %p523 = scmp.eq.s32.totalorder %s119, 0
      %p524 = por %p522, %p523
      %s526 = sadd.s32 %s525, 1
      %p529 = scmp.eq.s32.totalorder %s113, 1
      %p530 = scmp.ne.s32.totalorder %s525, %s527
      %p531 = scmp.eq.s32.totalorder %s113, 0
      %p532 = por %p530, %p531
      %p533 = scmp.ne.s32.totalorder %s525, %s527
      %p534 = scmp.eq.s32.totalorder %s118, 1
      %p535 = por %p533, %p534
      %p536 = scmp.ne.s32.totalorder %s527, %s528
      %p537 = scmp.eq.s32.totalorder %s118, 0
      %p538 = por %p536, %p537
      %p539 = scmp.ne.s32.totalorder %s527, %s528
      %p540 = scmp.eq.s32.totalorder %s119, 1
      %p541 = por %p539, %p540
      %p543 = scmp.ne.s32.totalorder %s528, %s542
      %p544 = scmp.eq.s32.totalorder %s119, 0
      %p545 = por %p543, %p544
      %s547 = sadd.s32 %s546, 1
      %p550 = scmp.eq.s32.totalorder %s113, 1
      %p551 = scmp.ne.s32.totalorder %s546, %s548
      %p552 = scmp.eq.s32.totalorder %s113, 0
      %p553 = por %p551, %p552
      %p554 = scmp.ne.s32.totalorder %s546, %s548
      %p555 = scmp.eq.s32.totalorder %s118, 1
      %p556 = por %p554, %p555
      %p557 = scmp.ne.s32.totalorder %s548, %s549
      %p558 = scmp.eq.s32.totalorder %s118, 0
      %p559 = por %p557, %p558
      %p560 = scmp.ne.s32.totalorder %s548, %s549
      %p561 = scmp.eq.s32.totalorder %s119, 1
      %p562 = por %p560, %p561
      %p564 = scmp.ne.s32.totalorder %s549, %s563
      %p565 = scmp.eq.s32.totalorder %s119, 0
      %p566 = por %p564, %p565
      %s568 = sadd.s32 %s567, 1
      %p571 = scmp.eq.s32.totalorder %s113, 1
      %p572 = scmp.ne.s32.totalorder %s567, %s569
      %p573 = scmp.eq.s32.totalorder %s113, 0
      %p574 = por %p572, %p573
      %p575 = scmp.ne.s32.totalorder %s567, %s569
      %p576 = scmp.eq.s32.totalorder %s118, 1
      %p577 = por %p575, %p576
      %p578 = scmp.ne.s32.totalorder %s569, %s570
      %p579 = scmp.eq.s32.totalorder %s118, 0
      %p580 = por %p578, %p579
      %p581 = scmp.ne.s32.totalorder %s569, %s570
      %p582 = scmp.eq.s32.totalorder %s119, 1
      %p583 = por %p581, %p582
      %p585 = scmp.ne.s32.totalorder %s570, %s584
      %p586 = scmp.eq.s32.totalorder %s119, 0
      %p587 = por %p585, %p586
      %s589 = sadd.s32 %s588, 1
      %p592 = scmp.eq.s32.totalorder %s113, 1
      %p593 = scmp.ne.s32.totalorder %s588, %s590
      %p594 = scmp.eq.s32.totalorder %s113, 0
      %p595 = por %p593, %p594
      %p596 = scmp.ne.s32.totalorder %s588, %s590
      %p597 = scmp.eq.s32.totalorder %s118, 1
      %p598 = por %p596, %p597
      %p599 = scmp.ne.s32.totalorder %s590, %s591
      %p600 = scmp.eq.s32.totalorder %s118, 0
      %p601 = por %p599, %p600
      %p602 = scmp.ne.s32.totalorder %s590, %s591
      %p603 = scmp.eq.s32.totalorder %s119, 1
      %p604 = por %p602, %p603
      %p606 = scmp.ne.s32.totalorder %s591, %s605
      %p607 = scmp.eq.s32.totalorder %s119, 0
      %p608 = por %p606, %p607
      %s610 = sadd.s32 %s609, 1
      %p613 = scmp.eq.s32.totalorder %s113, 1
      %p614 = scmp.ne.s32.totalorder %s609, %s611
      %p615 = scmp.eq.s32.totalorder %s113, 0
      %p616 = por %p614, %p615
      %p617 = scmp.ne.s32.totalorder %s609, %s611
      %p618 = scmp.eq.s32.totalorder %s118, 1
      %p619 = por %p617, %p618
      %p620 = scmp.ne.s32.totalorder %s611, %s612
      %p621 = scmp.eq.s32.totalorder %s118, 0
      %p622 = por %p620, %p621
      %p623 = scmp.ne.s32.totalorder %s611, %s612
      %p624 = scmp.eq.s32.totalorder %s119, 1
      %p625 = por %p623, %p624
      %p627 = scmp.ne.s32.totalorder %s612, %s626
      %p628 = scmp.eq.s32.totalorder %s119, 0
      %p629 = por %p627, %p628
      %s631 = sadd.s32 %s630, 1
      %p634 = scmp.eq.s32.totalorder %s113, 1
      %p635 = scmp.ne.s32.totalorder %s630, %s632
      %p636 = scmp.eq.s32.totalorder %s113, 0
      %p637 = por %p635, %p636
      %p638 = scmp.ne.s32.totalorder %s630, %s632
      %p639 = scmp.eq.s32.totalorder %s118, 1
      %p640 = por %p638, %p639
      %p641 = scmp.ne.s32.totalorder %s632, %s633
      %p642 = scmp.eq.s32.totalorder %s118, 0
      %p643 = por %p641, %p642
      %p644 = scmp.ne.s32.totalorder %s632, %s633
      %p645 = scmp.eq.s32.totalorder %s119, 1
      %p646 = por %p644, %p645
      %p648 = scmp.ne.s32.totalorder %s633, %s647
      %p649 = scmp.eq.s32.totalorder %s119, 0
      %p650 = por %p648, %p649
      %s652 = sadd.s32 %s651, 1
      %p655 = scmp.eq.s32.totalorder %s113, 1
      %p656 = scmp.ne.s32.totalorder %s651, %s653
      %p657 = scmp.eq.s32.totalorder %s113, 0
      %p658 = por %p656, %p657
      %p659 = scmp.ne.s32.totalorder %s651, %s653
      %p660 = scmp.eq.s32.totalorder %s118, 1
      %p661 = por %p659, %p660
      %p662 = scmp.ne.s32.totalorder %s653, %s654
      %p663 = scmp.eq.s32.totalorder %s118, 0
      %p664 = por %p662, %p663
      %p665 = scmp.ne.s32.totalorder %s653, %s654
      %p666 = scmp.eq.s32.totalorder %s119, 1
      %p667 = por %p665, %p666
      %p669 = scmp.ne.s32.totalorder %s654, %s668
      %p670 = scmp.eq.s32.totalorder %s119, 0
      %p671 = por %p669, %p670
      %s673 = sadd.s32 %s672, 1
      %p676 = scmp.eq.s32.totalorder %s113, 1
      %p677 = scmp.ne.s32.totalorder %s672, %s674
      %p678 = scmp.eq.s32.totalorder %s113, 0
      %p679 = por %p677, %p678
      %p680 = scmp.ne.s32.totalorder %s672, %s674
      %p681 = scmp.eq.s32.totalorder %s118, 1
      %p682 = por %p680, %p681
      %p683 = scmp.ne.s32.totalorder %s674, %s675
      %p684 = scmp.eq.s32.totalorder %s118, 0
      %p685 = por %p683, %p684
      %p686 = scmp.ne.s32.totalorder %s674, %s675
      %p687 = scmp.eq.s32.totalorder %s119, 1
      %p688 = por %p686, %p687
      %p690 = scmp.ne.s32.totalorder %s675, %s689
      %p691 = scmp.eq.s32.totalorder %s119, 0
      %p692 = por %p690, %p691
      %s694 = sadd.s32 %s693, 1
      %p697 = scmp.eq.s32.totalorder %s113, 1
      %p698 = scmp.ne.s32.totalorder %s693, %s695
      %p699 = scmp.eq.s32.totalorder %s113, 0
      %p700 = por %p698, %p699
      %p701 = scmp.ne.s32.totalorder %s693, %s695
      %p702 = scmp.eq.s32.totalorder %s118, 1
      %p703 = por %p701, %p702
      %p704 = scmp.ne.s32.totalorder %s695, %s696
      %p705 = scmp.eq.s32.totalorder %s118, 0
      %p706 = por %p704, %p705
      %p707 = scmp.ne.s32.totalorder %s695, %s696
      %p708 = scmp.eq.s32.totalorder %s119, 1
      %p709 = por %p707, %p708
      %p711 = scmp.ne.s32.totalorder %s696, %s710
      %p712 = scmp.eq.s32.totalorder %s119, 0
      %p713 = por %p711, %p712
      %s715 = sadd.s32 %s714, 1
      %p718 = scmp.eq.s32.totalorder %s113, 1
      %p719 = scmp.ne.s32.totalorder %s714, %s716
      %p720 = scmp.eq.s32.totalorder %s113, 0
      %p721 = por %p719, %p720
      %p722 = scmp.ne.s32.totalorder %s714, %s716
      %p723 = scmp.eq.s32.totalorder %s118, 1
      %p724 = por %p722, %p723
      %p725 = scmp.ne.s32.totalorder %s716, %s717
      %p726 = scmp.eq.s32.totalorder %s118, 0
      %p727 = por %p725, %p726
      %p728 = scmp.ne.s32.totalorder %s716, %s717
      %p729 = scmp.eq.s32.totalorder %s119, 1
      %p730 = por %p728, %p729
      %p732 = scmp.ne.s32.totalorder %s717, %s731
      %p733 = scmp.eq.s32.totalorder %s119, 0
      %p734 = por %p732, %p733
      %s736 = sadd.s32 %s735, 1
      %p739 = scmp.eq.s32.totalorder %s113, 1
      %p740 = scmp.ne.s32.totalorder %s735, %s737
      %p741 = scmp.eq.s32.totalorder %s113, 0
      %p742 = por %p740, %p741
      %p743 = scmp.ne.s32.totalorder %s735, %s737
      %p744 = scmp.eq.s32.totalorder %s118, 1
      %p745 = por %p743, %p744
      %p746 = scmp.ne.s32.totalorder %s737, %s738
      %p747 = scmp.eq.s32.totalorder %s118, 0
      %p748 = por %p746, %p747
      %p749 = scmp.ne.s32.totalorder %s737, %s738
      %p750 = scmp.eq.s32.totalorder %s119, 1
      %p751 = por %p749, %p750
      %p753 = scmp.ne.s32.totalorder %s738, %s752
      %p754 = scmp.eq.s32.totalorder %s119, 0
      %p755 = por %p753, %p754
      %s757 = sadd.s32 %s756, 1
      %p760 = scmp.eq.s32.totalorder %s113, 1
      %p761 = scmp.ne.s32.totalorder %s756, %s758
      %p762 = scmp.eq.s32.totalorder %s113, 0
      %p763 = por %p761, %p762
      %p764 = scmp.ne.s32.totalorder %s756, %s758
      %p765 = scmp.eq.s32.totalorder %s118, 1
      %p766 = por %p764, %p765
      %p767 = scmp.ne.s32.totalorder %s758, %s759
      %p768 = scmp.eq.s32.totalorder %s118, 0
      %p769 = por %p767, %p768
      %p770 = scmp.ne.s32.totalorder %s758, %s759
      %p771 = scmp.eq.s32.totalorder %s119, 1
      %p772 = por %p770, %p771
      %p774 = scmp.ne.s32.totalorder %s759, %s773
      %p775 = scmp.eq.s32.totalorder %s119, 0
      %p776 = por %p774, %p775
      %s778 = sadd.s32 %s777, 1
      %p781 = scmp.eq.s32.totalorder %s113, 1
      %p782 = scmp.ne.s32.totalorder %s777, %s779
      %p783 = scmp.eq.s32.totalorder %s113, 0
      %p784 = por %p782, %p783
      %p785 = scmp.ne.s32.totalorder %s777, %s779
      %p786 = scmp.eq.s32.totalorder %s118, 1
      %p787 = por %p785, %p786
      %p788 = scmp.ne.s32.totalorder %s779, %s780
      %p789 = scmp.eq.s32.totalorder %s118, 0
      %p790 = por %p788, %p789
      %p791 = scmp.ne.s32.totalorder %s779, %s780
      %p792 = scmp.eq.s32.totalorder %s119, 1
      %p793 = por %p791, %p792
      %p795 = scmp.ne.s32.totalorder %s780, %s794
      %p796 = scmp.eq.s32.totalorder %s119, 0
      %p797 = por %p795, %p796
      %s799 = sadd.s32 %s798, 1
      %p802 = scmp.eq.s32.totalorder %s113, 1
      %p803 = scmp.ne.s32.totalorder %s798, %s800
      %p804 = scmp.eq.s32.totalorder %s113, 0
      %p805 = por %p803, %p804
      %p806 = scmp.ne.s32.totalorder %s798, %s800
      %p807 = scmp.eq.s32.totalorder %s118, 1
      %p808 = por %p806, %p807
      %p809 = scmp.ne.s32.totalorder %s800, %s801
      %p810 = scmp.eq.s32.totalorder %s118, 0
      %p811 = por %p809, %p810
      %p812 = scmp.ne.s32.totalorder %s800, %s801
      %p813 = scmp.eq.s32.totalorder %s119, 1
      %p814 = por %p812, %p813
      %p816 = scmp.ne.s32.totalorder %s801, %s815
      %p817 = scmp.eq.s32.totalorder %s119, 0
      %p818 = por %p816, %p817
      %s820 = sadd.s32 %s819, 1
      %p823 = scmp.eq.s32.totalorder %s113, 1
      %p824 = scmp.ne.s32.totalorder %s819, %s821
      %p825 = scmp.eq.s32.totalorder %s113, 0
      %p826 = por %p824, %p825
      %p827 = scmp.ne.s32.totalorder %s819, %s821
      %p828 = scmp.eq.s32.totalorder %s118, 1
      %p829 = por %p827, %p828
      %p830 = scmp.ne.s32.totalorder %s821, %s822
      %p831 = scmp.eq.s32.totalorder %s118, 0
      %p832 = por %p830, %p831
      %p833 = scmp.ne.s32.totalorder %s821, %s822
      %p834 = scmp.eq.s32.totalorder %s119, 1
      %p835 = por %p833, %p834
      %p837 = scmp.ne.s32.totalorder %s822, %s836
      %p838 = scmp.eq.s32.totalorder %s119, 0
      %p839 = por %p837, %p838
      %s841 = sadd.s32 %s840, 1
      %p844 = scmp.eq.s32.totalorder %s113, 1
      %p845 = scmp.ne.s32.totalorder %s840, %s842
      %p846 = scmp.eq.s32.totalorder %s113, 0
      %p847 = por %p845, %p846
      %p848 = scmp.ne.s32.totalorder %s840, %s842
      %p849 = scmp.eq.s32.totalorder %s118, 1
      %p850 = por %p848, %p849
      %p851 = scmp.ne.s32.totalorder %s842, %s843
      %p852 = scmp.eq.s32.totalorder %s118, 0
      %p853 = por %p851, %p852
      %p854 = scmp.ne.s32.totalorder %s842, %s843
      %p855 = scmp.eq.s32.totalorder %s119, 1
      %p856 = por %p854, %p855
      %p858 = scmp.ne.s32.totalorder %s843, %s857
      %p859 = scmp.eq.s32.totalorder %s119, 0
      %p860 = por %p858, %p859
      %s862 = sadd.s32 %s861, 1
      %p865 = scmp.eq.s32.totalorder %s113, 1
      %p866 = scmp.ne.s32.totalorder %s861, %s863
      %p867 = scmp.eq.s32.totalorder %s113, 0
      %p868 = por %p866, %p867
      %p869 = scmp.ne.s32.totalorder %s861, %s863
      %p870 = scmp.eq.s32.totalorder %s118, 1
      %p871 = por %p869, %p870
      %p872 = scmp.ne.s32.totalorder %s863, %s864
      %p873 = scmp.eq.s32.totalorder %s118, 0
      %p874 = por %p872, %p873
      %p875 = scmp.ne.s32.totalorder %s863, %s864
      %p876 = scmp.eq.s32.totalorder %s119, 1
      %p877 = por %p875, %p876
      %p879 = scmp.ne.s32.totalorder %s864, %s878
      %p880 = scmp.eq.s32.totalorder %s119, 0
      %p881 = por %p879, %p880
      %s883 = sadd.s32 %s882, 1
      %p886 = scmp.eq.s32.totalorder %s113, 1
      %p887 = scmp.ne.s32.totalorder %s882, %s884
      %p888 = scmp.eq.s32.totalorder %s113, 0
      %p889 = por %p887, %p888
      %p890 = scmp.ne.s32.totalorder %s882, %s884
      %p891 = scmp.eq.s32.totalorder %s118, 1
      %p892 = por %p890, %p891
      %p893 = scmp.ne.s32.totalorder %s884, %s885
      %p894 = scmp.eq.s32.totalorder %s118, 0
      %p895 = por %p893, %p894
      %p896 = scmp.ne.s32.totalorder %s884, %s885
      %p897 = scmp.eq.s32.totalorder %s119, 1
      %p898 = por %p896, %p897
      %p900 = scmp.ne.s32.totalorder %s885, %s899
      %p901 = scmp.eq.s32.totalorder %s119, 0
      %p902 = por %p900, %p901
      %s904 = sadd.s32 %s903, 1
      %p907 = scmp.eq.s32.totalorder %s113, 1
      %p908 = scmp.ne.s32.totalorder %s903, %s905
      %p909 = scmp.eq.s32.totalorder %s113, 0
      %p910 = por %p908, %p909
      %p911 = scmp.ne.s32.totalorder %s903, %s905
      %p912 = scmp.eq.s32.totalorder %s118, 1
      %p913 = por %p911, %p912
      %p914 = scmp.ne.s32.totalorder %s905, %s906
      %p915 = scmp.eq.s32.totalorder %s118, 0
      %p916 = por %p914, %p915
      %p917 = scmp.ne.s32.totalorder %s905, %s906
      %p918 = scmp.eq.s32.totalorder %s119, 1
      %p919 = por %p917, %p918
      %p921 = scmp.ne.s32.totalorder %s906, %s920
      %p922 = scmp.eq.s32.totalorder %s119, 0
      %p923 = por %p921, %p922
      %s925 = sadd.s32 %s924, 1
      %p928 = scmp.eq.s32.totalorder %s113, 1
      %p929 = scmp.ne.s32.totalorder %s924, %s926
      %p930 = scmp.eq.s32.totalorder %s113, 0
      %p931 = por %p929, %p930
      %p932 = scmp.ne.s32.totalorder %s924, %s926
      %p933 = scmp.eq.s32.totalorder %s118, 1
      %p934 = por %p932, %p933
      %p935 = scmp.ne.s32.totalorder %s926, %s927
      %p936 = scmp.eq.s32.totalorder %s118, 0
      %p937 = por %p935, %p936
      %p938 = scmp.ne.s32.totalorder %s926, %s927
      %p939 = scmp.eq.s32.totalorder %s119, 1
      %p940 = por %p938, %p939
      %p942 = scmp.ne.s32.totalorder %s927, %s941
      %p943 = scmp.eq.s32.totalorder %s119, 0
      %p944 = por %p942, %p943
      %s946 = sadd.s32 %s945, 1
      %p949 = scmp.eq.s32.totalorder %s113, 1
      %p950 = scmp.ne.s32.totalorder %s945, %s947
      %p951 = scmp.eq.s32.totalorder %s113, 0
      %p952 = por %p950, %p951
      %p953 = scmp.ne.s32.totalorder %s945, %s947
      %p954 = scmp.eq.s32.totalorder %s118, 1
      %p955 = por %p953, %p954
      %p956 = scmp.ne.s32.totalorder %s947, %s948
      %p957 = scmp.eq.s32.totalorder %s118, 0
      %p958 = por %p956, %p957
      %p959 = scmp.ne.s32.totalorder %s947, %s948
      %p960 = scmp.eq.s32.totalorder %s119, 1
      %p961 = por %p959, %p960
      %p963 = scmp.ne.s32.totalorder %s948, %s962
      %p964 = scmp.eq.s32.totalorder %s119, 0
      %p965 = por %p963, %p964
      %s967 = sadd.s32 %s966, 1
      %p970 = scmp.eq.s32.totalorder %s113, 1
      %p971 = scmp.ne.s32.totalorder %s966, %s968
      %p972 = scmp.eq.s32.totalorder %s113, 0
      %p973 = por %p971, %p972
      %p974 = scmp.ne.s32.totalorder %s966, %s968
      %p975 = scmp.eq.s32.totalorder %s118, 1
      %p976 = por %p974, %p975
      %p977 = scmp.ne.s32.totalorder %s968, %s969
      %p978 = scmp.eq.s32.totalorder %s118, 0
      %p979 = por %p977, %p978
      %p980 = scmp.ne.s32.totalorder %s968, %s969
      %p981 = scmp.eq.s32.totalorder %s119, 1
      %p982 = por %p980, %p981
      %p984 = scmp.ne.s32.totalorder %s969, %s983
      %p985 = scmp.eq.s32.totalorder %s119, 0
      %p986 = por %p984, %p985
      %s988 = sadd.s32 %s987, 1
      %p991 = scmp.eq.s32.totalorder %s113, 1
      %p992 = scmp.ne.s32.totalorder %s987, %s989
      %p993 = scmp.eq.s32.totalorder %s113, 0
      %p994 = por %p992, %p993
      %p995 = scmp.ne.s32.totalorder %s987, %s989
      %p996 = scmp.eq.s32.totalorder %s118, 1
      %p997 = por %p995, %p996
      %p998 = scmp.ne.s32.totalorder %s989, %s990
      %p999 = scmp.eq.s32.totalorder %s118, 0
      %p1000 = por %p998, %p999
      %p1001 = scmp.ne.s32.totalorder %s989, %s990
      %p1002 = scmp.eq.s32.totalorder %s119, 1
      %p1003 = por %p1001, %p1002
      %p1005 = scmp.ne.s32.totalorder %s990, %s1004
      %p1006 = scmp.eq.s32.totalorder %s119, 0
      %p1007 = por %p1005, %p1006
      %s1008 = ssub.s32 %s113, %s120
      %p1009 = scmp.eq.s32.totalorder %s1008, 0
      %s1011 = sadd.s32 %s1010, 1
      %s1012 = scalar_select %p1009, %s1010, %s1011
      %p1015 = pneg %p1009
      %p1016 = scmp.eq.s32.totalorder %s113, 1
      %p1017 = por %p1015, %p1016
      %p1018 = scmp.ne.s32.totalorder %s1010, %s1013
      %p1019 = scmp.eq.s32.totalorder %s113, 0
      %p1020 = por %p1018, %p1019
      %p1021 = scmp.ne.s32.totalorder %s1010, %s1013
      %p1022 = scmp.eq.s32.totalorder %s118, 1
      %p1023 = por %p1021, %p1022
      %p1024 = scmp.ne.s32.totalorder %s1013, %s1014
      %p1025 = scmp.eq.s32.totalorder %s118, 0
      %p1026 = por %p1024, %p1025
      %p1027 = scmp.ne.s32.totalorder %s1013, %s1014
      %p1028 = scmp.eq.s32.totalorder %s119, 1
      %p1029 = por %p1027, %p1028
      %p1031 = scmp.ne.s32.totalorder %s1014, %s1030
      %p1032 = scmp.eq.s32.totalorder %s119, 0
      %p1033 = por %p1031, %p1032
      %p1034 = scmp.le.s32.totalorder 1, %s113
      %p1035 = scmp.lt.s32.totalorder %s113, 3
      %p1036 = pnand %p1034, %p1035
      %p1037 = pneg %p1036
      // Predicated region
      $region9: #{tpu_custom_call.1} parent=5 // pred_check
        _
      $region10: #{tpu_custom_call.1} parent=5 // pred_check_branch
        %1039 = sbr.rel (%p1036) target = $region12
      $region11: #{tpu_custom_call.1} parent=5 // pred_region
        %s1040 = ssub.s32 %s113, 1
        // Predicated region
        $region13: #{tpu_custom_call.1} parent=11 // pred_check
          %p1041 = pneg %p160
        $region14: #{tpu_custom_call.1} parent=11 // pred_check_branch
          %1043 = sbr.rel (%p1041) target = $region16
        $region15: #{tpu_custom_call.1} parent=11 // pred_region
          %1045 = vsyncadd [#allocation6], 0
          %s1047 = sshll.u32 %s3, 4
          %s1048 = int_to_ptr.hbm [resolvable:$true] %s1047
          %s1049 = sshll.u32 [#allocation5], 4
          %s1050 = int_to_ptr.vmem [resolvable:$true] %s1049
          %1052 = dma.hbm_to_vmem [thread:$0]  %s1048, 128, %s1050, [#allocation6]
        $region16: #{tpu_custom_call.1} parent=11 // pred_fallthru
          _
        // Predicated region
        $region17: #{tpu_custom_call.1} parent=11 // pred_check
          %p1053 = pneg %p181
        $region18: #{tpu_custom_call.1} parent=11 // pred_check_branch
          %1055 = sbr.rel (%p1053) target = $region20
        $region19: #{tpu_custom_call.1} parent=11 // pred_region
          %1057 = vsyncadd [#allocation6], 0
          %s1059 = sshll.u32 %s5, 4
          %s1060 = int_to_ptr.hbm [resolvable:$true] %s1059
          %s1061 = sshll.u32 [#allocation7], 4
          %s1062 = int_to_ptr.vmem [resolvable:$true] %s1061
          %1064 = dma.hbm_to_vmem [thread:$0]  %s1060, 16, %s1062, [#allocation6]
        $region20: #{tpu_custom_call.1} parent=11 // pred_fallthru
          _
        // Predicated region
        $region21: #{tpu_custom_call.1} parent=11 // pred_check
          %p1065 = pneg %p202
        $region22: #{tpu_custom_call.1} parent=11 // pred_check_branch
          %1067 = sbr.rel (%p1065) target = $region24
        $region23: #{tpu_custom_call.1} parent=11 // pred_region
          %1069 = vsyncadd [#allocation9], 0
          %s1071 = sshll.u32 %s7, 4
          %s1072 = int_to_ptr.hbm [resolvable:$true] %s1071
          %s1073 = sshll.u32 [#allocation8], 4
          %s1074 = int_to_ptr.vmem [resolvable:$true] %s1073
          %1076 = dma.hbm_to_vmem [thread:$0]  %s1072, 16, %s1074, [#allocation9]
        $region24: #{tpu_custom_call.1} parent=11 // pred_fallthru
          _
        // Predicated region
        $region25: #{tpu_custom_call.1} parent=11 // pred_check
          %p1077 = pneg %p223
        $region26: #{tpu_custom_call.1} parent=11 // pred_check_branch
          %1079 = sbr.rel (%p1077) target = $region28
        $region27: #{tpu_custom_call.1} parent=11 // pred_region
          _
        $region28: #{tpu_custom_call.1} parent=11 // pred_fallthru
          _
        // Predicated region
        $region29: #{tpu_custom_call.1} parent=11 // pred_check
          %p1080 = pneg %p244
        $region30: #{tpu_custom_call.1} parent=11 // pred_check_branch
          %1082 = sbr.rel (%p1080) target = $region32
        $region31: #{tpu_custom_call.1} parent=11 // pred_region
          %1084 = vsyncadd [#allocation9], 0
          %s1086 = sshll.u32 %s11, 4
          %s1087 = int_to_ptr.hbm [resolvable:$true] %s1086
          %s1088 = sshll.u32 [#allocation10], 4
          %s1089 = int_to_ptr.vmem [resolvable:$true] %s1088
          %1091 = dma.hbm_to_vmem [thread:$0]  %s1087, 16, %s1089, [#allocation9]
        $region32: #{tpu_custom_call.1} parent=11 // pred_fallthru
          _
        // Predicated region
        $region33: #{tpu_custom_call.1} parent=11 // pred_check
          %p1092 = pneg %p265
        $region34: #{tpu_custom_call.1} parent=11 // pred_check_branch
          %1094 = sbr.rel (%p1092) target = $region36
        $region35: #{tpu_custom_call.1} parent=11 // pred_region
          %1096 = vsyncadd [#allocation12], 0
          %s1098 = sshll.u32 %s13, 4
          %s1099 = int_to_ptr.hbm [resolvable:$true] %s1098
          %s1100 = sshll.u32 [#allocation11], 4
          %s1101 = int_to_ptr.vmem [resolvable:$true] %s1100
          %1103 = dma.hbm_to_vmem [thread:$0]  %s1099, 64, %s1101, [#allocation12]
        $region36: #{tpu_custom_call.1} parent=11 // pred_fallthru
          _
        // Predicated region
        $region37: #{tpu_custom_call.1} parent=11 // pred_check
          %p1104 = pneg %p286
        $region38: #{tpu_custom_call.1} parent=11 // pred_check_branch
          %1106 = sbr.rel (%p1104) target = $region40
        $region39: #{tpu_custom_call.1} parent=11 // pred_region
          %1108 = vsyncadd [#allocation12], 0
          %s1110 = sshll.u32 %s15, 4
          %s1111 = int_to_ptr.hbm [resolvable:$true] %s1110
          %s1112 = sshll.u32 [#allocation13], 4
          %s1113 = int_to_ptr.vmem [resolvable:$true] %s1112
          %1115 = dma.hbm_to_vmem [thread:$0]  %s1111, 16, %s1113, [#allocation12]
        $region40: #{tpu_custom_call.1} parent=11 // pred_fallthru
          _
        // Predicated region
        $region41: #{tpu_custom_call.1} parent=11 // pred_check
          %p1116 = pneg %p307
        $region42: #{tpu_custom_call.1} parent=11 // pred_check_branch
          %1118 = sbr.rel (%p1116) target = $region44
        $region43: #{tpu_custom_call.1} parent=11 // pred_region
          %1120 = vsyncadd [#allocation15], 0
          %s1122 = sshll.u32 %s17, 4
          %s1123 = int_to_ptr.hbm [resolvable:$true] %s1122
          %s1124 = sshll.u32 [#allocation14], 4
          %s1125 = int_to_ptr.vmem [resolvable:$true] %s1124
          %1127 = dma.hbm_to_vmem [thread:$0]  %s1123, 16, %s1125, [#allocation15]
        $region44: #{tpu_custom_call.1} parent=11 // pred_fallthru
          _
        // Predicated region
        $region45: #{tpu_custom_call.1} parent=11 // pred_check
          %p1128 = pneg %p328
        $region46: #{tpu_custom_call.1} parent=11 // pred_check_branch
          %1130 = sbr.rel (%p1128) target = $region48
        $region47: #{tpu_custom_call.1} parent=11 // pred_region
          %1132 = vsyncadd [#allocation15], 0
          %s1134 = sshll.u32 %s19, 4
          %s1135 = int_to_ptr.hbm [resolvable:$true] %s1134
          %s1136 = sshll.u32 [#allocation16], 4
          %s1137 = int_to_ptr.vmem [resolvable:$true] %s1136
          %1139 = dma.hbm_to_vmem [thread:$0]  %s1135, 16, %s1137, [#allocation15]
        $region48: #{tpu_custom_call.1} parent=11 // pred_fallthru
          _
        // Predicated region
        $region49: #{tpu_custom_call.1} parent=11 // pred_check
          %p1140 = pneg %p349
        $region50: #{tpu_custom_call.1} parent=11 // pred_check_branch
          %1142 = sbr.rel (%p1140) target = $region52
        $region51: #{tpu_custom_call.1} parent=11 // pred_region
          _
        $region52: #{tpu_custom_call.1} parent=11 // pred_fallthru
          _
        // Predicated region
        $region53: #{tpu_custom_call.1} parent=11 // pred_check
          %p1143 = pneg %p370
        $region54: #{tpu_custom_call.1} parent=11 // pred_check_branch
          %1145 = sbr.rel (%p1143) target = $region56
        $region55: #{tpu_custom_call.1} parent=11 // pred_region
          %1147 = vsyncadd [#allocation18], 0
          %s1148 = sshll.u32 %s23, 4
          %s1149 = int_to_ptr.hbm [resolvable:$true] %s1148
          %s1150 = sshll.u32 [#allocation17], 4
          %s1151 = int_to_ptr.vmem [resolvable:$true] %s1150
          %1156 = dma.hbm_to_vmem [thread:$0]  %s1149, 512, %s1151, [#allocation18], 128, 128, 8
        $region56: #{tpu_custom_call.1} parent=11 // pred_fallthru
          _
        // Predicated region
        $region57: #{tpu_custom_call.1} parent=11 // pred_check
          %p1157 = pneg %p391
        $region58: #{tpu_custom_call.1} parent=11 // pred_check_branch
          %1159 = sbr.rel (%p1157) target = $region60
        $region59: #{tpu_custom_call.1} parent=11 // pred_region
          %1161 = vsyncadd [#allocation18], 0
          %s1162 = sshll.u32 %s25, 4
          %s1163 = int_to_ptr.hbm [resolvable:$true] %s1162
          %s1164 = sshll.u32 [#allocation19], 4
          %s1165 = int_to_ptr.vmem [resolvable:$true] %s1164
          %1170 = dma.hbm_to_vmem [thread:$0]  %s1163, 512, %s1165, [#allocation18], 128, 128, 8
        $region60: #{tpu_custom_call.1} parent=11 // pred_fallthru
          _
        // Predicated region
        $region61: #{tpu_custom_call.1} parent=11 // pred_check
          %p1171 = pneg %p412
        $region62: #{tpu_custom_call.1} parent=11 // pred_check_branch
          %1173 = sbr.rel (%p1171) target = $region64
        $region63: #{tpu_custom_call.1} parent=11 // pred_region
          %1175 = vsyncadd [#allocation21], 0
          %s1177 = sshll.u32 %s27, 4
          %s1178 = int_to_ptr.hbm [resolvable:$true] %s1177
          %s1179 = sshll.u32 [#allocation20], 4
          %s1180 = int_to_ptr.vmem [resolvable:$true] %s1179
          %1182 = dma.hbm_to_vmem [thread:$0]  %s1178, 16, %s1180, [#allocation21]
        $region64: #{tpu_custom_call.1} parent=11 // pred_fallthru
          _
        // Predicated region
        $region65: #{tpu_custom_call.1} parent=11 // pred_check
          %p1183 = pneg %p433
        $region66: #{tpu_custom_call.1} parent=11 // pred_check_branch
          %1185 = sbr.rel (%p1183) target = $region68
        $region67: #{tpu_custom_call.1} parent=11 // pred_region
          %1187 = vsyncadd [#allocation21], 0
          %s1189 = sshll.u32 %s29, 4
          %s1190 = int_to_ptr.hbm [resolvable:$true] %s1189
          %s1191 = sshll.u32 [#allocation22], 4
          %s1192 = int_to_ptr.vmem [resolvable:$true] %s1191
          %1194 = dma.hbm_to_vmem [thread:$0]  %s1190, 16, %s1192, [#allocation21]
        $region68: #{tpu_custom_call.1} parent=11 // pred_fallthru
          _
        // Predicated region
        $region69: #{tpu_custom_call.1} parent=11 // pred_check
          %p1195 = pneg %p454
        $region70: #{tpu_custom_call.1} parent=11 // pred_check_branch
          %1197 = sbr.rel (%p1195) target = $region72
        $region71: #{tpu_custom_call.1} parent=11 // pred_region
          %1199 = vsyncadd [#allocation24], 0
          %s1201 = sshll.u32 %s31, 4
          %s1202 = int_to_ptr.hbm [resolvable:$true] %s1201
          %s1203 = sshll.u32 [#allocation23], 4
          %s1204 = int_to_ptr.vmem [resolvable:$true] %s1203
          %1206 = dma.hbm_to_vmem [thread:$0]  %s1202, 16, %s1204, [#allocation24]
        $region72: #{tpu_custom_call.1} parent=11 // pred_fallthru
          _
        // Predicated region
        $region73: #{tpu_custom_call.1} parent=11 // pred_check
          %p1207 = pneg %p475
        $region74: #{tpu_custom_call.1} parent=11 // pred_check_branch
          %1209 = sbr.rel (%p1207) target = $region76
        $region75: #{tpu_custom_call.1} parent=11 // pred_region
          %1211 = vsyncadd [#allocation24], 0
          %s1212 = sshll.u32 %s33, 4
          %s1213 = int_to_ptr.hbm [resolvable:$true] %s1212
          %s1214 = sshll.u32 [#allocation25], 4
          %s1215 = int_to_ptr.vmem [resolvable:$true] %s1214
          %1220 = dma.hbm_to_vmem [thread:$0]  %s1213, 512, %s1215, [#allocation24], 128, 128, 8
        $region76: #{tpu_custom_call.1} parent=11 // pred_fallthru
          _
        // Predicated region
        $region77: #{tpu_custom_call.1} parent=11 // pred_check
          %p1221 = pneg %p496
        $region78: #{tpu_custom_call.1} parent=11 // pred_check_branch
          %1223 = sbr.rel (%p1221) target = $region80
        $region79: #{tpu_custom_call.1} parent=11 // pred_region
          %1225 = vsyncadd [#allocation27], 0
          %s1227 = sshll.u32 %s35, 4
          %s1228 = int_to_ptr.hbm [resolvable:$true] %s1227
          %s1229 = sshll.u32 [#allocation26], 4
          %s1230 = int_to_ptr.vmem [resolvable:$true] %s1229
          %1232 = dma.hbm_to_vmem [thread:$0]  %s1228, 16, %s1230, [#allocation27]
        $region80: #{tpu_custom_call.1} parent=11 // pred_fallthru
          _
        // Predicated region
        $region81: #{tpu_custom_call.1} parent=11 // pred_check
          %p1233 = pneg %p517
        $region82: #{tpu_custom_call.1} parent=11 // pred_check_branch
          %1235 = sbr.rel (%p1233) target = $region84
        $region83: #{tpu_custom_call.1} parent=11 // pred_region
          %1237 = vsyncadd [#allocation27], 0
          %s1239 = sshll.u32 %s37, 4
          %s1240 = int_to_ptr.hbm [resolvable:$true] %s1239
          %s1241 = sshll.u32 [#allocation28], 4
          %s1242 = int_to_ptr.vmem [resolvable:$true] %s1241
          %1244 = dma.hbm_to_vmem [thread:$0]  %s1240, 16, %s1242, [#allocation27]
        $region84: #{tpu_custom_call.1} parent=11 // pred_fallthru
          _
        // Predicated region
        $region85: #{tpu_custom_call.1} parent=11 // pred_check
          %p1245 = pneg %p538
        $region86: #{tpu_custom_call.1} parent=11 // pred_check_branch
          %1247 = sbr.rel (%p1245) target = $region88
        $region87: #{tpu_custom_call.1} parent=11 // pred_region
          %1249 = vsyncadd [#allocation30], 0
          %s1251 = sshll.u32 %s39, 4
          %s1252 = int_to_ptr.hbm [resolvable:$true] %s1251
          %s1253 = sshll.u32 [#allocation29], 4
          %s1254 = int_to_ptr.vmem [resolvable:$true] %s1253
          %1256 = dma.hbm_to_vmem [thread:$0]  %s1252, 16, %s1254, [#allocation30]
        $region88: #{tpu_custom_call.1} parent=11 // pred_fallthru
          _
        // Predicated region
        $region89: #{tpu_custom_call.1} parent=11 // pred_check
          %p1257 = pneg %p559
        $region90: #{tpu_custom_call.1} parent=11 // pred_check_branch
          %1259 = sbr.rel (%p1257) target = $region92
        $region91: #{tpu_custom_call.1} parent=11 // pred_region
          %1261 = vsyncadd [#allocation30], 0
          %s1263 = sshll.u32 %s41, 4
          %s1264 = int_to_ptr.hbm [resolvable:$true] %s1263
          %s1265 = sshll.u32 [#allocation31], 4
          %s1266 = int_to_ptr.vmem [resolvable:$true] %s1265
          %1268 = dma.hbm_to_vmem [thread:$0]  %s1264, 128, %s1266, [#allocation30]
        $region92: #{tpu_custom_call.1} parent=11 // pred_fallthru
          _
        // Predicated region
        $region93: #{tpu_custom_call.1} parent=11 // pred_check
          %p1269 = pneg %p580
        $region94: #{tpu_custom_call.1} parent=11 // pred_check_branch
          %1271 = sbr.rel (%p1269) target = $region96
        $region95: #{tpu_custom_call.1} parent=11 // pred_region
          %1273 = vsyncadd [#allocation33], 0
          %s1275 = sshll.u32 %s43, 4
          %s1276 = int_to_ptr.hbm [resolvable:$true] %s1275
          %s1277 = sshll.u32 [#allocation32], 4
          %s1278 = int_to_ptr.vmem [resolvable:$true] %s1277
          %1280 = dma.hbm_to_vmem [thread:$0]  %s1276, 128, %s1278, [#allocation33]
        $region96: #{tpu_custom_call.1} parent=11 // pred_fallthru
          _
        // Predicated region
        $region97: #{tpu_custom_call.1} parent=11 // pred_check
          %p1281 = pneg %p601
        $region98: #{tpu_custom_call.1} parent=11 // pred_check_branch
          %1283 = sbr.rel (%p1281) target = $region100
        $region99: #{tpu_custom_call.1} parent=11 // pred_region
          %1285 = vsyncadd [#allocation33], 0
          %s1287 = sshll.u32 %s45, 4
          %s1288 = int_to_ptr.hbm [resolvable:$true] %s1287
          %s1289 = sshll.u32 [#allocation34], 4
          %s1290 = int_to_ptr.vmem [resolvable:$true] %s1289
          %1292 = dma.hbm_to_vmem [thread:$0]  %s1288, 128, %s1290, [#allocation33]
        $region100: #{tpu_custom_call.1} parent=11 // pred_fallthru
          _
        // Predicated region
        $region101: #{tpu_custom_call.1} parent=11 // pred_check
          %p1293 = pneg %p622
        $region102: #{tpu_custom_call.1} parent=11 // pred_check_branch
          %1295 = sbr.rel (%p1293) target = $region104
        $region103: #{tpu_custom_call.1} parent=11 // pred_region
          %1297 = vsyncadd [#allocation36], 0
          %s1299 = sshll.u32 %s47, 4
          %s1300 = int_to_ptr.hbm [resolvable:$true] %s1299
          %s1301 = sshll.u32 [#allocation35], 4
          %s1302 = int_to_ptr.vmem [resolvable:$true] %s1301
          %1304 = dma.hbm_to_vmem [thread:$0]  %s1300, 16, %s1302, [#allocation36]
        $region104: #{tpu_custom_call.1} parent=11 // pred_fallthru
          _
        // Predicated region
        $region105: #{tpu_custom_call.1} parent=11 // pred_check
          %p1305 = pneg %p643
        $region106: #{tpu_custom_call.1} parent=11 // pred_check_branch
          %1307 = sbr.rel (%p1305) target = $region108
        $region107: #{tpu_custom_call.1} parent=11 // pred_region
          %1309 = vsyncadd [#allocation36], 0
          %s1311 = sshll.u32 %s49, 4
          %s1312 = int_to_ptr.hbm [resolvable:$true] %s1311
          %s1313 = sshll.u32 [#allocation37], 4
          %s1314 = int_to_ptr.vmem [resolvable:$true] %s1313
          %1316 = dma.hbm_to_vmem [thread:$0]  %s1312, 16, %s1314, [#allocation36]
        $region108: #{tpu_custom_call.1} parent=11 // pred_fallthru
          _
        // Predicated region
        $region109: #{tpu_custom_call.1} parent=11 // pred_check
          %p1317 = pneg %p664
        $region110: #{tpu_custom_call.1} parent=11 // pred_check_branch
          %1319 = sbr.rel (%p1317) target = $region112
        $region111: #{tpu_custom_call.1} parent=11 // pred_region
          %1321 = vsyncadd [#allocation39], 0
          %s1323 = sshll.u32 %s51, 4
          %s1324 = int_to_ptr.hbm [resolvable:$true] %s1323
          %s1325 = sshll.u32 [#allocation38], 4
          %s1326 = int_to_ptr.vmem [resolvable:$true] %s1325
          %1328 = dma.hbm_to_vmem [thread:$0]  %s1324, 16, %s1326, [#allocation39]
        $region112: #{tpu_custom_call.1} parent=11 // pred_fallthru
          _
        // Predicated region
        $region113: #{tpu_custom_call.1} parent=11 // pred_check
          %p1329 = pneg %p685
        $region114: #{tpu_custom_call.1} parent=11 // pred_check_branch
          %1331 = sbr.rel (%p1329) target = $region116
        $region115: #{tpu_custom_call.1} parent=11 // pred_region
          %1333 = vsyncadd [#allocation39], 0
          %s1335 = sshll.u32 %s53, 4
          %s1336 = int_to_ptr.hbm [resolvable:$true] %s1335
          %s1337 = sshll.u32 [#allocation40], 4
          %s1338 = int_to_ptr.vmem [resolvable:$true] %s1337
          %1340 = dma.hbm_to_vmem [thread:$0]  %s1336, 128, %s1338, [#allocation39]
        $region116: #{tpu_custom_call.1} parent=11 // pred_fallthru
          _
        // Predicated region
        $region117: #{tpu_custom_call.1} parent=11 // pred_check
          %p1341 = pneg %p706
        $region118: #{tpu_custom_call.1} parent=11 // pred_check_branch
          %1343 = sbr.rel (%p1341) target = $region120
        $region119: #{tpu_custom_call.1} parent=11 // pred_region
          %1345 = vsyncadd [#allocation42], 0
          %s1347 = sshll.u32 %s55, 4
          %s1348 = int_to_ptr.hbm [resolvable:$true] %s1347
          %s1349 = sshll.u32 [#allocation41], 4
          %s1350 = int_to_ptr.vmem [resolvable:$true] %s1349
          %1352 = dma.hbm_to_vmem [thread:$0]  %s1348, 16, %s1350, [#allocation42]
        $region120: #{tpu_custom_call.1} parent=11 // pred_fallthru
          _
        // Predicated region
        $region121: #{tpu_custom_call.1} parent=11 // pred_check
          %p1353 = pneg %p727
        $region122: #{tpu_custom_call.1} parent=11 // pred_check_branch
          %1355 = sbr.rel (%p1353) target = $region124
        $region123: #{tpu_custom_call.1} parent=11 // pred_region
          %1357 = vsyncadd [#allocation42], 0
          %s1359 = sshll.u32 %s57, 4
          %s1360 = int_to_ptr.hbm [resolvable:$true] %s1359
          %s1361 = sshll.u32 [#allocation43], 4
          %s1362 = int_to_ptr.vmem [resolvable:$true] %s1361
          %1364 = dma.hbm_to_vmem [thread:$0]  %s1360, 16, %s1362, [#allocation42]
        $region124: #{tpu_custom_call.1} parent=11 // pred_fallthru
          _
        // Predicated region
        $region125: #{tpu_custom_call.1} parent=11 // pred_check
          %p1365 = pneg %p748
        $region126: #{tpu_custom_call.1} parent=11 // pred_check_branch
          %1367 = sbr.rel (%p1365) target = $region128
        $region127: #{tpu_custom_call.1} parent=11 // pred_region
          %1369 = vsyncadd [#allocation45], 0
          %s1371 = sshll.u32 %s59, 4
          %s1372 = int_to_ptr.hbm [resolvable:$true] %s1371
          %s1373 = sshll.u32 [#allocation44], 4
          %s1374 = int_to_ptr.vmem [resolvable:$true] %s1373
          %1376 = dma.hbm_to_vmem [thread:$0]  %s1372, 16, %s1374, [#allocation45]
        $region128: #{tpu_custom_call.1} parent=11 // pred_fallthru
          _
        // Predicated region
        $region129: #{tpu_custom_call.1} parent=11 // pred_check
          %p1377 = pneg %p769
        $region130: #{tpu_custom_call.1} parent=11 // pred_check_branch
          %1379 = sbr.rel (%p1377) target = $region132
        $region131: #{tpu_custom_call.1} parent=11 // pred_region
          _
        $region132: #{tpu_custom_call.1} parent=11 // pred_fallthru
          _
        // Predicated region
        $region133: #{tpu_custom_call.1} parent=11 // pred_check
          %p1380 = pneg %p790
        $region134: #{tpu_custom_call.1} parent=11 // pred_check_branch
          %1382 = sbr.rel (%p1380) target = $region136
        $region135: #{tpu_custom_call.1} parent=11 // pred_region
          %1384 = vsyncadd [#allocation45], 0
          %s1386 = sshll.u32 %s63, 4
          %s1387 = int_to_ptr.hbm [resolvable:$true] %s1386
          %s1388 = sshll.u32 [#allocation46], 4
          %s1389 = int_to_ptr.vmem [resolvable:$true] %s1388
          %1391 = dma.hbm_to_vmem [thread:$0]  %s1387, 16, %s1389, [#allocation45]
        $region136: #{tpu_custom_call.1} parent=11 // pred_fallthru
          _
        // Predicated region
        $region137: #{tpu_custom_call.1} parent=11 // pred_check
          %p1392 = pneg %p811
        $region138: #{tpu_custom_call.1} parent=11 // pred_check_branch
          %1394 = sbr.rel (%p1392) target = $region140
        $region139: #{tpu_custom_call.1} parent=11 // pred_region
          %1396 = vsyncadd [#allocation48], 0
          %s1397 = sshll.u32 %s65, 4
          %s1398 = int_to_ptr.hbm [resolvable:$true] %s1397
          %s1399 = sshll.u32 [#allocation47], 4
          %s1400 = int_to_ptr.vmem [resolvable:$true] %s1399
          %1405 = dma.hbm_to_vmem [thread:$0]  %s1398, 512, %s1400, [#allocation48], 128, 128, 8
        $region140: #{tpu_custom_call.1} parent=11 // pred_fallthru
          _
        // Predicated region
        $region141: #{tpu_custom_call.1} parent=11 // pred_check
          %p1406 = pneg %p832
        $region142: #{tpu_custom_call.1} parent=11 // pred_check_branch
          %1408 = sbr.rel (%p1406) target = $region144
        $region143: #{tpu_custom_call.1} parent=11 // pred_region
          %1410 = vsyncadd [#allocation48], 0
          %s1412 = sshll.u32 %s67, 4
          %s1413 = int_to_ptr.hbm [resolvable:$true] %s1412
          %s1414 = sshll.u32 [#allocation49], 4
          %s1415 = int_to_ptr.vmem [resolvable:$true] %s1414
          %1417 = dma.hbm_to_vmem [thread:$0]  %s1413, 16, %s1415, [#allocation48]
        $region144: #{tpu_custom_call.1} parent=11 // pred_fallthru
          _
        // Predicated region
        $region145: #{tpu_custom_call.1} parent=11 // pred_check
          %p1418 = pneg %p853
        $region146: #{tpu_custom_call.1} parent=11 // pred_check_branch
          %1420 = sbr.rel (%p1418) target = $region148
        $region147: #{tpu_custom_call.1} parent=11 // pred_region
          _
        $region148: #{tpu_custom_call.1} parent=11 // pred_fallthru
          _
        // Predicated region
        $region149: #{tpu_custom_call.1} parent=11 // pred_check
          %p1421 = pneg %p874
        $region150: #{tpu_custom_call.1} parent=11 // pred_check_branch
          %1423 = sbr.rel (%p1421) target = $region152
        $region151: #{tpu_custom_call.1} parent=11 // pred_region
          _
        $region152: #{tpu_custom_call.1} parent=11 // pred_fallthru
          _
        // Predicated region
        $region153: #{tpu_custom_call.1} parent=11 // pred_check
          %p1424 = pneg %p895
        $region154: #{tpu_custom_call.1} parent=11 // pred_check_branch
          %1426 = sbr.rel (%p1424) target = $region156
        $region155: #{tpu_custom_call.1} parent=11 // pred_region
          _
        $region156: #{tpu_custom_call.1} parent=11 // pred_fallthru
          _
        // Predicated region
        $region157: #{tpu_custom_call.1} parent=11 // pred_check
          %p1427 = pneg %p916
        $region158: #{tpu_custom_call.1} parent=11 // pred_check_branch
          %1429 = sbr.rel (%p1427) target = $region160
        $region159: #{tpu_custom_call.1} parent=11 // pred_region
          _
        $region160: #{tpu_custom_call.1} parent=11 // pred_fallthru
          _
        // Predicated region
        $region161: #{tpu_custom_call.1} parent=11 // pred_check
          %p1430 = pneg %p937
        $region162: #{tpu_custom_call.1} parent=11 // pred_check_branch
          %1432 = sbr.rel (%p1430) target = $region164
        $region163: #{tpu_custom_call.1} parent=11 // pred_region
          %1434 = vsyncadd [#allocation51], 0
          %s1435 = sshll.u32 %s77, 4
          %s1436 = int_to_ptr.hbm [resolvable:$true] %s1435
          %s1437 = sshll.u32 [#allocation50], 4
          %s1438 = int_to_ptr.vmem [resolvable:$true] %s1437
          %1443 = dma.hbm_to_vmem [thread:$0]  %s1436, 512, %s1438, [#allocation51], 128, 128, 8
        $region164: #{tpu_custom_call.1} parent=11 // pred_fallthru
          _
        // Predicated region
        $region165: #{tpu_custom_call.1} parent=11 // pred_check
          %p1444 = pneg %p958
        $region166: #{tpu_custom_call.1} parent=11 // pred_check_branch
          %1446 = sbr.rel (%p1444) target = $region168
        $region167: #{tpu_custom_call.1} parent=11 // pred_region
          _
        $region168: #{tpu_custom_call.1} parent=11 // pred_fallthru
          _
        // Predicated region
        $region169: #{tpu_custom_call.1} parent=11 // pred_check
          %p1447 = pneg %p979
        $region170: #{tpu_custom_call.1} parent=11 // pred_check_branch
          %1449 = sbr.rel (%p1447) target = $region172
        $region171: #{tpu_custom_call.1} parent=11 // pred_region
          _
        $region172: #{tpu_custom_call.1} parent=11 // pred_fallthru
          _
        // Predicated region
        $region173: #{tpu_custom_call.1} parent=11 // pred_check
          %p1450 = pneg %p1000
        $region174: #{tpu_custom_call.1} parent=11 // pred_check_branch
          %1452 = sbr.rel (%p1450) target = $region176
        $region175: #{tpu_custom_call.1} parent=11 // pred_region
          _
        $region176: #{tpu_custom_call.1} parent=11 // pred_fallthru
          _
      $region12: #{tpu_custom_call.1} parent=5 // pred_fallthru
        _
      %p1453 = scmp.lt.s32.totalorder %s113, 2
      // Predicated region
      $region177: #{tpu_custom_call.1} parent=5 // pred_check
        %p1454 = pneg %p1453
      $region178: #{tpu_custom_call.1} parent=5 // pred_check_branch
        %1456 = sbr.rel (%p1454) target = $region180
      $region179: #{tpu_custom_call.1} parent=5 // pred_region
        // Predicated region
        $region181: #{tpu_custom_call.1} parent=179 // pred_check
          %p1457 = pneg %p133
        $region182: #{tpu_custom_call.1} parent=179 // pred_check_branch
          %1459 = sbr.rel (%p1457) target = $region184
        $region183: #{tpu_custom_call.1} parent=179 // pred_region
          %s1460 = sand.u32 %s123, 1
          %s1461 = scalar_lea.sflag [#allocation3], %s1460
          %s1462 = sand.u32 %s123, 1
          %s1463 = smul.addr %s1462, 8
          %s1464 = scalar_lea.vmem [#allocation2], %s1463
          %1466 = vsyncadd %s1461, 0
          %s1467 = smul.addr %s113, 8
          %s1468 = scalar_lea.hbm %s1, %s1467
          %s1470 = sshll.u32 %s1468, 4
          %s1471 = int_to_ptr.hbm [resolvable:$true] %s1470
          %s1472 = sshll.u32 %s1464, 4
          %s1473 = int_to_ptr.vmem [resolvable:$true] %s1472
          %1475 = dma.hbm_to_vmem [thread:$0]  %s1471, 128, %s1473, %s1461
        $region184: #{tpu_custom_call.1} parent=179 // pred_fallthru
          _
      $region180: #{tpu_custom_call.1} parent=5 // pred_fallthru
        _
      %p1476 = scmp.le.s32.totalorder 1, %s113
      %p1477 = scmp.lt.s32.totalorder %s113, 3
      %p1478 = pnand %p1476, %p1477
      %p1479 = pneg %p1478
      // Predicated region
      $region185: #{tpu_custom_call.1} parent=5 // pred_check
        _
      $region186: #{tpu_custom_call.1} parent=5 // pred_check_branch
        %1481 = sbr.rel (%p1478) target = $region188
      $region187: #{tpu_custom_call.1} parent=5 // pred_region
        %s1482 = ssub.s32 %s113, 1
        %s1483 = sand.u32 %s126, 1
        %s1484 = scalar_lea.sflag [#allocation3], %s1483
        %s1485 = sand.u32 %s126, 1
        %s1486 = smul.addr %s1485, 8
        %s1487 = scalar_lea.vmem [#allocation2], %s1486
        // Predicated region
        $region189: #{tpu_custom_call.1} parent=187 // pred_check
          %p1488 = pneg %p139
        $region190: #{tpu_custom_call.1} parent=187 // pred_check_branch
          %1490 = sbr.rel (%p1488) target = $region192
        $region191: #{tpu_custom_call.1} parent=187 // pred_region
          %1492 = dma.done %s1484, 128
        $region192: #{tpu_custom_call.1} parent=187 // pred_fallthru
          _
        // Predicated region
        $region193: #{tpu_custom_call.1} parent=187 // pred_check
          %p1493 = pneg %p160
        $region194: #{tpu_custom_call.1} parent=187 // pred_check_branch
          %1495 = sbr.rel (%p1493) target = $region196
        $region195: #{tpu_custom_call.1} parent=187 // pred_region
          %1497 = dma.done [#allocation6], 128
        $region196: #{tpu_custom_call.1} parent=187 // pred_fallthru
          _
        // Predicated region
        $region197: #{tpu_custom_call.1} parent=187 // pred_check
          %p1498 = pneg %p181
        $region198: #{tpu_custom_call.1} parent=187 // pred_check_branch
          %1500 = sbr.rel (%p1498) target = $region200
        $region199: #{tpu_custom_call.1} parent=187 // pred_region
          %1502 = dma.done [#allocation6], 16
        $region200: #{tpu_custom_call.1} parent=187 // pred_fallthru
          _
        // Predicated region
        $region201: #{tpu_custom_call.1} parent=187 // pred_check
          %p1503 = pneg %p202
        $region202: #{tpu_custom_call.1} parent=187 // pred_check_branch
          %1505 = sbr.rel (%p1503) target = $region204
        $region203: #{tpu_custom_call.1} parent=187 // pred_region
          %1507 = dma.done [#allocation9], 16
        $region204: #{tpu_custom_call.1} parent=187 // pred_fallthru
          _
        // Predicated region
        $region205: #{tpu_custom_call.1} parent=187 // pred_check
          %p1508 = pneg %p244
        $region206: #{tpu_custom_call.1} parent=187 // pred_check_branch
          %1510 = sbr.rel (%p1508) target = $region208
        $region207: #{tpu_custom_call.1} parent=187 // pred_region
          %1512 = dma.done [#allocation9], 16
        $region208: #{tpu_custom_call.1} parent=187 // pred_fallthru
          _
        // Predicated region
        $region209: #{tpu_custom_call.1} parent=187 // pred_check
          %p1513 = pneg %p265
        $region210: #{tpu_custom_call.1} parent=187 // pred_check_branch
          %1515 = sbr.rel (%p1513) target = $region212
        $region211: #{tpu_custom_call.1} parent=187 // pred_region
          %1517 = dma.done [#allocation12], 64
        $region212: #{tpu_custom_call.1} parent=187 // pred_fallthru
          _
        // Predicated region
        $region213: #{tpu_custom_call.1} parent=187 // pred_check
          %p1518 = pneg %p286
        $region214: #{tpu_custom_call.1} parent=187 // pred_check_branch
          %1520 = sbr.rel (%p1518) target = $region216
        $region215: #{tpu_custom_call.1} parent=187 // pred_region
          %1522 = dma.done [#allocation12], 16
        $region216: #{tpu_custom_call.1} parent=187 // pred_fallthru
          _
        // Predicated region
        $region217: #{tpu_custom_call.1} parent=187 // pred_check
          %p1523 = pneg %p307
        $region218: #{tpu_custom_call.1} parent=187 // pred_check_branch
          %1525 = sbr.rel (%p1523) target = $region220
        $region219: #{tpu_custom_call.1} parent=187 // pred_region
          %1527 = dma.done [#allocation15], 16
        $region220: #{tpu_custom_call.1} parent=187 // pred_fallthru
          _
        // Predicated region
        $region221: #{tpu_custom_call.1} parent=187 // pred_check
          %p1528 = pneg %p328
        $region222: #{tpu_custom_call.1} parent=187 // pred_check_branch
          %1530 = sbr.rel (%p1528) target = $region224
        $region223: #{tpu_custom_call.1} parent=187 // pred_region
          %1532 = dma.done [#allocation15], 16
        $region224: #{tpu_custom_call.1} parent=187 // pred_fallthru
          _
        // Predicated region
        $region225: #{tpu_custom_call.1} parent=187 // pred_check
          %p1533 = pneg %p370
        $region226: #{tpu_custom_call.1} parent=187 // pred_check_branch
          %1535 = sbr.rel (%p1533) target = $region228
        $region227: #{tpu_custom_call.1} parent=187 // pred_region
          %1537 = dma.done [#allocation18], 512
        $region228: #{tpu_custom_call.1} parent=187 // pred_fallthru
          _
        // Predicated region
        $region229: #{tpu_custom_call.1} parent=187 // pred_check
          %p1538 = pneg %p391
        $region230: #{tpu_custom_call.1} parent=187 // pred_check_branch
          %1540 = sbr.rel (%p1538) target = $region232
        $region231: #{tpu_custom_call.1} parent=187 // pred_region
          %1542 = dma.done [#allocation18], 512
        $region232: #{tpu_custom_call.1} parent=187 // pred_fallthru
          _
        // Predicated region
        $region233: #{tpu_custom_call.1} parent=187 // pred_check
          %p1543 = pneg %p412
        $region234: #{tpu_custom_call.1} parent=187 // pred_check_branch
          %1545 = sbr.rel (%p1543) target = $region236
        $region235: #{tpu_custom_call.1} parent=187 // pred_region
          %1547 = dma.done [#allocation21], 16
        $region236: #{tpu_custom_call.1} parent=187 // pred_fallthru
          _
        // Predicated region
        $region237: #{tpu_custom_call.1} parent=187 // pred_check
          %p1548 = pneg %p433
        $region238: #{tpu_custom_call.1} parent=187 // pred_check_branch
          %1550 = sbr.rel (%p1548) target = $region240
        $region239: #{tpu_custom_call.1} parent=187 // pred_region
          %1552 = dma.done [#allocation21], 16
        $region240: #{tpu_custom_call.1} parent=187 // pred_fallthru
          _
        // Predicated region
        $region241: #{tpu_custom_call.1} parent=187 // pred_check
          %p1553 = pneg %p454
        $region242: #{tpu_custom_call.1} parent=187 // pred_check_branch
          %1555 = sbr.rel (%p1553) target = $region244
        $region243: #{tpu_custom_call.1} parent=187 // pred_region
          %1557 = dma.done [#allocation24], 16
        $region244: #{tpu_custom_call.1} parent=187 // pred_fallthru
          _
        // Predicated region
        $region245: #{tpu_custom_call.1} parent=187 // pred_check
          %p1558 = pneg %p475
        $region246: #{tpu_custom_call.1} parent=187 // pred_check_branch
          %1560 = sbr.rel (%p1558) target = $region248
        $region247: #{tpu_custom_call.1} parent=187 // pred_region
          %1562 = dma.done [#allocation24], 512
        $region248: #{tpu_custom_call.1} parent=187 // pred_fallthru
          _
        // Predicated region
        $region249: #{tpu_custom_call.1} parent=187 // pred_check
          %p1563 = pneg %p496
        $region250: #{tpu_custom_call.1} parent=187 // pred_check_branch
          %1565 = sbr.rel (%p1563) target = $region252
        $region251: #{tpu_custom_call.1} parent=187 // pred_region
          %1567 = dma.done [#allocation27], 16
        $region252: #{tpu_custom_call.1} parent=187 // pred_fallthru
          _
        // Predicated region
        $region253: #{tpu_custom_call.1} parent=187 // pred_check
          %p1568 = pneg %p517
        $region254: #{tpu_custom_call.1} parent=187 // pred_check_branch
          %1570 = sbr.rel (%p1568) target = $region256
        $region255: #{tpu_custom_call.1} parent=187 // pred_region
          %1572 = dma.done [#allocation27], 16
        $region256: #{tpu_custom_call.1} parent=187 // pred_fallthru
          _
        // Predicated region
        $region257: #{tpu_custom_call.1} parent=187 // pred_check
          %p1573 = pneg %p538
        $region258: #{tpu_custom_call.1} parent=187 // pred_check_branch
          %1575 = sbr.rel (%p1573) target = $region260
        $region259: #{tpu_custom_call.1} parent=187 // pred_region
          %1577 = dma.done [#allocation30], 16
        $region260: #{tpu_custom_call.1} parent=187 // pred_fallthru
          _
        // Predicated region
        $region261: #{tpu_custom_call.1} parent=187 // pred_check
          %p1578 = pneg %p559
        $region262: #{tpu_custom_call.1} parent=187 // pred_check_branch
          %1580 = sbr.rel (%p1578) target = $region264
        $region263: #{tpu_custom_call.1} parent=187 // pred_region
          %1582 = dma.done [#allocation30], 128
        $region264: #{tpu_custom_call.1} parent=187 // pred_fallthru
          _
        // Predicated region
        $region265: #{tpu_custom_call.1} parent=187 // pred_check
          %p1583 = pneg %p580
        $region266: #{tpu_custom_call.1} parent=187 // pred_check_branch
          %1585 = sbr.rel (%p1583) target = $region268
        $region267: #{tpu_custom_call.1} parent=187 // pred_region
          %1587 = dma.done [#allocation33], 128
        $region268: #{tpu_custom_call.1} parent=187 // pred_fallthru
          _
        // Predicated region
        $region269: #{tpu_custom_call.1} parent=187 // pred_check
          %p1588 = pneg %p601
        $region270: #{tpu_custom_call.1} parent=187 // pred_check_branch
          %1590 = sbr.rel (%p1588) target = $region272
        $region271: #{tpu_custom_call.1} parent=187 // pred_region
          %1592 = dma.done [#allocation33], 128
        $region272: #{tpu_custom_call.1} parent=187 // pred_fallthru
          _
        // Predicated region
        $region273: #{tpu_custom_call.1} parent=187 // pred_check
          %p1593 = pneg %p622
        $region274: #{tpu_custom_call.1} parent=187 // pred_check_branch
          %1595 = sbr.rel (%p1593) target = $region276
        $region275: #{tpu_custom_call.1} parent=187 // pred_region
          %1597 = dma.done [#allocation36], 16
        $region276: #{tpu_custom_call.1} parent=187 // pred_fallthru
          _
        // Predicated region
        $region277: #{tpu_custom_call.1} parent=187 // pred_check
          %p1598 = pneg %p643
        $region278: #{tpu_custom_call.1} parent=187 // pred_check_branch
          %1600 = sbr.rel (%p1598) target = $region280
        $region279: #{tpu_custom_call.1} parent=187 // pred_region
          %1602 = dma.done [#allocation36], 16
        $region280: #{tpu_custom_call.1} parent=187 // pred_fallthru
          _
        // Predicated region
        $region281: #{tpu_custom_call.1} parent=187 // pred_check
          %p1603 = pneg %p664
        $region282: #{tpu_custom_call.1} parent=187 // pred_check_branch
          %1605 = sbr.rel (%p1603) target = $region284
        $region283: #{tpu_custom_call.1} parent=187 // pred_region
          %1607 = dma.done [#allocation39], 16
        $region284: #{tpu_custom_call.1} parent=187 // pred_fallthru
          _
        // Predicated region
        $region285: #{tpu_custom_call.1} parent=187 // pred_check
          %p1608 = pneg %p685
        $region286: #{tpu_custom_call.1} parent=187 // pred_check_branch
          %1610 = sbr.rel (%p1608) target = $region288
        $region287: #{tpu_custom_call.1} parent=187 // pred_region
          %1612 = dma.done [#allocation39], 128
        $region288: #{tpu_custom_call.1} parent=187 // pred_fallthru
          _
        // Predicated region
        $region289: #{tpu_custom_call.1} parent=187 // pred_check
          %p1613 = pneg %p706
        $region290: #{tpu_custom_call.1} parent=187 // pred_check_branch
          %1615 = sbr.rel (%p1613) target = $region292
        $region291: #{tpu_custom_call.1} parent=187 // pred_region
          %1617 = dma.done [#allocation42], 16
        $region292: #{tpu_custom_call.1} parent=187 // pred_fallthru
          _
        // Predicated region
        $region293: #{tpu_custom_call.1} parent=187 // pred_check
          %p1618 = pneg %p727
        $region294: #{tpu_custom_call.1} parent=187 // pred_check_branch
          %1620 = sbr.rel (%p1618) target = $region296
        $region295: #{tpu_custom_call.1} parent=187 // pred_region
          %1622 = dma.done [#allocation42], 16
        $region296: #{tpu_custom_call.1} parent=187 // pred_fallthru
          _
        // Predicated region
        $region297: #{tpu_custom_call.1} parent=187 // pred_check
          %p1623 = pneg %p748
        $region298: #{tpu_custom_call.1} parent=187 // pred_check_branch
          %1625 = sbr.rel (%p1623) target = $region300
        $region299: #{tpu_custom_call.1} parent=187 // pred_region
          %1627 = dma.done [#allocation45], 16
        $region300: #{tpu_custom_call.1} parent=187 // pred_fallthru
          _
        // Predicated region
        $region301: #{tpu_custom_call.1} parent=187 // pred_check
          %p1628 = pneg %p790
        $region302: #{tpu_custom_call.1} parent=187 // pred_check_branch
          %1630 = sbr.rel (%p1628) target = $region304
        $region303: #{tpu_custom_call.1} parent=187 // pred_region
          %1632 = dma.done [#allocation45], 16
        $region304: #{tpu_custom_call.1} parent=187 // pred_fallthru
          _
        // Predicated region
        $region305: #{tpu_custom_call.1} parent=187 // pred_check
          %p1633 = pneg %p811
        $region306: #{tpu_custom_call.1} parent=187 // pred_check_branch
          %1635 = sbr.rel (%p1633) target = $region308
        $region307: #{tpu_custom_call.1} parent=187 // pred_region
          %1637 = dma.done [#allocation48], 512
        $region308: #{tpu_custom_call.1} parent=187 // pred_fallthru
          _
        // Predicated region
        $region309: #{tpu_custom_call.1} parent=187 // pred_check
          %p1638 = pneg %p832
        $region310: #{tpu_custom_call.1} parent=187 // pred_check_branch
          %1640 = sbr.rel (%p1638) target = $region312
        $region311: #{tpu_custom_call.1} parent=187 // pred_region
          %1642 = dma.done [#allocation48], 16
        $region312: #{tpu_custom_call.1} parent=187 // pred_fallthru
          _
        // Predicated region
        $region313: #{tpu_custom_call.1} parent=187 // pred_check
          %p1643 = pneg %p937
        $region314: #{tpu_custom_call.1} parent=187 // pred_check_branch
          %1645 = sbr.rel (%p1643) target = $region316
        $region315: #{tpu_custom_call.1} parent=187 // pred_region
          %1647 = dma.done [#allocation51], 512
        $region316: #{tpu_custom_call.1} parent=187 // pred_fallthru
          _
        %s1648 = sand.u32 %s126, 1
        %s1649 = scalar_lea.sflag [#allocation3], %s1648
        %s1650 = sand.u32 %s126, 1
        %s1651 = smul.addr %s1650, 8
        %s1652 = scalar_lea.vmem [#allocation2], %s1651
        %p1653 = pneg %p139
        %p1654 = pneg %p136
        %p1655 = pneg %p160
        %p1656 = pneg %p157
        %p1657 = pneg %p181
        %p1658 = pneg %p178
        %p1659 = pneg %p202
        %p1660 = pneg %p199
        %p1661 = pneg %p223
        %p1662 = pneg %p220
        %p1663 = pneg %p244
        %p1664 = pneg %p241
        %p1665 = pneg %p265
        %p1666 = pneg %p262
        %p1667 = pneg %p286
        %p1668 = pneg %p283
        %p1669 = pneg %p307
        %p1670 = pneg %p304
        %p1671 = pneg %p328
        %p1672 = pneg %p325
        %p1673 = pneg %p349
        %p1674 = pneg %p346
        %p1675 = pneg %p370
        %p1676 = pneg %p367
        %p1677 = pneg %p391
        %p1678 = pneg %p388
        %p1679 = pneg %p412
        %p1680 = pneg %p409
        %p1681 = pneg %p433
        %p1682 = pneg %p430
        %p1683 = pneg %p454
        %p1684 = pneg %p451
        %p1685 = pneg %p475
        %p1686 = pneg %p472
        %p1687 = pneg %p496
        %p1688 = pneg %p493
        %p1689 = pneg %p517
        %p1690 = pneg %p514
        %p1691 = pneg %p538
        %p1692 = pneg %p535
        %p1693 = pneg %p559
        %p1694 = pneg %p556
        %p1695 = pneg %p580
        %p1696 = pneg %p577
        %p1697 = pneg %p601
        %p1698 = pneg %p598
        %p1699 = pneg %p622
        %p1700 = pneg %p619
        %p1701 = pneg %p643
        %p1702 = pneg %p640
        %p1703 = pneg %p664
        %p1704 = pneg %p661
        %p1705 = pneg %p685
        %p1706 = pneg %p682
        %p1707 = pneg %p706
        %p1708 = pneg %p703
        %p1709 = pneg %p727
        %p1710 = pneg %p724
        %p1711 = pneg %p748
        %p1712 = pneg %p745
        %p1713 = pneg %p769
        %p1714 = pneg %p766
        %p1715 = pneg %p790
        %p1716 = pneg %p787
        %p1717 = pneg %p811
        %p1718 = pneg %p808
        %p1719 = pneg %p832
        %p1720 = pneg %p829
        %p1721 = pneg %p853
        %p1722 = pneg %p850
        %p1723 = pneg %p874
        %p1724 = pneg %p871
        %p1725 = pneg %p895
        %p1726 = pneg %p892
        %p1727 = pneg %p916
        %p1728 = pneg %p913
        %p1729 = pneg %p937
        %p1730 = pneg %p934
        %p1731 = pneg %p958
        %p1732 = pneg %p955
        %p1733 = pneg %p979
        %p1734 = pneg %p976
        %p1735 = pneg %p1000
        %p1736 = pneg %p997
        %p1737 = pneg %p1026
        %p1738 = pneg %p1023
        %s1739 = sand.u32 %s1013, 1
        %s1740 = scalar_lea.sflag [#allocation4], %s1739
        %s1741 = sand.u32 %s1013, 1
        %s1742 = smul.addr %s1741, 8
        %s1743 = scalar_lea.vmem [#allocation52], %s1742
        %v1744 = vld [vmem:[%s1487] sm:$0xff]
        %v1745 = vld [vmem:[#allocation5] sm:$0xff]
        %v1746 = vlaneseq
        %v1747 = vshrl.u32 %v1746, 7
        %v1748 = vld [vmem:[#allocation7] sm:$0x1]
        %v1749 = vld [vmem:[#allocation8] sm:$0x1]
        %vm1750 = vcmask 261120
        %v1751 = vsel %vm1750, %v1744, 0.0
        %1752 = vadd.xlane.f32.xlu0 %v1751
        %v1753 = vpop.xlane.xlu0 %1752
        %v1754 = vrcp.pop 32.0
        %v1755 = vmul.f32 32.0, %v1754
        %v1756 = vsub.f32 1.0, %v1755
        %v1757 = vmul.f32 %v1754, %v1756
        %v1758 = vadd.f32 %v1754, %v1757
        %vm1759 = vweird.f32 %v1754
        %v1760 = vsel %vm1759, %v1754, %v1758
        %v1761 = vmul.f32 %v1753, %v1760
        %v1762 = vsub.f32 %v1744, %v1761
        %v1763 = vmul.f32 %v1762, %v1762
        %v1764 = vsel %vm1750, %v1763, 0.0
        %1765 = vadd.xlane.f32.xlu0 %v1764
        %v1766 = vpop.xlane.xlu0 %1765
        %v1767 = vmul.f32 %v1766, %v1760
        %v1768 = vadd.f32 %v1767, 1e-05
        %v1769 = vrsqrt.pop %v1768
        %v1770 = vmul.f32 %v1769, %v1768
        %v1771 = vmul.f32 %v1770, %v1769
        %v1772 = vmul.f32 0.5, %v1771
        %v1773 = vsub.f32 1.5, %v1772
        %v1774 = vmul.f32 %v1769, %v1773
        %vm1775 = vweird.f32 %v1768
        %vm1776 = vweird.f32 %v1769
        %vm1777 = vmor %vm1775, %vm1776
        %v1778 = vsel %vm1777, %v1769, %v1774
        %v1779 = vmul.f32 %v1762, %v1778
        %v1781 = vperm.slane %v1748, 0
        %v1783 = vmul.f32 %v1779, %v1781
        %v1785 = vperm.slane %v1749, 0
        %v1787 = vadd.f32 %v1783, %v1785
        %v1788 = vld [vmem:[%s9] sm:$0xff]
        %v1789 = vld [vmem:[%s9 + $0x8] sm:$0xff]
        %v1790 = vld [vmem:[%s9 + $0x10] sm:$0xff]
        %v1791 = vld [vmem:[%s9 + $0x18] sm:$0xff]
        %v1792 = vld [vmem:[#allocation10] sm:$0x1]
        %v1794 = vperm.slane %v1792, 0
        %v1797 = vsel %vm1750, %v1787, 0
        %1799 = vmatpush.msra.mxu0 0.0
        %1800 = vmatpush.msra.mxu0 0.0
        %1801 = vmatpush.msra.mxu0 0.0
        %1802 = vmatpush.msra.mxu0 0.0
        %1803 = vmatpush.msra.mxu0 0.0
        %1804 = vmatpush.msra.mxu0 0.0
        %1805 = vmatpush.msra.mxu0 0.0
        %1806 = vmatpush.msra.mxu0 0.0
        %1807 = vmatpush.msra.mxu0 0.0
        %1808 = vmatpush.msra.mxu0 0.0
        %1809 = vmatpush.msra.mxu0 0.0
        %1810 = vmatpush.msra.mxu0 0.0
        %1811 = vmatpush.msra.mxu0 %v1791
        %1812 = vmatpush.msra.mxu0 %v1790
        %1813 = vmatpush.msra.mxu0 %v1789
        %1814 = vmatpush.msra.mxu0 %v1788
        %1815 = vmatmul.f32.gmra.mxu0 %v1797
        %v1816 = vpop.f32.mrf.mxu0
        %v1817 = vadd.f32 %v1794, %v1816
        %1818 = vdwg.mxu0
        %v1819 = vxor.u32 %v1817, 2147483648
        %v1820 = vmul.f32 %v1819, 1.442695
        %v1821 = vpow.pop %v1820
        %v1822 = vadd.f32 %v1821, 1.0
        %v1823 = vrcp.pop %v1822
        %v1824 = vmul.f32 %v1822, %v1823
        %v1825 = vsub.f32 1.0, %v1824
        %v1826 = vmul.f32 %v1823, %v1825
        %v1827 = vadd.f32 %v1823, %v1826
        %vm1828 = vweird.f32 %v1822
        %vm1829 = vweird.f32 %v1823
        %vm1830 = vmor %vm1828, %vm1829
        %v1831 = vsel %vm1830, %v1823, %v1827
        %v1832 = vand.u32 2147483647, %v1822
        %vm1833 = vcmp.eq.f32.partialorder %v1832, 8.507059e+37
        %v1834 = vand.u32 %v1822, 2147483648
        %v1835 = vor.u32 1.1754944e-38, %v1834
        %v1836 = vsel %vm1833, %v1835, %v1831
        %v1837 = vmul.f32 1.0, %v1836
        %v1838 = vmul.f32 %v1817, %v1837
        %v1839 = vld [vmem:[#allocation11] sm:$0xf]
        %v1840 = vld [vmem:[#allocation13] sm:$0x1]
        %v1842 = vperm.slane %v1840, 0
        %vm1844 = vcmask 31744
        %v1846 = vsel %vm1844, %v1838, 0
        %vm1848 = vcmask 1043456
        %v1850 = vsel %vm1848, %v1839, 0
        %1852 = vmatpush.msra.mxu0 0.0
        %1853 = vmatpush.msra.mxu0 0.0
        %1854 = vmatpush.msra.mxu0 0.0
        %1855 = vmatpush.msra.mxu0 0.0
        %1856 = vmatpush.msra.mxu0 0.0
        %1857 = vmatpush.msra.mxu0 0.0
        %1858 = vmatpush.msra.mxu0 0.0
        %1859 = vmatpush.msra.mxu0 0.0
        %1860 = vmatpush.msra.mxu0 0.0
        %1861 = vmatpush.msra.mxu0 0.0
        %1862 = vmatpush.msra.mxu0 0.0
        %1863 = vmatpush.msra.mxu0 0.0
        %1864 = vmatpush.msra.mxu0 0.0
        %1865 = vmatpush.msra.mxu0 0.0
        %1866 = vmatpush.msra.mxu0 0.0
        %1867 = vmatpush.msra.mxu0 %v1850
        %1868 = vmatmul.f32.gmra.mxu0 %v1846
        %v1869 = vpop.f32.mrf.mxu0
        %v1870 = vadd.f32 %v1842, %v1869
        %1871 = vdwg.mxu0
        %v1872 = vmul.f32 %v1870, 0.5
        %v1873 = vadd.f32 %v1744, %v1872
        %v1874 = vld [vmem:[#allocation14] sm:$0x1]
        %v1875 = vld [vmem:[#allocation16] sm:$0x1]
        %v1876 = vsel %vm1750, %v1873, 0.0
        %1877 = vadd.xlane.f32.xlu0 %v1876
        %v1878 = vpop.xlane.xlu0 %1877
        %v1879 = vmul.f32 %v1878, %v1760
        %v1880 = vsub.f32 %v1873, %v1879
        %v1881 = vmul.f32 %v1880, %v1880
        %v1882 = vsel %vm1750, %v1881, 0.0
        %1883 = vadd.xlane.f32.xlu0 %v1882
        %v1884 = vpop.xlane.xlu0 %1883
        %v1885 = vmul.f32 %v1884, %v1760
        %v1886 = vadd.f32 %v1885, 1e-05
        %v1887 = vrsqrt.pop %v1886
        %v1888 = vmul.f32 %v1887, %v1886
        %v1889 = vmul.f32 %v1888, %v1887
        %v1890 = vmul.f32 0.5, %v1889
        %v1891 = vsub.f32 1.5, %v1890
        %v1892 = vmul.f32 %v1887, %v1891
        %vm1893 = vweird.f32 %v1886
        %vm1894 = vweird.f32 %v1887
        %vm1895 = vmor %vm1893, %vm1894
        %v1896 = vsel %vm1895, %v1887, %v1892
        %v1897 = vmul.f32 %v1880, %v1896
        %v1899 = vperm.slane %v1874, 0
        %v1901 = vmul.f32 %v1897, %v1899
        %v1903 = vperm.slane %v1875, 0
        %v1905 = vadd.f32 %v1901, %v1903
        %v1906 = vadd.f32 %v1905, %v1745
        %v1907 = vld [vmem:[%s21] sm:$0xff]
        %v1908 = vld [vmem:[%s21 + $0x8] sm:$0xff]
        %v1909 = vld [vmem:[%s21 + $0x10] sm:$0xff]
        %v1910 = vld [vmem:[%s21 + $0x18] sm:$0xff]
        %v1911 = vld [vmem:[#allocation17] sm:$0xff]
        %v1912 = vld [vmem:[#allocation17 + $0x8] sm:$0xff]
        %v1913 = vld [vmem:[#allocation17 + $0x10] sm:$0xff]
        %v1914 = vld [vmem:[#allocation17 + $0x18] sm:$0xff]
        %v1915 = vld [vmem:[#allocation19] sm:$0xff]
        %v1916 = vld [vmem:[#allocation19 + $0x8] sm:$0xff]
        %v1917 = vld [vmem:[#allocation19 + $0x10] sm:$0xff]
        %v1918 = vld [vmem:[#allocation19 + $0x18] sm:$0xff]
        %v1919 = vld [vmem:[#allocation20] sm:$0x1]
        %v1920 = vld [vmem:[#allocation22] sm:$0x1]
        %v1921 = vld [vmem:[#allocation23] sm:$0x1]
        %v1922 = vld [vmem:[#allocation25] sm:$0xff]
        %v1923 = vld [vmem:[#allocation25 + $0x8] sm:$0xff]
        %v1924 = vld [vmem:[#allocation25 + $0x10] sm:$0xff]
        %v1925 = vld [vmem:[#allocation25 + $0x18] sm:$0xff]
        %v1926 = vld [vmem:[#allocation26] sm:$0x1]
        %v1928 = vperm.slane %v1919, 0
        %v1931 = vsel %vm1750, %v1906, 0
        %1933 = vmatpush.msra.mxu0 0.0
        %1934 = vmatpush.msra.mxu0 0.0
        %1935 = vmatpush.msra.mxu0 0.0
        %1936 = vmatpush.msra.mxu0 0.0
        %1937 = vmatpush.msra.mxu0 0.0
        %1938 = vmatpush.msra.mxu0 0.0
        %1939 = vmatpush.msra.mxu0 0.0
        %1940 = vmatpush.msra.mxu0 0.0
        %1941 = vmatpush.msra.mxu0 0.0
        %1942 = vmatpush.msra.mxu0 0.0
        %1943 = vmatpush.msra.mxu0 0.0
        %1944 = vmatpush.msra.mxu0 0.0
        %1945 = vmatpush.msra.mxu0 %v1910
        %1946 = vmatpush.msra.mxu0 %v1909
        %1947 = vmatpush.msra.mxu0 %v1908
        %1948 = vmatpush.msra.mxu0 %v1907
        %1949 = vmatmul.f32.gmra.mxu0 %v1931
        %v1950 = vpop.f32.mrf.mxu0
        %v1951 = vadd.f32 %v1928, %v1950
        %1952 = vdwg.mxu0
        %v1954 = vperm.slane %v1920, 0
        %1956 = vmatpush.msra.mxu0 0.0
        %1957 = vmatpush.msra.mxu0 0.0
        %1958 = vmatpush.msra.mxu0 0.0
        %1959 = vmatpush.msra.mxu0 0.0
        %1960 = vmatpush.msra.mxu0 0.0
        %1961 = vmatpush.msra.mxu0 0.0
        %1962 = vmatpush.msra.mxu0 0.0
        %1963 = vmatpush.msra.mxu0 0.0
        %1964 = vmatpush.msra.mxu0 0.0
        %1965 = vmatpush.msra.mxu0 0.0
        %1966 = vmatpush.msra.mxu0 0.0
        %1967 = vmatpush.msra.mxu0 0.0
        %1968 = vmatpush.msra.mxu0 %v1914
        %1969 = vmatpush.msra.mxu0 %v1913
        %1970 = vmatpush.msra.mxu0 %v1912
        %1971 = vmatpush.msra.mxu0 %v1911
        %1972 = vmatmul.f32.gmra.mxu0 %v1931
        %v1973 = vpop.f32.mrf.mxu0
        %v1974 = vadd.f32 %v1954, %v1973
        %1975 = vdwg.mxu0
        %v1977 = vperm.slane %v1921, 0
        %1979 = vmatpush.msra.mxu0 0.0
        %1980 = vmatpush.msra.mxu0 0.0
        %1981 = vmatpush.msra.mxu0 0.0
        %1982 = vmatpush.msra.mxu0 0.0
        %1983 = vmatpush.msra.mxu0 0.0
        %1984 = vmatpush.msra.mxu0 0.0
        %1985 = vmatpush.msra.mxu0 0.0
        %1986 = vmatpush.msra.mxu0 0.0
        %1987 = vmatpush.msra.mxu0 0.0
        %1988 = vmatpush.msra.mxu0 0.0
        %1989 = vmatpush.msra.mxu0 0.0
        %1990 = vmatpush.msra.mxu0 0.0
        %1991 = vmatpush.msra.mxu0 %v1918
        %1992 = vmatpush.msra.mxu0 %v1917
        %1993 = vmatpush.msra.mxu0 %v1916
        %1994 = vmatpush.msra.mxu0 %v1915
        %1995 = vmatmul.f32.gmra.mxu0 %v1931
        %v1996 = vpop.f32.mrf.mxu0
        %v1997 = vadd.f32 %v1977, %v1996
        %1998 = vdwg.mxu0
        %v2000 = vsel %vm1750, %v1951, 0
        %v2003 = vsel %vm1750, %v1974, 0
        %2005 = vmatpush.xpose.msra.mxu0 0.0
        %2006 = vmatpush.xpose.msra.mxu0 0.0
        %2007 = vmatpush.xpose.msra.mxu0 0.0
        %2008 = vmatpush.xpose.msra.mxu0 0.0
        %2009 = vmatpush.xpose.msra.mxu0 0.0
        %2010 = vmatpush.xpose.msra.mxu0 0.0
        %2011 = vmatpush.xpose.msra.mxu0 0.0
        %2012 = vmatpush.xpose.msra.mxu0 0.0
        %2013 = vmatpush.xpose.msra.mxu0 0.0
        %2014 = vmatpush.xpose.msra.mxu0 0.0
        %2015 = vmatpush.xpose.msra.mxu0 0.0
        %2016 = vmatpush.xpose.msra.mxu0 0.0
        %2017 = vmatpush.xpose.msra.mxu0 0.0
        %2018 = vmatpush.xpose.msra.mxu0 0.0
        %2019 = vmatpush.xpose.msra.mxu0 0.0
        %2020 = vmatpush.xpose.msra.mxu0 %v2003
        %2021 = vmatmul.f32.gmra.mxu0 %v2000
        %v2022 = vpop.f32.mrf.mxu0
        %v2023 = vadd.f32 0.0, %v2022
        %2024 = vdwg.mxu0
        %v2025 = vmul.f32 %v2023, 0.17677669
        %vm2026 = vcmask 64512
        %v2027 = vsel %vm2026, %v2025, -inf
        %2028 = vmax.xlane.f32.xlu0 %v2027
        %v2029 = vpop.xlane.xlu0 %2028
        %v2030 = vsub.f32 %v2025, %v2029
        %v2031 = vmul.f32 %v2030, 1.442695
        %v2032 = vpow.pop %v2031
        %v2033 = vsel %vm2026, %v2032, 0.0
        %2034 = vadd.xlane.f32.xlu0 %v2033
        %v2035 = vpop.xlane.xlu0 %2034
        %v2036 = vrcp.pop %v2035
        %v2037 = vmul.f32 %v2032, %v2036
        %v2039 = vsel %vm2026, %v2037, 0
        %2041 = vmatpush.msra.mxu0 0.0
        %2042 = vmatpush.msra.mxu0 0.0
        %2043 = vmatpush.msra.mxu0 0.0
        %2044 = vmatpush.msra.mxu0 0.0
        %2045 = vmatpush.msra.mxu0 0.0
        %2046 = vmatpush.msra.mxu0 0.0
        %2047 = vmatpush.msra.mxu0 0.0
        %2048 = vmatpush.msra.mxu0 0.0
        %2049 = vmatpush.msra.mxu0 0.0
        %2050 = vmatpush.msra.mxu0 0.0
        %2051 = vmatpush.msra.mxu0 0.0
        %2052 = vmatpush.msra.mxu0 0.0
        %2053 = vmatpush.msra.mxu0 0.0
        %2054 = vmatpush.msra.mxu0 0.0
        %2055 = vmatpush.msra.mxu0 0.0
        %2056 = vmatpush.msra.mxu0 %v1997
        %2057 = vmatmul.f32.gmra.mxu0 %v2039
        %v2058 = vpop.f32.mrf.mxu0
        %v2059 = vadd.f32 0.0, %v2058
        %2060 = vdwg.mxu0
        %v2062 = vperm.slane %v1926, 0
        %v2065 = vsel %vm1750, %v2059, 0
        %2067 = vmatpush.msra.mxu0 0.0
        %2068 = vmatpush.msra.mxu0 0.0
        %2069 = vmatpush.msra.mxu0 0.0
        %2070 = vmatpush.msra.mxu0 0.0
        %2071 = vmatpush.msra.mxu0 0.0
        %2072 = vmatpush.msra.mxu0 0.0
        %2073 = vmatpush.msra.mxu0 0.0
        %2074 = vmatpush.msra.mxu0 0.0
        %2075 = vmatpush.msra.mxu0 0.0
        %2076 = vmatpush.msra.mxu0 0.0
        %2077 = vmatpush.msra.mxu0 0.0
        %2078 = vmatpush.msra.mxu0 0.0
        %2079 = vmatpush.msra.mxu0 %v1925
        %2080 = vmatpush.msra.mxu0 %v1924
        %2081 = vmatpush.msra.mxu0 %v1923
        %2082 = vmatpush.msra.mxu0 %v1922
        %2083 = vmatmul.f32.gmra.mxu0 %v2065
        %v2084 = vpop.f32.mrf.mxu0
        %v2085 = vadd.f32 %v2062, %v2084
        %2086 = vdwg.mxu0
        %v2087 = vadd.f32 %v1873, %v2085
        %v2088 = vld [vmem:[#allocation28] sm:$0x1]
        %v2089 = vld [vmem:[#allocation29] sm:$0x1]
        %v2090 = vsel %vm1750, %v2087, 0.0
        %2091 = vadd.xlane.f32.xlu0 %v2090
        %v2092 = vpop.xlane.xlu0 %2091
        %v2093 = vmul.f32 %v2092, %v1760
        %v2094 = vsub.f32 %v2087, %v2093
        %v2095 = vmul.f32 %v2094, %v2094
        %v2096 = vsel %vm1750, %v2095, 0.0
        %2097 = vadd.xlane.f32.xlu0 %v2096
        %v2098 = vpop.xlane.xlu0 %2097
        %v2099 = vmul.f32 %v2098, %v1760
        %v2100 = vadd.f32 %v2099, 1e-05
        %v2101 = vrsqrt.pop %v2100
        %v2102 = vmul.f32 %v2101, %v2100
        %v2103 = vmul.f32 %v2102, %v2101
        %v2104 = vmul.f32 0.5, %v2103
        %v2105 = vsub.f32 1.5, %v2104
        %v2106 = vmul.f32 %v2101, %v2105
        %vm2107 = vweird.f32 %v2100
        %vm2108 = vweird.f32 %v2101
        %vm2109 = vmor %vm2107, %vm2108
        %v2110 = vsel %vm2109, %v2101, %v2106
        %v2111 = vmul.f32 %v2094, %v2110
        %v2113 = vperm.slane %v2088, 0
        %v2115 = vmul.f32 %v2111, %v2113
        %v2117 = vperm.slane %v2089, 0
        %v2119 = vadd.f32 %v2115, %v2117
        %v2120 = vadd.f32 %v2119, %v1745
        %2121 = vxpose.xlu0.b32.start [1/16] %v2120, 128
        %2122 = vxpose.xlu0.b32.cont [2/16] 0.0, 128
        %2123 = vxpose.xlu0.b32.cont [3/16] 0.0, 128
        %2124 = vxpose.xlu0.b32.cont [4/16] 0.0, 128
        %2125 = vxpose.xlu0.b32.cont [5/16] 0.0, 128
        %2126 = vxpose.xlu0.b32.cont [6/16] 0.0, 128
        %2127 = vxpose.xlu0.b32.cont [7/16] 0.0, 128
        %2128 = vxpose.xlu0.b32.cont [8/16] 0.0, 128
        %2129 = vxpose.xlu0.b32.cont [9/16] 0.0, 128
        %2130 = vxpose.xlu0.b32.cont [10/16] 0.0, 128
        %2131 = vxpose.xlu0.b32.cont [11/16] 0.0, 128
        %2132 = vxpose.xlu0.b32.cont [12/16] 0.0, 128
        %2133 = vxpose.xlu0.b32.cont [13/16] 0.0, 128
        %2134 = vxpose.xlu0.b32.cont [14/16] 0.0, 128
        %2135 = vxpose.xlu0.b32.cont [15/16] 0.0, 128
        %2136 = vxpose.xlu0.b32.end [16/16] 0.0, 128
        %v2137 = vpop.trf.xlu0
        %v2138 = vpop.trf.xlu0
        %v2139 = vpop.trf.xlu0
        %v2140 = vpop.trf.xlu0
        %v2141 = vpop.trf.xlu0
        %v2142 = vpop.trf.xlu0
        %v2143 = vpop.trf.xlu0
        %v2144 = vpop.trf.xlu0
        %v2145 = vpop.trf.xlu0
        %v2146 = vpop.trf.xlu0
        %v2147 = vpop.trf.xlu0
        %v2148 = vpop.trf.xlu0
        %v2149 = vpop.trf.xlu0
        %v2150 = vpop.trf.xlu0
        %v2151 = vpop.trf.xlu0
        %v2152 = vpop.trf.xlu0
        %v2153 = vld [vmem:[#allocation31] sm:$0xff]
        %v2154 = vld [vmem:[#allocation32] sm:$0xff]
        %v2155 = vld [vmem:[#allocation34] sm:$0xff]
        %v2156 = vld [vmem:[#allocation35] sm:$0x1]
        %v2157 = vld [vmem:[#allocation37] sm:$0x1]
        %v2158 = vld [vmem:[#allocation38] sm:$0x1]
        %v2159 = vld [vmem:[#allocation40] sm:$0xff]
        %v2160 = vld [vmem:[#allocation41] sm:$0x1]
        %v2162 = vperm.slane %v2156, 0
        %v2165 = vsel %vm2026, %v2137, 0
        %v2168 = vsel %vm2026, %v2138, 0
        %v2171 = vsel %vm2026, %v2139, 0
        %v2174 = vsel %vm2026, %v2140, 0
        %2176 = vmatpush.msra.mxu0 0.0
        %2177 = vmatpush.msra.mxu0 0.0
        %2178 = vmatpush.msra.mxu0 0.0
        %2179 = vmatpush.msra.mxu0 0.0
        %2180 = vmatpush.msra.mxu0 0.0
        %2181 = vmatpush.msra.mxu0 0.0
        %2182 = vmatpush.msra.mxu0 0.0
        %2183 = vmatpush.msra.mxu0 0.0
        %2184 = vmatpush.msra.mxu0 0.0
        %2185 = vmatpush.msra.mxu0 0.0
        %2186 = vmatpush.msra.mxu0 0.0
        %2187 = vmatpush.msra.mxu0 0.0
        %2188 = vmatpush.msra.mxu0 0.0
        %2189 = vmatpush.msra.mxu0 0.0
        %2190 = vmatpush.msra.mxu0 0.0
        %2191 = vmatpush.msra.mxu0 %v2153
        %2192 = vmatmul.f32.gmra.mxu0 %v2165
        %v2193 = vpop.f32.mrf.mxu0
        %v2194 = vadd.f32 %v2162, %v2193
        %2195 = vmatmul.f32.gmra.mxu0 %v2168
        %v2196 = vpop.f32.mrf.mxu0
        %v2197 = vadd.f32 %v2162, %v2196
        %2198 = vmatmul.f32.gmra.mxu0 %v2171
        %v2199 = vpop.f32.mrf.mxu0
        %v2200 = vadd.f32 %v2162, %v2199
        %2201 = vmatmul.f32.gmra.mxu0 %v2174
        %v2202 = vpop.f32.mrf.mxu0
        %v2203 = vadd.f32 %v2162, %v2202
        %2204 = vdwg.mxu0
        %v2206 = vperm.slane %v2157, 0
        %2208 = vmatpush.msra.mxu0 0.0
        %2209 = vmatpush.msra.mxu0 0.0
        %2210 = vmatpush.msra.mxu0 0.0
        %2211 = vmatpush.msra.mxu0 0.0
        %2212 = vmatpush.msra.mxu0 0.0
        %2213 = vmatpush.msra.mxu0 0.0
        %2214 = vmatpush.msra.mxu0 0.0
        %2215 = vmatpush.msra.mxu0 0.0
        %2216 = vmatpush.msra.mxu0 0.0
        %2217 = vmatpush.msra.mxu0 0.0
        %2218 = vmatpush.msra.mxu0 0.0
        %2219 = vmatpush.msra.mxu0 0.0
        %2220 = vmatpush.msra.mxu0 0.0
        %2221 = vmatpush.msra.mxu0 0.0
        %2222 = vmatpush.msra.mxu0 0.0
        %2223 = vmatpush.msra.mxu0 %v2154
        %2224 = vmatmul.f32.gmra.mxu0 %v2165
        %v2225 = vpop.f32.mrf.mxu0
        %v2226 = vadd.f32 %v2206, %v2225
        %2227 = vmatmul.f32.gmra.mxu0 %v2168
        %v2228 = vpop.f32.mrf.mxu0
        %v2229 = vadd.f32 %v2206, %v2228
        %2230 = vmatmul.f32.gmra.mxu0 %v2171
        %v2231 = vpop.f32.mrf.mxu0
        %v2232 = vadd.f32 %v2206, %v2231
        %2233 = vmatmul.f32.gmra.mxu0 %v2174
        %v2234 = vpop.f32.mrf.mxu0
        %v2235 = vadd.f32 %v2206, %v2234
        %2236 = vdwg.mxu0
        %v2238 = vperm.slane %v2158, 0
        %2240 = vmatpush.msra.mxu0 0.0
        %2241 = vmatpush.msra.mxu0 0.0
        %2242 = vmatpush.msra.mxu0 0.0
        %2243 = vmatpush.msra.mxu0 0.0
        %2244 = vmatpush.msra.mxu0 0.0
        %2245 = vmatpush.msra.mxu0 0.0
        %2246 = vmatpush.msra.mxu0 0.0
        %2247 = vmatpush.msra.mxu0 0.0
        %2248 = vmatpush.msra.mxu0 0.0
        %2249 = vmatpush.msra.mxu0 0.0
        %2250 = vmatpush.msra.mxu0 0.0
        %2251 = vmatpush.msra.mxu0 0.0
        %2252 = vmatpush.msra.mxu0 0.0
        %2253 = vmatpush.msra.mxu0 0.0
        %2254 = vmatpush.msra.mxu0 0.0
        %2255 = vmatpush.msra.mxu0 %v2155
        %2256 = vmatmul.f32.gmra.mxu0 %v2165
        %v2257 = vpop.f32.mrf.mxu0
        %v2258 = vadd.f32 %v2238, %v2257
        %2259 = vmatmul.f32.gmra.mxu0 %v2168
        %v2260 = vpop.f32.mrf.mxu0
        %v2261 = vadd.f32 %v2238, %v2260
        %2262 = vmatmul.f32.gmra.mxu0 %v2171
        %v2263 = vpop.f32.mrf.mxu0
        %v2264 = vadd.f32 %v2238, %v2263
        %2265 = vmatmul.f32.gmra.mxu0 %v2174
        %v2266 = vpop.f32.mrf.mxu0
        %v2267 = vadd.f32 %v2238, %v2266
        %2268 = vdwg.mxu0
        %v2270 = vsel %vm2026, %v2194, 0
        %v2273 = vsel %vm2026, %v2197, 0
        %v2276 = vsel %vm2026, %v2200, 0
        %v2279 = vsel %vm2026, %v2203, 0
        %v2282 = vsel %vm2026, %v2226, 0
        %v2285 = vsel %vm2026, %v2229, 0
        %v2288 = vsel %vm2026, %v2232, 0
        %v2291 = vsel %vm2026, %v2235, 0
        %2293 = vmatpush.xpose.msra.mxu0 0.0
        %2294 = vmatpush.xpose.msra.mxu0 0.0
        %2295 = vmatpush.xpose.msra.mxu0 0.0
        %2296 = vmatpush.xpose.msra.mxu0 0.0
        %2297 = vmatpush.xpose.msra.mxu0 0.0
        %2298 = vmatpush.xpose.msra.mxu0 0.0
        %2299 = vmatpush.xpose.msra.mxu0 0.0
        %2300 = vmatpush.xpose.msra.mxu0 0.0
        %2301 = vmatpush.xpose.msra.mxu0 0.0
        %2302 = vmatpush.xpose.msra.mxu0 0.0
        %2303 = vmatpush.xpose.msra.mxu0 0.0
        %2304 = vmatpush.xpose.msra.mxu0 0.0
        %2305 = vmatpush.xpose.msra.mxu0 %v2291
        %2306 = vmatpush.xpose.msra.mxu0 %v2288
        %2307 = vmatpush.xpose.msra.mxu0 %v2285
        %2308 = vmatpush.xpose.msra.mxu0 %v2282
        %2309 = vmatmul.f32.gmra.mxu0 %v2270
        %v2310 = vpop.f32.mrf.mxu0
        %v2311 = vadd.f32 0.0, %v2310
        %2312 = vmatmul.f32.gmra.mxu0 %v2273
        %v2313 = vpop.f32.mrf.mxu0
        %v2314 = vadd.f32 0.0, %v2313
        %2315 = vmatmul.f32.gmra.mxu0 %v2276
        %v2316 = vpop.f32.mrf.mxu0
        %v2317 = vadd.f32 0.0, %v2316
        %2318 = vmatmul.f32.gmra.mxu0 %v2279
        %v2319 = vpop.f32.mrf.mxu0
        %v2320 = vadd.f32 0.0, %v2319
        %2321 = vdwg.mxu0
        %v2322 = vmul.f32 %v2311, 0.35355338
        %v2323 = vmul.f32 %v2314, 0.35355338
        %v2324 = vmul.f32 %v2317, 0.35355338
        %v2325 = vmul.f32 %v2320, 0.35355338
        %v2326 = vsel %vm1750, %v2322, -inf
        %2327 = vmax.xlane.f32.xlu0 %v2326
        %v2328 = vpop.xlane.xlu0 %2327
        %v2329 = vsel %vm1750, %v2323, -inf
        %2330 = vmax.xlane.f32.xlu0 %v2329
        %v2331 = vpop.xlane.xlu0 %2330
        %v2332 = vsel %vm1750, %v2324, -inf
        %2333 = vmax.xlane.f32.xlu0 %v2332
        %v2334 = vpop.xlane.xlu0 %2333
        %v2335 = vsel %vm1750, %v2325, -inf
        %2336 = vmax.xlane.f32.xlu0 %v2335
        %v2337 = vpop.xlane.xlu0 %2336
        %v2338 = vsub.f32 %v2322, %v2328
        %v2339 = vsub.f32 %v2323, %v2331
        %v2340 = vsub.f32 %v2324, %v2334
        %v2341 = vsub.f32 %v2325, %v2337
        %v2342 = vmul.f32 %v2338, 1.442695
        %v2343 = vpow.pop %v2342
        %v2344 = vmul.f32 %v2339, 1.442695
        %v2345 = vpow.pop %v2344
        %v2346 = vmul.f32 %v2340, 1.442695
        %v2347 = vpow.pop %v2346
        %v2348 = vmul.f32 %v2341, 1.442695
        %v2349 = vpow.pop %v2348
        %v2350 = vsel %vm1750, %v2343, 0.0
        %2351 = vadd.xlane.f32.xlu0 %v2350
        %v2352 = vpop.xlane.xlu0 %2351
        %v2353 = vsel %vm1750, %v2345, 0.0
        %2354 = vadd.xlane.f32.xlu0 %v2353
        %v2355 = vpop.xlane.xlu0 %2354
        %v2356 = vsel %vm1750, %v2347, 0.0
        %2357 = vadd.xlane.f32.xlu0 %v2356
        %v2358 = vpop.xlane.xlu0 %2357
        %v2359 = vsel %vm1750, %v2349, 0.0
        %2360 = vadd.xlane.f32.xlu0 %v2359
        %v2361 = vpop.xlane.xlu0 %2360
        %v2362 = vrcp.pop %v2352
        %v2363 = vrcp.pop %v2355
        %v2364 = vrcp.pop %v2358
        %v2365 = vrcp.pop %v2361
        %v2366 = vmul.f32 %v2343, %v2362
        %v2367 = vmul.f32 %v2345, %v2363
        %v2368 = vmul.f32 %v2347, %v2364
        %v2369 = vmul.f32 %v2349, %v2365
        %v2371 = vsel %vm1750, %v2366, 0
        %v2374 = vsel %vm1750, %v2367, 0
        %v2377 = vsel %vm1750, %v2368, 0
        %v2380 = vsel %vm1750, %v2369, 0
        %2382 = vmatpush.msra.mxu0 0.0
        %2383 = vmatpush.msra.mxu0 0.0
        %2384 = vmatpush.msra.mxu0 0.0
        %2385 = vmatpush.msra.mxu0 0.0
        %2386 = vmatpush.msra.mxu0 0.0
        %2387 = vmatpush.msra.mxu0 0.0
        %2388 = vmatpush.msra.mxu0 0.0
        %2389 = vmatpush.msra.mxu0 0.0
        %2390 = vmatpush.msra.mxu0 0.0
        %2391 = vmatpush.msra.mxu0 0.0
        %2392 = vmatpush.msra.mxu0 0.0
        %2393 = vmatpush.msra.mxu0 0.0
        %2394 = vmatpush.msra.mxu0 %v2267
        %2395 = vmatpush.msra.mxu0 %v2264
        %2396 = vmatpush.msra.mxu0 %v2261
        %2397 = vmatpush.msra.mxu0 %v2258
        %2398 = vmatmul.f32.gmra.mxu0 %v2371
        %v2399 = vpop.f32.mrf.mxu0
        %v2400 = vadd.f32 0.0, %v2399
        %2401 = vmatmul.f32.gmra.mxu0 %v2374
        %v2402 = vpop.f32.mrf.mxu0
        %v2403 = vadd.f32 0.0, %v2402
        %2404 = vmatmul.f32.gmra.mxu0 %v2377
        %v2405 = vpop.f32.mrf.mxu0
        %v2406 = vadd.f32 0.0, %v2405
        %2407 = vmatmul.f32.gmra.mxu0 %v2380
        %v2408 = vpop.f32.mrf.mxu0
        %v2409 = vadd.f32 0.0, %v2408
        %2410 = vdwg.mxu0
        %v2412 = vperm.slane %v2160, 0
        %v2415 = vsel %vm2026, %v2400, 0
        %v2418 = vsel %vm2026, %v2403, 0
        %v2421 = vsel %vm2026, %v2406, 0
        %v2424 = vsel %vm2026, %v2409, 0
        %2426 = vmatpush.msra.mxu0 0.0
        %2427 = vmatpush.msra.mxu0 0.0
        %2428 = vmatpush.msra.mxu0 0.0
        %2429 = vmatpush.msra.mxu0 0.0
        %2430 = vmatpush.msra.mxu0 0.0
        %2431 = vmatpush.msra.mxu0 0.0
        %2432 = vmatpush.msra.mxu0 0.0
        %2433 = vmatpush.msra.mxu0 0.0
        %2434 = vmatpush.msra.mxu0 0.0
        %2435 = vmatpush.msra.mxu0 0.0
        %2436 = vmatpush.msra.mxu0 0.0
        %2437 = vmatpush.msra.mxu0 0.0
        %2438 = vmatpush.msra.mxu0 0.0
        %2439 = vmatpush.msra.mxu0 0.0
        %2440 = vmatpush.msra.mxu0 0.0
        %2441 = vmatpush.msra.mxu0 %v2159
        %2442 = vmatmul.f32.gmra.mxu0 %v2415
        %v2443 = vpop.f32.mrf.mxu0
        %v2444 = vadd.f32 %v2412, %v2443
        %2445 = vmatmul.f32.gmra.mxu0 %v2418
        %v2446 = vpop.f32.mrf.mxu0
        %v2447 = vadd.f32 %v2412, %v2446
        %2448 = vmatmul.f32.gmra.mxu0 %v2421
        %v2449 = vpop.f32.mrf.mxu0
        %v2450 = vadd.f32 %v2412, %v2449
        %2451 = vmatmul.f32.gmra.mxu0 %v2424
        %v2452 = vpop.f32.mrf.mxu0
        %v2453 = vadd.f32 %v2412, %v2452
        %2454 = vdwg.mxu0
        %2455 = vxpose.xlu0.b32.start [1/16] %v2444, 128
        %2456 = vxpose.xlu0.b32.cont [2/16] %v2447, 128
        %2457 = vxpose.xlu0.b32.cont [3/16] %v2450, 128
        %2458 = vxpose.xlu0.b32.cont [4/16] %v2453, 128
        %2459 = vxpose.xlu0.b32.cont [5/16] 0.0, 128
        %2460 = vxpose.xlu0.b32.cont [6/16] 0.0, 128
        %2461 = vxpose.xlu0.b32.cont [7/16] 0.0, 128
        %2462 = vxpose.xlu0.b32.cont [8/16] 0.0, 128
        %2463 = vxpose.xlu0.b32.cont [9/16] 0.0, 128
        %2464 = vxpose.xlu0.b32.cont [10/16] 0.0, 128
        %2465 = vxpose.xlu0.b32.cont [11/16] 0.0, 128
        %2466 = vxpose.xlu0.b32.cont [12/16] 0.0, 128
        %2467 = vxpose.xlu0.b32.cont [13/16] 0.0, 128
        %2468 = vxpose.xlu0.b32.cont [14/16] 0.0, 128
        %2469 = vxpose.xlu0.b32.cont [15/16] 0.0, 128
        %2470 = vxpose.xlu0.b32.end [16/16] 0.0, 128
        %v2471 = vpop.trf.xlu0
        %v2472 = vpop.trf.xlu0
        %v2473 = vpop.trf.xlu0
        %v2474 = vpop.trf.xlu0
        %v2475 = vpop.trf.xlu0
        %v2476 = vpop.trf.xlu0
        %v2477 = vpop.trf.xlu0
        %v2478 = vpop.trf.xlu0
        %v2479 = vpop.trf.xlu0
        %v2480 = vpop.trf.xlu0
        %v2481 = vpop.trf.xlu0
        %v2482 = vpop.trf.xlu0
        %v2483 = vpop.trf.xlu0
        %v2484 = vpop.trf.xlu0
        %v2485 = vpop.trf.xlu0
        %v2486 = vpop.trf.xlu0
        %v2487 = vadd.f32 %v2087, %v2471
        %v2488 = vld [vmem:[#allocation43] sm:$0x1]
        %v2489 = vld [vmem:[#allocation44] sm:$0x1]
        %v2490 = vsel %vm1750, %v2487, 0.0
        %2491 = vadd.xlane.f32.xlu0 %v2490
        %v2492 = vpop.xlane.xlu0 %2491
        %v2493 = vmul.f32 %v2492, %v1760
        %v2494 = vsub.f32 %v2487, %v2493
        %v2495 = vmul.f32 %v2494, %v2494
        %v2496 = vsel %vm1750, %v2495, 0.0
        %2497 = vadd.xlane.f32.xlu0 %v2496
        %v2498 = vpop.xlane.xlu0 %2497
        %v2499 = vmul.f32 %v2498, %v1760
        %v2500 = vadd.f32 %v2499, 1e-05
        %v2501 = vrsqrt.pop %v2500
        %v2502 = vmul.f32 %v2501, %v2500
        %v2503 = vmul.f32 %v2502, %v2501
        %v2504 = vmul.f32 0.5, %v2503
        %v2505 = vsub.f32 1.5, %v2504
        %v2506 = vmul.f32 %v2501, %v2505
        %vm2507 = vweird.f32 %v2500
        %vm2508 = vweird.f32 %v2501
        %vm2509 = vmor %vm2507, %vm2508
        %v2510 = vsel %vm2509, %v2501, %v2506
        %v2511 = vmul.f32 %v2494, %v2510
        %v2513 = vperm.slane %v2488, 0
        %v2515 = vmul.f32 %v2511, %v2513
        %v2517 = vperm.slane %v2489, 0
        %v2519 = vadd.f32 %v2515, %v2517
        %v2520 = vld [vmem:[%s61] sm:$0xff]
        %v2521 = vld [vmem:[%s61 + $0x8] sm:$0xff]
        %v2522 = vld [vmem:[%s61 + $0x10] sm:$0xff]
        %v2523 = vld [vmem:[%s61 + $0x18] sm:$0xff]
        %v2524 = vld [vmem:[#allocation46] sm:$0x1]
        %v2526 = vperm.slane %v2524, 0
        %v2529 = vsel %vm1750, %v2519, 0
        %2531 = vmatpush.msra.mxu0 0.0
        %2532 = vmatpush.msra.mxu0 0.0
        %2533 = vmatpush.msra.mxu0 0.0
        %2534 = vmatpush.msra.mxu0 0.0
        %2535 = vmatpush.msra.mxu0 0.0
        %2536 = vmatpush.msra.mxu0 0.0
        %2537 = vmatpush.msra.mxu0 0.0
        %2538 = vmatpush.msra.mxu0 0.0
        %2539 = vmatpush.msra.mxu0 0.0
        %2540 = vmatpush.msra.mxu0 0.0
        %2541 = vmatpush.msra.mxu0 0.0
        %2542 = vmatpush.msra.mxu0 0.0
        %2543 = vmatpush.msra.mxu0 %v2523
        %2544 = vmatpush.msra.mxu0 %v2522
        %2545 = vmatpush.msra.mxu0 %v2521
        %2546 = vmatpush.msra.mxu0 %v2520
        %2547 = vmatmul.f32.gmra.mxu0 %v2529
        %v2548 = vpop.f32.mrf.mxu0
        %v2549 = vadd.f32 %v2526, %v2548
        %2550 = vdwg.mxu0
        %v2551 = vld [vmem:[#allocation47] sm:$0xff]
        %v2552 = vld [vmem:[#allocation47 + $0x8] sm:$0xff]
        %v2553 = vld [vmem:[#allocation47 + $0x10] sm:$0xff]
        %v2554 = vld [vmem:[#allocation47 + $0x18] sm:$0xff]
        %v2555 = vld [vmem:[#allocation49] sm:$0x1]
        %v2557 = vperm.slane %v2555, 0
        %2559 = vmatpush.msra.mxu0 0.0
        %2560 = vmatpush.msra.mxu0 0.0
        %2561 = vmatpush.msra.mxu0 0.0
        %2562 = vmatpush.msra.mxu0 0.0
        %2563 = vmatpush.msra.mxu0 0.0
        %2564 = vmatpush.msra.mxu0 0.0
        %2565 = vmatpush.msra.mxu0 0.0
        %2566 = vmatpush.msra.mxu0 0.0
        %2567 = vmatpush.msra.mxu0 0.0
        %2568 = vmatpush.msra.mxu0 0.0
        %2569 = vmatpush.msra.mxu0 0.0
        %2570 = vmatpush.msra.mxu0 0.0
        %2571 = vmatpush.msra.mxu0 %v2554
        %2572 = vmatpush.msra.mxu0 %v2553
        %2573 = vmatpush.msra.mxu0 %v2552
        %2574 = vmatpush.msra.mxu0 %v2551
        %2575 = vmatmul.f32.gmra.mxu0 %v2529
        %v2576 = vpop.f32.mrf.mxu0
        %v2577 = vadd.f32 %v2557, %v2576
        %2578 = vdwg.mxu0
        %v2579 = vxor.u32 %v2577, 2147483648
        %v2580 = vmul.f32 %v2579, 1.442695
        %v2581 = vpow.pop %v2580
        %v2582 = vadd.f32 %v2581, 1.0
        %v2583 = vrcp.pop %v2582
        %v2584 = vmul.f32 %v2582, %v2583
        %v2585 = vsub.f32 1.0, %v2584
        %v2586 = vmul.f32 %v2583, %v2585
        %v2587 = vadd.f32 %v2583, %v2586
        %vm2588 = vweird.f32 %v2582
        %vm2589 = vweird.f32 %v2583
        %vm2590 = vmor %vm2588, %vm2589
        %v2591 = vsel %vm2590, %v2583, %v2587
        %v2592 = vand.u32 2147483647, %v2582
        %vm2593 = vcmp.eq.f32.partialorder %v2592, 8.507059e+37
        %v2594 = vand.u32 %v2582, 2147483648
        %v2595 = vor.u32 1.1754944e-38, %v2594
        %v2596 = vsel %vm2593, %v2595, %v2591
        %v2597 = vmul.f32 1.0, %v2596
        %v2598 = vmul.f32 %v2549, %v2597
        %v2599 = vld [vmem:[%s69] sm:$0x7]
        %v2600 = vrot.slane %v2598, 7
        %vm2601 = vcmp.ge.s32.totalorder %v1747, 1
        %vm2602 = vcmp.lt.s32.totalorder %v1747, 9
        %vm2603 = vmand %vm2601, %vm2602
        %v2604 = vsel %vm2603, %v2600, 0.0
        %v2605 = vperm.slane %v2599, 0
        %v2606 = vmul.f32 %v2605, %v2604
        %v2607 = vadd.f32 %v2606, 0.0
        %v2608 = vperm.slane %v2599, 1
        %v2609 = vmul.f32 %v2608, %v2598
        %v2610 = vadd.f32 %v2607, %v2609
        %v2611 = vrot.slane %v2598, 1
        %vm2612 = vcmp.ge.s32.totalorder %v1747, 4294967295
        %vm2613 = vcmp.lt.s32.totalorder %v1747, 7
        %vm2614 = vmand %vm2612, %vm2613
        %v2615 = vsel %vm2614, %v2611, 0.0
        %v2616 = vperm.slane %v2599, 2
        %v2617 = vmul.f32 %v2616, %v2615
        %v2618 = vadd.f32 %v2610, %v2617
        %v2619 = vld [vmem:[%s71] sm:$0x1]
        %v2621 = vperm.slane %v2619, 0
        %v2623 = vadd.f32 %v2618, %v2621
        %v2624 = vld [vmem:[%s73] sm:$0x1]
        %v2626 = vperm.slane %v2624, 0
        %v2628 = vmul.f32 %v2623, %v2626
        %v2629 = vld [vmem:[%s75] sm:$0x1]
        %v2631 = vperm.slane %v2629, 0
        %v2633 = vadd.f32 %v2628, %v2631
        %v2634 = vxor.u32 %v2633, 2147483648
        %v2635 = vmul.f32 %v2634, 1.442695
        %v2636 = vpow.pop %v2635
        %v2637 = vadd.f32 %v2636, 1.0
        %v2638 = vrcp.pop %v2637
        %v2639 = vmul.f32 %v2637, %v2638
        %v2640 = vsub.f32 1.0, %v2639
        %v2641 = vmul.f32 %v2638, %v2640
        %v2642 = vadd.f32 %v2638, %v2641
        %vm2643 = vweird.f32 %v2637
        %vm2644 = vweird.f32 %v2638
        %vm2645 = vmor %vm2643, %vm2644
        %v2646 = vsel %vm2645, %v2638, %v2642
        %v2647 = vand.u32 2147483647, %v2637
        %vm2648 = vcmp.eq.f32.partialorder %v2647, 8.507059e+37
        %v2649 = vand.u32 %v2637, 2147483648
        %v2650 = vor.u32 1.1754944e-38, %v2649
        %v2651 = vsel %vm2648, %v2650, %v2646
        %v2652 = vmul.f32 1.0, %v2651
        %v2653 = vmul.f32 %v2633, %v2652
        %v2654 = vld [vmem:[#allocation50] sm:$0xff]
        %v2655 = vld [vmem:[#allocation50 + $0x8] sm:$0xff]
        %v2656 = vld [vmem:[#allocation50 + $0x10] sm:$0xff]
        %v2657 = vld [vmem:[#allocation50 + $0x18] sm:$0xff]
        %v2658 = vld [vmem:[%s79] sm:$0x1]
        %v2660 = vperm.slane %v2658, 0
        %v2663 = vsel %vm1750, %v2653, 0
        %2665 = vmatpush.msra.mxu0 0.0
        %2666 = vmatpush.msra.mxu0 0.0
        %2667 = vmatpush.msra.mxu0 0.0
        %2668 = vmatpush.msra.mxu0 0.0
        %2669 = vmatpush.msra.mxu0 0.0
        %2670 = vmatpush.msra.mxu0 0.0
        %2671 = vmatpush.msra.mxu0 0.0
        %2672 = vmatpush.msra.mxu0 0.0
        %2673 = vmatpush.msra.mxu0 0.0
        %2674 = vmatpush.msra.mxu0 0.0
        %2675 = vmatpush.msra.mxu0 0.0
        %2676 = vmatpush.msra.mxu0 0.0
        %2677 = vmatpush.msra.mxu0 %v2657
        %2678 = vmatpush.msra.mxu0 %v2656
        %2679 = vmatpush.msra.mxu0 %v2655
        %2680 = vmatpush.msra.mxu0 %v2654
        %2681 = vmatmul.f32.gmra.mxu0 %v2663
        %v2682 = vpop.f32.mrf.mxu0
        %v2683 = vadd.f32 %v2660, %v2682
        %2684 = vdwg.mxu0
        %v2685 = vadd.f32 %v2487, %v2683
        %v2686 = vsel %vm1750, %v2685, 0.0
        %2687 = vadd.xlane.f32.xlu0 %v2686
        %v2688 = vpop.xlane.xlu0 %2687
        %v2689 = vmul.f32 %v2688, %v1760
        %v2690 = vsub.f32 %v2685, %v2689
        %v2691 = vmul.f32 %v2690, %v2690
        %v2692 = vsel %vm1750, %v2691, 0.0
        %2693 = vadd.xlane.f32.xlu0 %v2692
        %v2694 = vpop.xlane.xlu0 %2693
        %v2695 = vmul.f32 %v2694, %v1760
        %v2696 = vadd.f32 %v2695, 1e-05
        %v2697 = vrsqrt.pop %v2696
        %v2698 = vmul.f32 %v2697, %v2696
        %v2699 = vmul.f32 %v2698, %v2697
        %v2700 = vmul.f32 0.5, %v2699
        %v2701 = vsub.f32 1.5, %v2700
        %v2702 = vmul.f32 %v2697, %v2701
        %vm2703 = vweird.f32 %v2696
        %vm2704 = vweird.f32 %v2697
        %vm2705 = vmor %vm2703, %vm2704
        %v2706 = vsel %vm2705, %v2697, %v2702
        %v2707 = vmul.f32 %v2690, %v2706
        %v2708 = vmul.f32 %v2707, %v1781
        %v2709 = vadd.f32 %v2708, %v1785
        %v2711 = vsel %vm1750, %v2709, 0
        %2713 = vmatpush.msra.mxu0 0.0
        %2714 = vmatpush.msra.mxu0 0.0
        %2715 = vmatpush.msra.mxu0 0.0
        %2716 = vmatpush.msra.mxu0 0.0
        %2717 = vmatpush.msra.mxu0 0.0
        %2718 = vmatpush.msra.mxu0 0.0
        %2719 = vmatpush.msra.mxu0 0.0
        %2720 = vmatpush.msra.mxu0 0.0
        %2721 = vmatpush.msra.mxu0 0.0
        %2722 = vmatpush.msra.mxu0 0.0
        %2723 = vmatpush.msra.mxu0 0.0
        %2724 = vmatpush.msra.mxu0 0.0
        %2725 = vmatpush.msra.mxu0 %v1791
        %2726 = vmatpush.msra.mxu0 %v1790
        %2727 = vmatpush.msra.mxu0 %v1789
        %2728 = vmatpush.msra.mxu0 %v1788
        %2729 = vmatmul.f32.gmra.mxu0 %v2711
        %v2730 = vpop.f32.mrf.mxu0
        %v2731 = vadd.f32 %v1794, %v2730
        %2732 = vdwg.mxu0
        %v2733 = vxor.u32 %v2731, 2147483648
        %v2734 = vmul.f32 %v2733, 1.442695
        %v2735 = vpow.pop %v2734
        %v2736 = vadd.f32 %v2735, 1.0
        %v2737 = vrcp.pop %v2736
        %v2738 = vmul.f32 %v2736, %v2737
        %v2739 = vsub.f32 1.0, %v2738
        %v2740 = vmul.f32 %v2737, %v2739
        %v2741 = vadd.f32 %v2737, %v2740
        %vm2742 = vweird.f32 %v2736
        %vm2743 = vweird.f32 %v2737
        %vm2744 = vmor %vm2742, %vm2743
        %v2745 = vsel %vm2744, %v2737, %v2741
        %v2746 = vand.u32 2147483647, %v2736
        %vm2747 = vcmp.eq.f32.partialorder %v2746, 8.507059e+37
        %v2748 = vand.u32 %v2736, 2147483648
        %v2749 = vor.u32 1.1754944e-38, %v2748
        %v2750 = vsel %vm2747, %v2749, %v2745
        %v2751 = vmul.f32 1.0, %v2750
        %v2752 = vmul.f32 %v2731, %v2751
        %v2754 = vsel %vm1844, %v2752, 0
        %2756 = vmatpush.msra.mxu0 0.0
        %2757 = vmatpush.msra.mxu0 0.0
        %2758 = vmatpush.msra.mxu0 0.0
        %2759 = vmatpush.msra.mxu0 0.0
        %2760 = vmatpush.msra.mxu0 0.0
        %2761 = vmatpush.msra.mxu0 0.0
        %2762 = vmatpush.msra.mxu0 0.0
        %2763 = vmatpush.msra.mxu0 0.0
        %2764 = vmatpush.msra.mxu0 0.0
        %2765 = vmatpush.msra.mxu0 0.0
        %2766 = vmatpush.msra.mxu0 0.0
        %2767 = vmatpush.msra.mxu0 0.0
        %2768 = vmatpush.msra.mxu0 0.0
        %2769 = vmatpush.msra.mxu0 0.0
        %2770 = vmatpush.msra.mxu0 0.0
        %2771 = vmatpush.msra.mxu0 %v1850
        %2772 = vmatmul.f32.gmra.mxu0 %v2754
        %v2773 = vpop.f32.mrf.mxu0
        %v2774 = vadd.f32 %v1842, %v2773
        %2775 = vdwg.mxu0
        %v2776 = vmul.f32 %v2774, 0.5
        %v2777 = vadd.f32 %v2685, %v2776
        %v2778 = vld [vmem:[%s81] sm:$0x1]
        %v2779 = vld [vmem:[%s83] sm:$0x1]
        %v2780 = vsel %vm1750, %v2777, 0.0
        %2781 = vadd.xlane.f32.xlu0 %v2780
        %v2782 = vpop.xlane.xlu0 %2781
        %v2783 = vmul.f32 %v2782, %v1760
        %v2784 = vsub.f32 %v2777, %v2783
        %v2785 = vmul.f32 %v2784, %v2784
        %v2786 = vsel %vm1750, %v2785, 0.0
        %2787 = vadd.xlane.f32.xlu0 %v2786
        %v2788 = vpop.xlane.xlu0 %2787
        %v2789 = vmul.f32 %v2788, %v1760
        %v2790 = vadd.f32 %v2789, 1e-05
        %v2791 = vrsqrt.pop %v2790
        %v2792 = vmul.f32 %v2791, %v2790
        %v2793 = vmul.f32 %v2792, %v2791
        %v2794 = vmul.f32 0.5, %v2793
        %v2795 = vsub.f32 1.5, %v2794
        %v2796 = vmul.f32 %v2791, %v2795
        %vm2797 = vweird.f32 %v2790
        %vm2798 = vweird.f32 %v2791
        %vm2799 = vmor %vm2797, %vm2798
        %v2800 = vsel %vm2799, %v2791, %v2796
        %v2801 = vmul.f32 %v2784, %v2800
        %v2803 = vperm.slane %v2778, 0
        %v2805 = vmul.f32 %v2801, %v2803
        %v2807 = vperm.slane %v2779, 0
        %v2809 = vadd.f32 %v2805, %v2807
        %v2810 = vsel %vm1750, %v2809, 0.0
        %2811 = vadd.xlane.f32.xlu0 %v2810
        %v2812 = vpop.xlane.xlu0 %2811
        %v2813 = vmul.f32 %v2812, %v1760
        %v2814 = vsub.f32 %v2809, %v2813
        %v2815 = vmul.f32 %v2814, %v2814
        %v2816 = vsel %vm1750, %v2815, 0.0
        %2817 = vadd.xlane.f32.xlu0 %v2816
        %v2818 = vpop.xlane.xlu0 %2817
        %v2819 = vmul.f32 %v2818, %v1760
        %v2820 = vadd.f32 %v2819, 1e-05
        %v2821 = vrsqrt.pop %v2820
        %v2822 = vmul.f32 %v2821, %v2820
        %v2823 = vmul.f32 %v2822, %v2821
        %v2824 = vmul.f32 0.5, %v2823
        %v2825 = vsub.f32 1.5, %v2824
        %v2826 = vmul.f32 %v2821, %v2825
        %vm2827 = vweird.f32 %v2820
        %vm2828 = vweird.f32 %v2821
        %vm2829 = vmor %vm2827, %vm2828
        %v2830 = vsel %vm2829, %v2821, %v2826
        %v2831 = vmul.f32 %v2814, %v2830
        %v2832 = vmul.f32 %v2831, %v1781
        %v2833 = vadd.f32 %v2832, %v1785
        %v2835 = vsel %vm1750, %v2833, 0
        %2837 = vmatpush.msra.mxu0 0.0
        %2838 = vmatpush.msra.mxu0 0.0
        %2839 = vmatpush.msra.mxu0 0.0
        %2840 = vmatpush.msra.mxu0 0.0
        %2841 = vmatpush.msra.mxu0 0.0
        %2842 = vmatpush.msra.mxu0 0.0
        %2843 = vmatpush.msra.mxu0 0.0
        %2844 = vmatpush.msra.mxu0 0.0
        %2845 = vmatpush.msra.mxu0 0.0
        %2846 = vmatpush.msra.mxu0 0.0
        %2847 = vmatpush.msra.mxu0 0.0
        %2848 = vmatpush.msra.mxu0 0.0
        %2849 = vmatpush.msra.mxu0 %v1791
        %2850 = vmatpush.msra.mxu0 %v1790
        %2851 = vmatpush.msra.mxu0 %v1789
        %2852 = vmatpush.msra.mxu0 %v1788
        %2853 = vmatmul.f32.gmra.mxu0 %v2835
        %v2854 = vpop.f32.mrf.mxu0
        %v2855 = vadd.f32 %v1794, %v2854
        %2856 = vdwg.mxu0
        %v2857 = vxor.u32 %v2855, 2147483648
        %v2858 = vmul.f32 %v2857, 1.442695
        %v2859 = vpow.pop %v2858
        %v2860 = vadd.f32 %v2859, 1.0
        %v2861 = vrcp.pop %v2860
        %v2862 = vmul.f32 %v2860, %v2861
        %v2863 = vsub.f32 1.0, %v2862
        %v2864 = vmul.f32 %v2861, %v2863
        %v2865 = vadd.f32 %v2861, %v2864
        %vm2866 = vweird.f32 %v2860
        %vm2867 = vweird.f32 %v2861
        %vm2868 = vmor %vm2866, %vm2867
        %v2869 = vsel %vm2868, %v2861, %v2865
        %v2870 = vand.u32 2147483647, %v2860
        %vm2871 = vcmp.eq.f32.partialorder %v2870, 8.507059e+37
        %v2872 = vand.u32 %v2860, 2147483648
        %v2873 = vor.u32 1.1754944e-38, %v2872
        %v2874 = vsel %vm2871, %v2873, %v2869
        %v2875 = vmul.f32 1.0, %v2874
        %v2876 = vmul.f32 %v2855, %v2875
        %v2878 = vsel %vm1844, %v2876, 0
        %2880 = vmatpush.msra.mxu0 0.0
        %2881 = vmatpush.msra.mxu0 0.0
        %2882 = vmatpush.msra.mxu0 0.0
        %2883 = vmatpush.msra.mxu0 0.0
        %2884 = vmatpush.msra.mxu0 0.0
        %2885 = vmatpush.msra.mxu0 0.0
        %2886 = vmatpush.msra.mxu0 0.0
        %2887 = vmatpush.msra.mxu0 0.0
        %2888 = vmatpush.msra.mxu0 0.0
        %2889 = vmatpush.msra.mxu0 0.0
        %2890 = vmatpush.msra.mxu0 0.0
        %2891 = vmatpush.msra.mxu0 0.0
        %2892 = vmatpush.msra.mxu0 0.0
        %2893 = vmatpush.msra.mxu0 0.0
        %2894 = vmatpush.msra.mxu0 0.0
        %2895 = vmatpush.msra.mxu0 %v1850
        %2896 = vmatmul.f32.gmra.mxu0 %v2878
        %v2897 = vpop.f32.mrf.mxu0
        %v2898 = vadd.f32 %v1842, %v2897
        %2899 = vdwg.mxu0
        %v2900 = vmul.f32 %v2898, 0.5
        %v2901 = vadd.f32 %v2809, %v2900
        %v2902 = vsel %vm1750, %v2901, 0.0
        %2903 = vadd.xlane.f32.xlu0 %v2902
        %v2904 = vpop.xlane.xlu0 %2903
        %v2905 = vmul.f32 %v2904, %v1760
        %v2906 = vsub.f32 %v2901, %v2905
        %v2907 = vmul.f32 %v2906, %v2906
        %v2908 = vsel %vm1750, %v2907, 0.0
        %2909 = vadd.xlane.f32.xlu0 %v2908
        %v2910 = vpop.xlane.xlu0 %2909
        %v2911 = vmul.f32 %v2910, %v1760
        %v2912 = vadd.f32 %v2911, 1e-05
        %v2913 = vrsqrt.pop %v2912
        %v2914 = vmul.f32 %v2913, %v2912
        %v2915 = vmul.f32 %v2914, %v2913
        %v2916 = vmul.f32 0.5, %v2915
        %v2917 = vsub.f32 1.5, %v2916
        %v2918 = vmul.f32 %v2913, %v2917
        %vm2919 = vweird.f32 %v2912
        %vm2920 = vweird.f32 %v2913
        %vm2921 = vmor %vm2919, %vm2920
        %v2922 = vsel %vm2921, %v2913, %v2918
        %v2923 = vmul.f32 %v2906, %v2922
        %v2924 = vmul.f32 %v2923, %v1899
        %v2925 = vadd.f32 %v2924, %v1903
        %v2926 = vadd.f32 %v2925, %v1745
        %v2928 = vsel %vm1750, %v2926, 0
        %2930 = vmatpush.msra.mxu0 0.0
        %2931 = vmatpush.msra.mxu0 0.0
        %2932 = vmatpush.msra.mxu0 0.0
        %2933 = vmatpush.msra.mxu0 0.0
        %2934 = vmatpush.msra.mxu0 0.0
        %2935 = vmatpush.msra.mxu0 0.0
        %2936 = vmatpush.msra.mxu0 0.0
        %2937 = vmatpush.msra.mxu0 0.0
        %2938 = vmatpush.msra.mxu0 0.0
        %2939 = vmatpush.msra.mxu0 0.0
        %2940 = vmatpush.msra.mxu0 0.0
        %2941 = vmatpush.msra.mxu0 0.0
        %2942 = vmatpush.msra.mxu0 %v1910
        %2943 = vmatpush.msra.mxu0 %v1909
        %2944 = vmatpush.msra.mxu0 %v1908
        %2945 = vmatpush.msra.mxu0 %v1907
        %2946 = vmatmul.f32.gmra.mxu0 %v2928
        %v2947 = vpop.f32.mrf.mxu0
        %v2948 = vadd.f32 %v1928, %v2947
        %2949 = vdwg.mxu0
        %2950 = vmatpush.msra.mxu0 0.0
        %2951 = vmatpush.msra.mxu0 0.0
        %2952 = vmatpush.msra.mxu0 0.0
        %2953 = vmatpush.msra.mxu0 0.0
        %2954 = vmatpush.msra.mxu0 0.0
        %2955 = vmatpush.msra.mxu0 0.0
        %2956 = vmatpush.msra.mxu0 0.0
        %2957 = vmatpush.msra.mxu0 0.0
        %2958 = vmatpush.msra.mxu0 0.0
        %2959 = vmatpush.msra.mxu0 0.0
        %2960 = vmatpush.msra.mxu0 0.0
        %2961 = vmatpush.msra.mxu0 0.0
        %2962 = vmatpush.msra.mxu0 %v1914
        %2963 = vmatpush.msra.mxu0 %v1913
        %2964 = vmatpush.msra.mxu0 %v1912
        %2965 = vmatpush.msra.mxu0 %v1911
        %2966 = vmatmul.f32.gmra.mxu0 %v2928
        %v2967 = vpop.f32.mrf.mxu0
        %v2968 = vadd.f32 %v1954, %v2967
        %2969 = vdwg.mxu0
        %2970 = vmatpush.msra.mxu0 0.0
        %2971 = vmatpush.msra.mxu0 0.0
        %2972 = vmatpush.msra.mxu0 0.0
        %2973 = vmatpush.msra.mxu0 0.0
        %2974 = vmatpush.msra.mxu0 0.0
        %2975 = vmatpush.msra.mxu0 0.0
        %2976 = vmatpush.msra.mxu0 0.0
        %2977 = vmatpush.msra.mxu0 0.0
        %2978 = vmatpush.msra.mxu0 0.0
        %2979 = vmatpush.msra.mxu0 0.0
        %2980 = vmatpush.msra.mxu0 0.0
        %2981 = vmatpush.msra.mxu0 0.0
        %2982 = vmatpush.msra.mxu0 %v1918
        %2983 = vmatpush.msra.mxu0 %v1917
        %2984 = vmatpush.msra.mxu0 %v1916
        %2985 = vmatpush.msra.mxu0 %v1915
        %2986 = vmatmul.f32.gmra.mxu0 %v2928
        %v2987 = vpop.f32.mrf.mxu0
        %v2988 = vadd.f32 %v1977, %v2987
        %2989 = vdwg.mxu0
        %v2991 = vsel %vm1750, %v2948, 0
        %v2994 = vsel %vm1750, %v2968, 0
        %2996 = vmatpush.xpose.msra.mxu0 0.0
        %2997 = vmatpush.xpose.msra.mxu0 0.0
        %2998 = vmatpush.xpose.msra.mxu0 0.0
        %2999 = vmatpush.xpose.msra.mxu0 0.0
        %3000 = vmatpush.xpose.msra.mxu0 0.0
        %3001 = vmatpush.xpose.msra.mxu0 0.0
        %3002 = vmatpush.xpose.msra.mxu0 0.0
        %3003 = vmatpush.xpose.msra.mxu0 0.0
        %3004 = vmatpush.xpose.msra.mxu0 0.0
        %3005 = vmatpush.xpose.msra.mxu0 0.0
        %3006 = vmatpush.xpose.msra.mxu0 0.0
        %3007 = vmatpush.xpose.msra.mxu0 0.0
        %3008 = vmatpush.xpose.msra.mxu0 0.0
        %3009 = vmatpush.xpose.msra.mxu0 0.0
        %3010 = vmatpush.xpose.msra.mxu0 0.0
        %3011 = vmatpush.xpose.msra.mxu0 %v2994
        %3012 = vmatmul.f32.gmra.mxu0 %v2991
        %v3013 = vpop.f32.mrf.mxu0
        %v3014 = vadd.f32 0.0, %v3013
        %3015 = vdwg.mxu0
        %v3016 = vmul.f32 %v3014, 0.17677669
        %v3017 = vsel %vm2026, %v3016, -inf
        %3018 = vmax.xlane.f32.xlu0 %v3017
        %v3019 = vpop.xlane.xlu0 %3018
        %v3020 = vsub.f32 %v3016, %v3019
        %v3021 = vmul.f32 %v3020, 1.442695
        %v3022 = vpow.pop %v3021
        %v3023 = vsel %vm2026, %v3022, 0.0
        %3024 = vadd.xlane.f32.xlu0 %v3023
        %v3025 = vpop.xlane.xlu0 %3024
        %v3026 = vrcp.pop %v3025
        %v3027 = vmul.f32 %v3022, %v3026
        %v3029 = vsel %vm2026, %v3027, 0
        %3031 = vmatpush.msra.mxu0 0.0
        %3032 = vmatpush.msra.mxu0 0.0
        %3033 = vmatpush.msra.mxu0 0.0
        %3034 = vmatpush.msra.mxu0 0.0
        %3035 = vmatpush.msra.mxu0 0.0
        %3036 = vmatpush.msra.mxu0 0.0
        %3037 = vmatpush.msra.mxu0 0.0
        %3038 = vmatpush.msra.mxu0 0.0
        %3039 = vmatpush.msra.mxu0 0.0
        %3040 = vmatpush.msra.mxu0 0.0
        %3041 = vmatpush.msra.mxu0 0.0
        %3042 = vmatpush.msra.mxu0 0.0
        %3043 = vmatpush.msra.mxu0 0.0
        %3044 = vmatpush.msra.mxu0 0.0
        %3045 = vmatpush.msra.mxu0 0.0
        %3046 = vmatpush.msra.mxu0 %v2988
        %3047 = vmatmul.f32.gmra.mxu0 %v3029
        %v3048 = vpop.f32.mrf.mxu0
        %v3049 = vadd.f32 0.0, %v3048
        %3050 = vdwg.mxu0
        %v3052 = vsel %vm1750, %v3049, 0
        %3054 = vmatpush.msra.mxu0 0.0
        %3055 = vmatpush.msra.mxu0 0.0
        %3056 = vmatpush.msra.mxu0 0.0
        %3057 = vmatpush.msra.mxu0 0.0
        %3058 = vmatpush.msra.mxu0 0.0
        %3059 = vmatpush.msra.mxu0 0.0
        %3060 = vmatpush.msra.mxu0 0.0
        %3061 = vmatpush.msra.mxu0 0.0
        %3062 = vmatpush.msra.mxu0 0.0
        %3063 = vmatpush.msra.mxu0 0.0
        %3064 = vmatpush.msra.mxu0 0.0
        %3065 = vmatpush.msra.mxu0 0.0
        %3066 = vmatpush.msra.mxu0 %v1925
        %3067 = vmatpush.msra.mxu0 %v1924
        %3068 = vmatpush.msra.mxu0 %v1923
        %3069 = vmatpush.msra.mxu0 %v1922
        %3070 = vmatmul.f32.gmra.mxu0 %v3052
        %v3071 = vpop.f32.mrf.mxu0
        %v3072 = vadd.f32 %v2062, %v3071
        %3073 = vdwg.mxu0
        %v3074 = vadd.f32 %v2901, %v3072
        %v3075 = vsel %vm1750, %v3074, 0.0
        %3076 = vadd.xlane.f32.xlu0 %v3075
        %v3077 = vpop.xlane.xlu0 %3076
        %v3078 = vmul.f32 %v3077, %v1760
        %v3079 = vsub.f32 %v3074, %v3078
        %v3080 = vmul.f32 %v3079, %v3079
        %v3081 = vsel %vm1750, %v3080, 0.0
        %3082 = vadd.xlane.f32.xlu0 %v3081
        %v3083 = vpop.xlane.xlu0 %3082
        %v3084 = vmul.f32 %v3083, %v1760
        %v3085 = vadd.f32 %v3084, 1e-05
        %v3086 = vrsqrt.pop %v3085
        %v3087 = vmul.f32 %v3086, %v3085
        %v3088 = vmul.f32 %v3087, %v3086
        %v3089 = vmul.f32 0.5, %v3088
        %v3090 = vsub.f32 1.5, %v3089
        %v3091 = vmul.f32 %v3086, %v3090
        %vm3092 = vweird.f32 %v3085
        %vm3093 = vweird.f32 %v3086
        %vm3094 = vmor %vm3092, %vm3093
        %v3095 = vsel %vm3094, %v3086, %v3091
        %v3096 = vmul.f32 %v3079, %v3095
        %v3097 = vmul.f32 %v3096, %v2113
        %v3098 = vadd.f32 %v3097, %v2117
        %v3099 = vadd.f32 %v3098, %v1745
        %3100 = vxpose.xlu0.b32.start [1/16] %v3099, 128
        %3101 = vxpose.xlu0.b32.cont [2/16] 0.0, 128
        %3102 = vxpose.xlu0.b32.cont [3/16] 0.0, 128
        %3103 = vxpose.xlu0.b32.cont [4/16] 0.0, 128
        %3104 = vxpose.xlu0.b32.cont [5/16] 0.0, 128
        %3105 = vxpose.xlu0.b32.cont [6/16] 0.0, 128
        %3106 = vxpose.xlu0.b32.cont [7/16] 0.0, 128
        %3107 = vxpose.xlu0.b32.cont [8/16] 0.0, 128
        %3108 = vxpose.xlu0.b32.cont [9/16] 0.0, 128
        %3109 = vxpose.xlu0.b32.cont [10/16] 0.0, 128
        %3110 = vxpose.xlu0.b32.cont [11/16] 0.0, 128
        %3111 = vxpose.xlu0.b32.cont [12/16] 0.0, 128
        %3112 = vxpose.xlu0.b32.cont [13/16] 0.0, 128
        %3113 = vxpose.xlu0.b32.cont [14/16] 0.0, 128
        %3114 = vxpose.xlu0.b32.cont [15/16] 0.0, 128
        %3115 = vxpose.xlu0.b32.end [16/16] 0.0, 128
        %v3116 = vpop.trf.xlu0
        %v3117 = vpop.trf.xlu0
        %v3118 = vpop.trf.xlu0
        %v3119 = vpop.trf.xlu0
        %v3120 = vpop.trf.xlu0
        %v3121 = vpop.trf.xlu0
        %v3122 = vpop.trf.xlu0
        %v3123 = vpop.trf.xlu0
        %v3124 = vpop.trf.xlu0
        %v3125 = vpop.trf.xlu0
        %v3126 = vpop.trf.xlu0
        %v3127 = vpop.trf.xlu0
        %v3128 = vpop.trf.xlu0
        %v3129 = vpop.trf.xlu0
        %v3130 = vpop.trf.xlu0
        %v3131 = vpop.trf.xlu0
        %v3133 = vsel %vm2026, %v3116, 0
        %v3136 = vsel %vm2026, %v3117, 0
        %v3139 = vsel %vm2026, %v3118, 0
        %v3142 = vsel %vm2026, %v3119, 0
        %3144 = vmatpush.msra.mxu0 0.0
        %3145 = vmatpush.msra.mxu0 0.0
        %3146 = vmatpush.msra.mxu0 0.0
        %3147 = vmatpush.msra.mxu0 0.0
        %3148 = vmatpush.msra.mxu0 0.0
        %3149 = vmatpush.msra.mxu0 0.0
        %3150 = vmatpush.msra.mxu0 0.0
        %3151 = vmatpush.msra.mxu0 0.0
        %3152 = vmatpush.msra.mxu0 0.0
        %3153 = vmatpush.msra.mxu0 0.0
        %3154 = vmatpush.msra.mxu0 0.0
        %3155 = vmatpush.msra.mxu0 0.0
        %3156 = vmatpush.msra.mxu0 0.0
        %3157 = vmatpush.msra.mxu0 0.0
        %3158 = vmatpush.msra.mxu0 0.0
        %3159 = vmatpush.msra.mxu0 %v2153
        %3160 = vmatmul.f32.gmra.mxu0 %v3133
        %v3161 = vpop.f32.mrf.mxu0
        %v3162 = vadd.f32 %v2162, %v3161
        %3163 = vmatmul.f32.gmra.mxu0 %v3136
        %v3164 = vpop.f32.mrf.mxu0
        %v3165 = vadd.f32 %v2162, %v3164
        %3166 = vmatmul.f32.gmra.mxu0 %v3139
        %v3167 = vpop.f32.mrf.mxu0
        %v3168 = vadd.f32 %v2162, %v3167
        %3169 = vmatmul.f32.gmra.mxu0 %v3142
        %v3170 = vpop.f32.mrf.mxu0
        %v3171 = vadd.f32 %v2162, %v3170
        %3172 = vdwg.mxu0
        %3173 = vmatpush.msra.mxu0 0.0
        %3174 = vmatpush.msra.mxu0 0.0
        %3175 = vmatpush.msra.mxu0 0.0
        %3176 = vmatpush.msra.mxu0 0.0
        %3177 = vmatpush.msra.mxu0 0.0
        %3178 = vmatpush.msra.mxu0 0.0
        %3179 = vmatpush.msra.mxu0 0.0
        %3180 = vmatpush.msra.mxu0 0.0
        %3181 = vmatpush.msra.mxu0 0.0
        %3182 = vmatpush.msra.mxu0 0.0
        %3183 = vmatpush.msra.mxu0 0.0
        %3184 = vmatpush.msra.mxu0 0.0
        %3185 = vmatpush.msra.mxu0 0.0
        %3186 = vmatpush.msra.mxu0 0.0
        %3187 = vmatpush.msra.mxu0 0.0
        %3188 = vmatpush.msra.mxu0 %v2154
        %3189 = vmatmul.f32.gmra.mxu0 %v3133
        %v3190 = vpop.f32.mrf.mxu0
        %v3191 = vadd.f32 %v2206, %v3190
        %3192 = vmatmul.f32.gmra.mxu0 %v3136
        %v3193 = vpop.f32.mrf.mxu0
        %v3194 = vadd.f32 %v2206, %v3193
        %3195 = vmatmul.f32.gmra.mxu0 %v3139
        %v3196 = vpop.f32.mrf.mxu0
        %v3197 = vadd.f32 %v2206, %v3196
        %3198 = vmatmul.f32.gmra.mxu0 %v3142
        %v3199 = vpop.f32.mrf.mxu0
        %v3200 = vadd.f32 %v2206, %v3199
        %3201 = vdwg.mxu0
        %3202 = vmatpush.msra.mxu0 0.0
        %3203 = vmatpush.msra.mxu0 0.0
        %3204 = vmatpush.msra.mxu0 0.0
        %3205 = vmatpush.msra.mxu0 0.0
        %3206 = vmatpush.msra.mxu0 0.0
        %3207 = vmatpush.msra.mxu0 0.0
        %3208 = vmatpush.msra.mxu0 0.0
        %3209 = vmatpush.msra.mxu0 0.0
        %3210 = vmatpush.msra.mxu0 0.0
        %3211 = vmatpush.msra.mxu0 0.0
        %3212 = vmatpush.msra.mxu0 0.0
        %3213 = vmatpush.msra.mxu0 0.0
        %3214 = vmatpush.msra.mxu0 0.0
        %3215 = vmatpush.msra.mxu0 0.0
        %3216 = vmatpush.msra.mxu0 0.0
        %3217 = vmatpush.msra.mxu0 %v2155
        %3218 = vmatmul.f32.gmra.mxu0 %v3133
        %v3219 = vpop.f32.mrf.mxu0
        %v3220 = vadd.f32 %v2238, %v3219
        %3221 = vmatmul.f32.gmra.mxu0 %v3136
        %v3222 = vpop.f32.mrf.mxu0
        %v3223 = vadd.f32 %v2238, %v3222
        %3224 = vmatmul.f32.gmra.mxu0 %v3139
        %v3225 = vpop.f32.mrf.mxu0
        %v3226 = vadd.f32 %v2238, %v3225
        %3227 = vmatmul.f32.gmra.mxu0 %v3142
        %v3228 = vpop.f32.mrf.mxu0
        %v3229 = vadd.f32 %v2238, %v3228
        %3230 = vdwg.mxu0
        %v3232 = vsel %vm2026, %v3162, 0
        %v3235 = vsel %vm2026, %v3165, 0
        %v3238 = vsel %vm2026, %v3168, 0
        %v3241 = vsel %vm2026, %v3171, 0
        %v3244 = vsel %vm2026, %v3191, 0
        %v3247 = vsel %vm2026, %v3194, 0
        %v3250 = vsel %vm2026, %v3197, 0
        %v3253 = vsel %vm2026, %v3200, 0
        %3255 = vmatpush.xpose.msra.mxu0 0.0
        %3256 = vmatpush.xpose.msra.mxu0 0.0
        %3257 = vmatpush.xpose.msra.mxu0 0.0
        %3258 = vmatpush.xpose.msra.mxu0 0.0
        %3259 = vmatpush.xpose.msra.mxu0 0.0
        %3260 = vmatpush.xpose.msra.mxu0 0.0
        %3261 = vmatpush.xpose.msra.mxu0 0.0
        %3262 = vmatpush.xpose.msra.mxu0 0.0
        %3263 = vmatpush.xpose.msra.mxu0 0.0
        %3264 = vmatpush.xpose.msra.mxu0 0.0
        %3265 = vmatpush.xpose.msra.mxu0 0.0
        %3266 = vmatpush.xpose.msra.mxu0 0.0
        %3267 = vmatpush.xpose.msra.mxu0 %v3253
        %3268 = vmatpush.xpose.msra.mxu0 %v3250
        %3269 = vmatpush.xpose.msra.mxu0 %v3247
        %3270 = vmatpush.xpose.msra.mxu0 %v3244
        %3271 = vmatmul.f32.gmra.mxu0 %v3232
        %v3272 = vpop.f32.mrf.mxu0
        %v3273 = vadd.f32 0.0, %v3272
        %3274 = vmatmul.f32.gmra.mxu0 %v3235
        %v3275 = vpop.f32.mrf.mxu0
        %v3276 = vadd.f32 0.0, %v3275
        %3277 = vmatmul.f32.gmra.mxu0 %v3238
        %v3278 = vpop.f32.mrf.mxu0
        %v3279 = vadd.f32 0.0, %v3278
        %3280 = vmatmul.f32.gmra.mxu0 %v3241
        %v3281 = vpop.f32.mrf.mxu0
        %v3282 = vadd.f32 0.0, %v3281
        %3283 = vdwg.mxu0
        %v3284 = vmul.f32 %v3273, 0.35355338
        %v3285 = vmul.f32 %v3276, 0.35355338
        %v3286 = vmul.f32 %v3279, 0.35355338
        %v3287 = vmul.f32 %v3282, 0.35355338
        %v3288 = vsel %vm1750, %v3284, -inf
        %3289 = vmax.xlane.f32.xlu0 %v3288
        %v3290 = vpop.xlane.xlu0 %3289
        %v3291 = vsel %vm1750, %v3285, -inf
        %3292 = vmax.xlane.f32.xlu0 %v3291
        %v3293 = vpop.xlane.xlu0 %3292
        %v3294 = vsel %vm1750, %v3286, -inf
        %3295 = vmax.xlane.f32.xlu0 %v3294
        %v3296 = vpop.xlane.xlu0 %3295
        %v3297 = vsel %vm1750, %v3287, -inf
        %3298 = vmax.xlane.f32.xlu0 %v3297
        %v3299 = vpop.xlane.xlu0 %3298
        %v3300 = vsub.f32 %v3284, %v3290
        %v3301 = vsub.f32 %v3285, %v3293
        %v3302 = vsub.f32 %v3286, %v3296
        %v3303 = vsub.f32 %v3287, %v3299
        %v3304 = vmul.f32 %v3300, 1.442695
        %v3305 = vpow.pop %v3304
        %v3306 = vmul.f32 %v3301, 1.442695
        %v3307 = vpow.pop %v3306
        %v3308 = vmul.f32 %v3302, 1.442695
        %v3309 = vpow.pop %v3308
        %v3310 = vmul.f32 %v3303, 1.442695
        %v3311 = vpow.pop %v3310
        %v3312 = vsel %vm1750, %v3305, 0.0
        %3313 = vadd.xlane.f32.xlu0 %v3312
        %v3314 = vpop.xlane.xlu0 %3313
        %v3315 = vsel %vm1750, %v3307, 0.0
        %3316 = vadd.xlane.f32.xlu0 %v3315
        %v3317 = vpop.xlane.xlu0 %3316
        %v3318 = vsel %vm1750, %v3309, 0.0
        %3319 = vadd.xlane.f32.xlu0 %v3318
        %v3320 = vpop.xlane.xlu0 %3319
        %v3321 = vsel %vm1750, %v3311, 0.0
        %3322 = vadd.xlane.f32.xlu0 %v3321
        %v3323 = vpop.xlane.xlu0 %3322
        %v3324 = vrcp.pop %v3314
        %v3325 = vrcp.pop %v3317
        %v3326 = vrcp.pop %v3320
        %v3327 = vrcp.pop %v3323
        %v3328 = vmul.f32 %v3305, %v3324
        %v3329 = vmul.f32 %v3307, %v3325
        %v3330 = vmul.f32 %v3309, %v3326
        %v3331 = vmul.f32 %v3311, %v3327
        %v3333 = vsel %vm1750, %v3328, 0
        %v3336 = vsel %vm1750, %v3329, 0
        %v3339 = vsel %vm1750, %v3330, 0
        %v3342 = vsel %vm1750, %v3331, 0
        %3344 = vmatpush.msra.mxu0 0.0
        %3345 = vmatpush.msra.mxu0 0.0
        %3346 = vmatpush.msra.mxu0 0.0
        %3347 = vmatpush.msra.mxu0 0.0
        %3348 = vmatpush.msra.mxu0 0.0
        %3349 = vmatpush.msra.mxu0 0.0
        %3350 = vmatpush.msra.mxu0 0.0
        %3351 = vmatpush.msra.mxu0 0.0
        %3352 = vmatpush.msra.mxu0 0.0
        %3353 = vmatpush.msra.mxu0 0.0
        %3354 = vmatpush.msra.mxu0 0.0
        %3355 = vmatpush.msra.mxu0 0.0
        %3356 = vmatpush.msra.mxu0 %v3229
        %3357 = vmatpush.msra.mxu0 %v3226
        %3358 = vmatpush.msra.mxu0 %v3223
        %3359 = vmatpush.msra.mxu0 %v3220
        %3360 = vmatmul.f32.gmra.mxu0 %v3333
        %v3361 = vpop.f32.mrf.mxu0
        %v3362 = vadd.f32 0.0, %v3361
        %3363 = vmatmul.f32.gmra.mxu0 %v3336
        %v3364 = vpop.f32.mrf.mxu0
        %v3365 = vadd.f32 0.0, %v3364
        %3366 = vmatmul.f32.gmra.mxu0 %v3339
        %v3367 = vpop.f32.mrf.mxu0
        %v3368 = vadd.f32 0.0, %v3367
        %3369 = vmatmul.f32.gmra.mxu0 %v3342
        %v3370 = vpop.f32.mrf.mxu0
        %v3371 = vadd.f32 0.0, %v3370
        %3372 = vdwg.mxu0
        %v3374 = vsel %vm2026, %v3362, 0
        %v3377 = vsel %vm2026, %v3365, 0
        %v3380 = vsel %vm2026, %v3368, 0
        %v3383 = vsel %vm2026, %v3371, 0
        %3385 = vmatpush.msra.mxu0 0.0
        %3386 = vmatpush.msra.mxu0 0.0
        %3387 = vmatpush.msra.mxu0 0.0
        %3388 = vmatpush.msra.mxu0 0.0
        %3389 = vmatpush.msra.mxu0 0.0
        %3390 = vmatpush.msra.mxu0 0.0
        %3391 = vmatpush.msra.mxu0 0.0
        %3392 = vmatpush.msra.mxu0 0.0
        %3393 = vmatpush.msra.mxu0 0.0
        %3394 = vmatpush.msra.mxu0 0.0
        %3395 = vmatpush.msra.mxu0 0.0
        %3396 = vmatpush.msra.mxu0 0.0
        %3397 = vmatpush.msra.mxu0 0.0
        %3398 = vmatpush.msra.mxu0 0.0
        %3399 = vmatpush.msra.mxu0 0.0
        %3400 = vmatpush.msra.mxu0 %v2159
        %3401 = vmatmul.f32.gmra.mxu0 %v3374
        %v3402 = vpop.f32.mrf.mxu0
        %v3403 = vadd.f32 %v2412, %v3402
        %3404 = vmatmul.f32.gmra.mxu0 %v3377
        %v3405 = vpop.f32.mrf.mxu0
        %v3406 = vadd.f32 %v2412, %v3405
        %3407 = vmatmul.f32.gmra.mxu0 %v3380
        %v3408 = vpop.f32.mrf.mxu0
        %v3409 = vadd.f32 %v2412, %v3408
        %3410 = vmatmul.f32.gmra.mxu0 %v3383
        %v3411 = vpop.f32.mrf.mxu0
        %v3412 = vadd.f32 %v2412, %v3411
        %3413 = vdwg.mxu0
        %3414 = vxpose.xlu0.b32.start [1/16] %v3403, 128
        %3415 = vxpose.xlu0.b32.cont [2/16] %v3406, 128
        %3416 = vxpose.xlu0.b32.cont [3/16] %v3409, 128
        %3417 = vxpose.xlu0.b32.cont [4/16] %v3412, 128
        %3418 = vxpose.xlu0.b32.cont [5/16] 0.0, 128
        %3419 = vxpose.xlu0.b32.cont [6/16] 0.0, 128
        %3420 = vxpose.xlu0.b32.cont [7/16] 0.0, 128
        %3421 = vxpose.xlu0.b32.cont [8/16] 0.0, 128
        %3422 = vxpose.xlu0.b32.cont [9/16] 0.0, 128
        %3423 = vxpose.xlu0.b32.cont [10/16] 0.0, 128
        %3424 = vxpose.xlu0.b32.cont [11/16] 0.0, 128
        %3425 = vxpose.xlu0.b32.cont [12/16] 0.0, 128
        %3426 = vxpose.xlu0.b32.cont [13/16] 0.0, 128
        %3427 = vxpose.xlu0.b32.cont [14/16] 0.0, 128
        %3428 = vxpose.xlu0.b32.cont [15/16] 0.0, 128
        %3429 = vxpose.xlu0.b32.end [16/16] 0.0, 128
        %v3430 = vpop.trf.xlu0
        %v3431 = vpop.trf.xlu0
        %v3432 = vpop.trf.xlu0
        %v3433 = vpop.trf.xlu0
        %v3434 = vpop.trf.xlu0
        %v3435 = vpop.trf.xlu0
        %v3436 = vpop.trf.xlu0
        %v3437 = vpop.trf.xlu0
        %v3438 = vpop.trf.xlu0
        %v3439 = vpop.trf.xlu0
        %v3440 = vpop.trf.xlu0
        %v3441 = vpop.trf.xlu0
        %v3442 = vpop.trf.xlu0
        %v3443 = vpop.trf.xlu0
        %v3444 = vpop.trf.xlu0
        %v3445 = vpop.trf.xlu0
        %v3446 = vadd.f32 %v3074, %v3430
        %v3447 = vsel %vm1750, %v3446, 0.0
        %3448 = vadd.xlane.f32.xlu0 %v3447
        %v3449 = vpop.xlane.xlu0 %3448
        %v3450 = vmul.f32 %v3449, %v1760
        %v3451 = vsub.f32 %v3446, %v3450
        %v3452 = vmul.f32 %v3451, %v3451
        %v3453 = vsel %vm1750, %v3452, 0.0
        %3454 = vadd.xlane.f32.xlu0 %v3453
        %v3455 = vpop.xlane.xlu0 %3454
        %v3456 = vmul.f32 %v3455, %v1760
        %v3457 = vadd.f32 %v3456, 1e-05
        %v3458 = vrsqrt.pop %v3457
        %v3459 = vmul.f32 %v3458, %v3457
        %v3460 = vmul.f32 %v3459, %v3458
        %v3461 = vmul.f32 0.5, %v3460
        %v3462 = vsub.f32 1.5, %v3461
        %v3463 = vmul.f32 %v3458, %v3462
        %vm3464 = vweird.f32 %v3457
        %vm3465 = vweird.f32 %v3458
        %vm3466 = vmor %vm3464, %vm3465
        %v3467 = vsel %vm3466, %v3458, %v3463
        %v3468 = vmul.f32 %v3451, %v3467
        %v3469 = vmul.f32 %v3468, %v2513
        %v3470 = vadd.f32 %v3469, %v2517
        %v3472 = vsel %vm1750, %v3470, 0
        %3474 = vmatpush.msra.mxu0 0.0
        %3475 = vmatpush.msra.mxu0 0.0
        %3476 = vmatpush.msra.mxu0 0.0
        %3477 = vmatpush.msra.mxu0 0.0
        %3478 = vmatpush.msra.mxu0 0.0
        %3479 = vmatpush.msra.mxu0 0.0
        %3480 = vmatpush.msra.mxu0 0.0
        %3481 = vmatpush.msra.mxu0 0.0
        %3482 = vmatpush.msra.mxu0 0.0
        %3483 = vmatpush.msra.mxu0 0.0
        %3484 = vmatpush.msra.mxu0 0.0
        %3485 = vmatpush.msra.mxu0 0.0
        %3486 = vmatpush.msra.mxu0 %v2523
        %3487 = vmatpush.msra.mxu0 %v2522
        %3488 = vmatpush.msra.mxu0 %v2521
        %3489 = vmatpush.msra.mxu0 %v2520
        %3490 = vmatmul.f32.gmra.mxu0 %v3472
        %v3491 = vpop.f32.mrf.mxu0
        %v3492 = vadd.f32 %v2526, %v3491
        %3493 = vdwg.mxu0
        %3494 = vmatpush.msra.mxu0 0.0
        %3495 = vmatpush.msra.mxu0 0.0
        %3496 = vmatpush.msra.mxu0 0.0
        %3497 = vmatpush.msra.mxu0 0.0
        %3498 = vmatpush.msra.mxu0 0.0
        %3499 = vmatpush.msra.mxu0 0.0
        %3500 = vmatpush.msra.mxu0 0.0
        %3501 = vmatpush.msra.mxu0 0.0
        %3502 = vmatpush.msra.mxu0 0.0
        %3503 = vmatpush.msra.mxu0 0.0
        %3504 = vmatpush.msra.mxu0 0.0
        %3505 = vmatpush.msra.mxu0 0.0
        %3506 = vmatpush.msra.mxu0 %v2554
        %3507 = vmatpush.msra.mxu0 %v2553
        %3508 = vmatpush.msra.mxu0 %v2552
        %3509 = vmatpush.msra.mxu0 %v2551
        %3510 = vmatmul.f32.gmra.mxu0 %v3472
        %v3511 = vpop.f32.mrf.mxu0
        %v3512 = vadd.f32 %v2557, %v3511
        %3513 = vdwg.mxu0
        %v3514 = vxor.u32 %v3512, 2147483648
        %v3515 = vmul.f32 %v3514, 1.442695
        %v3516 = vpow.pop %v3515
        %v3517 = vadd.f32 %v3516, 1.0
        %v3518 = vrcp.pop %v3517
        %v3519 = vmul.f32 %v3517, %v3518
        %v3520 = vsub.f32 1.0, %v3519
        %v3521 = vmul.f32 %v3518, %v3520
        %v3522 = vadd.f32 %v3518, %v3521
        %vm3523 = vweird.f32 %v3517
        %vm3524 = vweird.f32 %v3518
        %vm3525 = vmor %vm3523, %vm3524
        %v3526 = vsel %vm3525, %v3518, %v3522
        %v3527 = vand.u32 2147483647, %v3517
        %vm3528 = vcmp.eq.f32.partialorder %v3527, 8.507059e+37
        %v3529 = vand.u32 %v3517, 2147483648
        %v3530 = vor.u32 1.1754944e-38, %v3529
        %v3531 = vsel %vm3528, %v3530, %v3526
        %v3532 = vmul.f32 1.0, %v3531
        %v3533 = vmul.f32 %v3492, %v3532
        %v3534 = vrot.slane %v3533, 7
        %v3535 = vsel %vm2603, %v3534, 0.0
        %v3536 = vmul.f32 %v2605, %v3535
        %v3537 = vadd.f32 %v3536, 0.0
        %v3538 = vmul.f32 %v2608, %v3533
        %v3539 = vadd.f32 %v3537, %v3538
        %v3540 = vrot.slane %v3533, 1
        %v3541 = vsel %vm2614, %v3540, 0.0
        %v3542 = vmul.f32 %v2616, %v3541
        %v3543 = vadd.f32 %v3539, %v3542
        %v3544 = vadd.f32 %v3543, %v2621
        %v3545 = vmul.f32 %v3544, %v2626
        %v3546 = vadd.f32 %v3545, %v2631
        %v3547 = vxor.u32 %v3546, 2147483648
        %v3548 = vmul.f32 %v3547, 1.442695
        %v3549 = vpow.pop %v3548
        %v3550 = vadd.f32 %v3549, 1.0
        %v3551 = vrcp.pop %v3550
        %v3552 = vmul.f32 %v3550, %v3551
        %v3553 = vsub.f32 1.0, %v3552
        %v3554 = vmul.f32 %v3551, %v3553
        %v3555 = vadd.f32 %v3551, %v3554
        %vm3556 = vweird.f32 %v3550
        %vm3557 = vweird.f32 %v3551
        %vm3558 = vmor %vm3556, %vm3557
        %v3559 = vsel %vm3558, %v3551, %v3555
        %v3560 = vand.u32 2147483647, %v3550
        %vm3561 = vcmp.eq.f32.partialorder %v3560, 8.507059e+37
        %v3562 = vand.u32 %v3550, 2147483648
        %v3563 = vor.u32 1.1754944e-38, %v3562
        %v3564 = vsel %vm3561, %v3563, %v3559
        %v3565 = vmul.f32 1.0, %v3564
        %v3566 = vmul.f32 %v3546, %v3565
        %v3568 = vsel %vm1750, %v3566, 0
        %3570 = vmatpush.msra.mxu0 0.0
        %3571 = vmatpush.msra.mxu0 0.0
        %3572 = vmatpush.msra.mxu0 0.0
        %3573 = vmatpush.msra.mxu0 0.0
        %3574 = vmatpush.msra.mxu0 0.0
        %3575 = vmatpush.msra.mxu0 0.0
        %3576 = vmatpush.msra.mxu0 0.0
        %3577 = vmatpush.msra.mxu0 0.0
        %3578 = vmatpush.msra.mxu0 0.0
        %3579 = vmatpush.msra.mxu0 0.0
        %3580 = vmatpush.msra.mxu0 0.0
        %3581 = vmatpush.msra.mxu0 0.0
        %3582 = vmatpush.msra.mxu0 %v2657
        %3583 = vmatpush.msra.mxu0 %v2656
        %3584 = vmatpush.msra.mxu0 %v2655
        %3585 = vmatpush.msra.mxu0 %v2654
        %3586 = vmatmul.f32.gmra.mxu0 %v3568
        %v3587 = vpop.f32.mrf.mxu0
        %v3588 = vadd.f32 %v2660, %v3587
        %3589 = vdwg.mxu0
        %v3590 = vadd.f32 %v3446, %v3588
        %v3591 = vsel %vm1750, %v3590, 0.0
        %3592 = vadd.xlane.f32.xlu0 %v3591
        %v3593 = vpop.xlane.xlu0 %3592
        %v3594 = vmul.f32 %v3593, %v1760
        %v3595 = vsub.f32 %v3590, %v3594
        %v3596 = vmul.f32 %v3595, %v3595
        %v3597 = vsel %vm1750, %v3596, 0.0
        %3598 = vadd.xlane.f32.xlu0 %v3597
        %v3599 = vpop.xlane.xlu0 %3598
        %v3600 = vmul.f32 %v3599, %v1760
        %v3601 = vadd.f32 %v3600, 1e-05
        %v3602 = vrsqrt.pop %v3601
        %v3603 = vmul.f32 %v3602, %v3601
        %v3604 = vmul.f32 %v3603, %v3602
        %v3605 = vmul.f32 0.5, %v3604
        %v3606 = vsub.f32 1.5, %v3605
        %v3607 = vmul.f32 %v3602, %v3606
        %vm3608 = vweird.f32 %v3601
        %vm3609 = vweird.f32 %v3602
        %vm3610 = vmor %vm3608, %vm3609
        %v3611 = vsel %vm3610, %v3602, %v3607
        %v3612 = vmul.f32 %v3595, %v3611
        %v3613 = vmul.f32 %v3612, %v1781
        %v3614 = vadd.f32 %v3613, %v1785
        %v3616 = vsel %vm1750, %v3614, 0
        %3618 = vmatpush.msra.mxu0 0.0
        %3619 = vmatpush.msra.mxu0 0.0
        %3620 = vmatpush.msra.mxu0 0.0
        %3621 = vmatpush.msra.mxu0 0.0
        %3622 = vmatpush.msra.mxu0 0.0
        %3623 = vmatpush.msra.mxu0 0.0
        %3624 = vmatpush.msra.mxu0 0.0
        %3625 = vmatpush.msra.mxu0 0.0
        %3626 = vmatpush.msra.mxu0 0.0
        %3627 = vmatpush.msra.mxu0 0.0
        %3628 = vmatpush.msra.mxu0 0.0
        %3629 = vmatpush.msra.mxu0 0.0
        %3630 = vmatpush.msra.mxu0 %v1791
        %3631 = vmatpush.msra.mxu0 %v1790
        %3632 = vmatpush.msra.mxu0 %v1789
        %3633 = vmatpush.msra.mxu0 %v1788
        %3634 = vmatmul.f32.gmra.mxu0 %v3616
        %v3635 = vpop.f32.mrf.mxu0
        %v3636 = vadd.f32 %v1794, %v3635
        %3637 = vdwg.mxu0
        %v3638 = vxor.u32 %v3636, 2147483648
        %v3639 = vmul.f32 %v3638, 1.442695
        %v3640 = vpow.pop %v3639
        %v3641 = vadd.f32 %v3640, 1.0
        %v3642 = vrcp.pop %v3641
        %v3643 = vmul.f32 %v3641, %v3642
        %v3644 = vsub.f32 1.0, %v3643
        %v3645 = vmul.f32 %v3642, %v3644
        %v3646 = vadd.f32 %v3642, %v3645
        %vm3647 = vweird.f32 %v3641
        %vm3648 = vweird.f32 %v3642
        %vm3649 = vmor %vm3647, %vm3648
        %v3650 = vsel %vm3649, %v3642, %v3646
        %v3651 = vand.u32 2147483647, %v3641
        %vm3652 = vcmp.eq.f32.partialorder %v3651, 8.507059e+37
        %v3653 = vand.u32 %v3641, 2147483648
        %v3654 = vor.u32 1.1754944e-38, %v3653
        %v3655 = vsel %vm3652, %v3654, %v3650
        %v3656 = vmul.f32 1.0, %v3655
        %v3657 = vmul.f32 %v3636, %v3656
        %v3659 = vsel %vm1844, %v3657, 0
        %3661 = vmatpush.msra.mxu0 0.0
        %3662 = vmatpush.msra.mxu0 0.0
        %3663 = vmatpush.msra.mxu0 0.0
        %3664 = vmatpush.msra.mxu0 0.0
        %3665 = vmatpush.msra.mxu0 0.0
        %3666 = vmatpush.msra.mxu0 0.0
        %3667 = vmatpush.msra.mxu0 0.0
        %3668 = vmatpush.msra.mxu0 0.0
        %3669 = vmatpush.msra.mxu0 0.0
        %3670 = vmatpush.msra.mxu0 0.0
        %3671 = vmatpush.msra.mxu0 0.0
        %3672 = vmatpush.msra.mxu0 0.0
        %3673 = vmatpush.msra.mxu0 0.0
        %3674 = vmatpush.msra.mxu0 0.0
        %3675 = vmatpush.msra.mxu0 0.0
        %3676 = vmatpush.msra.mxu0 %v1850
        %3677 = vmatmul.f32.gmra.mxu0 %v3659
        %v3678 = vpop.f32.mrf.mxu0
        %v3679 = vadd.f32 %v1842, %v3678
        %3680 = vdwg.mxu0
        %v3681 = vmul.f32 %v3679, 0.5
        %v3682 = vadd.f32 %v3590, %v3681
        %v3683 = vsel %vm1750, %v3682, 0.0
        %3684 = vadd.xlane.f32.xlu0 %v3683
        %v3685 = vpop.xlane.xlu0 %3684
        %v3686 = vmul.f32 %v3685, %v1760
        %v3687 = vsub.f32 %v3682, %v3686
        %v3688 = vmul.f32 %v3687, %v3687
        %v3689 = vsel %vm1750, %v3688, 0.0
        %3690 = vadd.xlane.f32.xlu0 %v3689
        %v3691 = vpop.xlane.xlu0 %3690
        %v3692 = vmul.f32 %v3691, %v1760
        %v3693 = vadd.f32 %v3692, 1e-05
        %v3694 = vrsqrt.pop %v3693
        %v3695 = vmul.f32 %v3694, %v3693
        %v3696 = vmul.f32 %v3695, %v3694
        %v3697 = vmul.f32 0.5, %v3696
        %v3698 = vsub.f32 1.5, %v3697
        %v3699 = vmul.f32 %v3694, %v3698
        %vm3700 = vweird.f32 %v3693
        %vm3701 = vweird.f32 %v3694
        %vm3702 = vmor %vm3700, %vm3701
        %v3703 = vsel %vm3702, %v3694, %v3699
        %v3704 = vmul.f32 %v3687, %v3703
        %v3705 = vmul.f32 %v3704, %v2803
        %v3706 = vadd.f32 %v3705, %v2807
        %3707 = vst.msk [vmem:[%s1743] sm:$0xff] %vm1750, %v3706
        %s3708 = sand.u32 %s1013, 1
        %s3709 = scalar_lea.sflag [#allocation4], %s3708
        %s3710 = sand.u32 %s1013, 1
        %s3711 = smul.addr %s3710, 8
        %s3712 = scalar_lea.vmem [#allocation52], %s3711
        // Predicated region
        $region317: #{tpu_custom_call.1} parent=187 // pred_check
          %p3713 = pneg %p1023
        $region318: #{tpu_custom_call.1} parent=187 // pred_check_branch
          %3715 = sbr.rel (%p3713) target = $region320
        $region319: #{tpu_custom_call.1} parent=187 // pred_region
          %3717 = vsyncadd %s3709, 0
          %s3718 = smul.addr %s118, 8
          %s3719 = scalar_lea.hbm %s85, %s3718
          %s3721 = sshll.u32 %s3712, 4
          %s3722 = int_to_ptr.vmem [resolvable:$true] %s3721
          %s3723 = sshll.u32 %s3719, 4
          %s3724 = int_to_ptr.hbm [resolvable:$true] %s3723
          %3726 = dma.vmem_to_hbm [thread:$0]  %s3722, 128, %s3724, %s3709
        $region320: #{tpu_custom_call.1} parent=187 // pred_fallthru
          _
      $region188: #{tpu_custom_call.1} parent=5 // pred_fallthru
        _
      %p3727 = scmp.le.s32.totalorder 2, %s113
      // Predicated region
      $region321: #{tpu_custom_call.1} parent=5 // pred_check
        %p3728 = pneg %p3727
      $region322: #{tpu_custom_call.1} parent=5 // pred_check_branch
        %3730 = sbr.rel (%p3728) target = $region324
      $region323: #{tpu_custom_call.1} parent=5 // pred_region
        %s3731 = ssub.s32 %s113, 2
        // Predicated region
        $region325: #{tpu_custom_call.1} parent=323 // pred_check
          %p3732 = pneg %p1029
        $region326: #{tpu_custom_call.1} parent=323 // pred_check_branch
          %3734 = sbr.rel (%p3732) target = $region328
        $region327: #{tpu_custom_call.1} parent=323 // pred_region
          %s3735 = sand.u32 %s1014, 1
          %s3736 = scalar_lea.sflag [#allocation4], %s3735
          %s3737 = sand.u32 %s1014, 1
          %s3738 = smul.addr %s3737, 8
          %s3739 = scalar_lea.vmem [#allocation52], %s3738
          %3741 = dma.done %s3736, 128
        $region328: #{tpu_custom_call.1} parent=323 // pred_fallthru
          _
      $region324: #{tpu_custom_call.1} parent=5 // pred_fallthru
        _
    $region6: #{tpu_custom_call.1} parent=1 // loop_footer
      %s117 = sadd.s32 1, %s113
    $region7: #{tpu_custom_call.1} parent=1 // loop_footer_branch
      %112 = sbr.rel target = $region3
    $region8: #{tpu_custom_call.1} parent=1 // loop_exit
      _
    %3742 = vsyncpa [#allocation3], 1
    %s3743 = scalar_lea.sflag [#allocation3], 1
    %3744 = vsyncpa %s3743, 1
    %3745 = vsyncpa [#allocation6], 1
    %3746 = vsyncpa [#allocation9], 1
    %3747 = vsyncpa [#allocation12], 1
    %3748 = vsyncpa [#allocation15], 1
    %3749 = vsyncpa [#allocation18], 1
    %3750 = vsyncpa [#allocation21], 1
    %3751 = vsyncpa [#allocation24], 1
    %3752 = vsyncpa [#allocation27], 1
    %3753 = vsyncpa [#allocation30], 1
    %3754 = vsyncpa [#allocation33], 1
    %3755 = vsyncpa [#allocation36], 1
    %3756 = vsyncpa [#allocation39], 1
    %3757 = vsyncpa [#allocation42], 1
    %3758 = vsyncpa [#allocation45], 1
    %3759 = vsyncpa [#allocation48], 1
    %3760 = vsyncpa [#allocation51], 1
    %3761 = vsyncpa [#allocation4], 1
    %s3762 = scalar_lea.sflag [#allocation4], 1
    %3763 = vsyncpa %s3762, 1

</llo_original>
